<compile_context>
chip_gen: v5e
topology: v5e:2x2
jax: 0.10.0
libtpu: 0.0.40
codegen_flags: <defaults>
</compile_context>

<pallas_src>
import functools

import jax
import jax.numpy as jnp
from jax import lax
from jax.experimental import pallas as pl
from jax.experimental.pallas import tpu as pltpu

# (cin, cout, kernel, stride) for layer1 / layer2 / layer3
_CFG = [(3, 10, 5, 2), (10, 64, 3, 2), (64, 12, 3, 1)]


# ----------------------------------------------------------------------------
# Fused kernel: whole network forward for ONE image per grid step.
# ----------------------------------------------------------------------------
def _fused_kernel(p1_ref, w1_ref, b1_ref, w2_ref, b2_ref, w3_ref, b3_ref,
                  o_ref, *, qh, qw, c1, ho2, wo2, c2, ho3, wo3):
    """p1_ref: (1, 4*qh*qw, 25*Cin1)  layer-1 im2col patch, rows pre-ordered in
               stride-2 phase-split order (rh, rw, qh, qw).
       w*_ref: (K*K*Cin, Cout) folded weights;  b*_ref: (1, Cout).
       o_ref : (1, Cout3, ho3*wo3) channel-major output slab (one block store)."""
    hi = lax.Precision.HIGHEST

    # ---- layer 1: ONE matmul on the pre-built im2col patch + fused bias/ReLU.
    a1 = jnp.dot(p1_ref[0], w1_ref[...], precision=hi,
                 preferred_element_type=jnp.float32)
    a1 = jnp.maximum(a1 + b1_ref[...], 0.0)              # (4*qh*qw, c1)
    # Rows were ordered (rh, rw, qh, qw) by the wrapper, so this reshape IS the
    # stride-2 phase split: ph[rh, rw, i, j, c] == y1[2*i + rh, 2*j + rw, c].
    # (The padded grid row/col qh-1 / qw-1 with rh/rw = 1 is never read below.)
    ph = a1.reshape(2, 2, qh, qw, c1)

    # ---- layer 2 (3x3, stride 2): contiguous phase taps -> ONE matmul + ReLU.
    taps = [ph[dy % 2, dx % 2, dy // 2:dy // 2 + ho2, dx // 2:dx // 2 + wo2, :]
            for dy in range(3) for dx in range(3)]
    p2 = jnp.concatenate(taps, axis=-1).reshape(ho2 * wo2, 9 * c1)
    a2 = jnp.dot(p2, w2_ref[...], precision=hi,
                 preferred_element_type=jnp.float32)
    a2 = jnp.maximum(a2 + b2_ref[...], 0.0).reshape(ho2, wo2, c2)

    # ---- layer 3 (3x3, stride 1): contiguous taps -> ONE matmul (no ReLU).
    taps = [a2[dy:dy + ho3, dx:dx + wo3, :]
            for dy in range(3) for dx in range(3)]
    p3 = jnp.concatenate(taps, axis=-1).reshape(ho3 * wo3, 9 * c2)
    a3 = jnp.dot(p3, w3_ref[...], precision=hi,
                 preferred_element_type=jnp.float32) + b3_ref[...]

    # Channel-major single block store; wrapper finishes with a bitcast reshape.
    o_ref[0] = a3.T.astype(o_ref.dtype)                  # (Cout3, ho3*wo3)


# ----------------------------------------------------------------------------
# Wrapper-side layer-1 im2col (cheap XLA ops on a tiny input), rows ordered in
# phase-split order so the kernel needs no strided access and no transpose.
# ----------------------------------------------------------------------------
def _layer1_patches(x_nhwc, k, stride, g1h, g1w):
    n, h, w, c = x_nhwc.shape
    need_h = (g1h - 1) * stride + k
    need_w = (g1w - 1) * stride + k
    xp = jnp.pad(x_nhwc, ((0, 0), (0, max(0, need_h - h)),
                          (0, max(0, need_w - w)), (0, 0)))
    taps = []
    for dy in range(k):
        for dx in range(k):
            taps.append(lax.slice(
                xp, (0, dy, dx, 0),
                (n, dy + (g1h - 1) * stride + 1, dx + (g1w - 1) * stride + 1, c),
                (1, stride, stride, 1)))
    p = jnp.concatenate(taps, axis=-1)                   # (n, g1h, g1w, k*k*c)
    p = p.reshape(n, g1h // 2, 2, g1w // 2, 2, k * k * c)
    p = p.transpose(0, 2, 4, 1, 3, 5)                    # (n, rh, rw, qh, qw, kkc)
    return p.reshape(n, g1h * g1w, k * k * c)


# ----------------------------------------------------------------------------
# SpReTestCNN forward (matches the PyTorch conv-relu-conv-relu-conv).
# ----------------------------------------------------------------------------
@jax.jit
def spre_forward(x_nchw, params):
    # TODO(synk): the PyTorch forward's time.time() latency print is host-side
    # instrumentation with no Pallas equivalent; numerics are unaffected.
    (w1, b1), (w2, b2), (w3, b3) = params
    n, _, hin, win = x_nchw.shape
    (c0, c1, k1, s1), (_, c2, k2, s2), (_, c3, k3, s3) = _CFG

    h1 = (hin - k1) // s1 + 1
    w1s = (win - k1) // s1 + 1
    ho2 = (h1 - k2) // s2 + 1
    wo2 = (w1s - k2) // s2 + 1
    ho3 = (ho2 - k3) // s3 + 1
    wo3 = (wo2 - k3) // s3 + 1

    # Layer-1 output is computed on an even (2*(ho2+1), 2*(wo2+1)) grid so the
    # in-kernel stride-2 phase split is a pure reshape; the extra padded
    # rows/cols are provably never read by layer 2.
    qh, qw = ho2 + 1, wo2 + 1
    g1h, g1w = 2 * qh, 2 * qw

    x = jnp.transpose(x_nchw, (0, 2, 3, 1))              # NCHW -> NHWC
    p1 = _layer1_patches(x, k1, s1, g1h, g1w)            # (n, g1h*g1w, k1*k1*c0)

    kernel = functools.partial(
        _fused_kernel, qh=qh, qw=qw, c1=c1,
        ho2=ho2, wo2=wo2, c2=c2, ho3=ho3, wo3=wo3)

    out = pl.pallas_call(
        kernel,
        out_shape=jax.ShapeDtypeStruct((n, c3, ho3 * wo3), jnp.float32),
        grid_spec=pltpu.PrefetchScalarGridSpec(
            num_scalar_prefetch=0,
            grid=(n,),                                   # one image per step
            in_specs=[
                pl.BlockSpec((1, g1h * g1w, k1 * k1 * c0), lambda i: (i, 0, 0)),
                pl.BlockSpec((k1 * k1 * c0, c1), lambda i: (0, 0)),
                pl.BlockSpec((1, c1), lambda i: (0, 0)),
                pl.BlockSpec((k2 * k2 * c1, c2), lambda i: (0, 0)),
                pl.BlockSpec((1, c2), lambda i: (0, 0)),
                pl.BlockSpec((k3 * k3 * c2, c3), lambda i: (0, 0)),
                pl.BlockSpec((1, c3), lambda i: (0, 0)),
            ],
            out_specs=pl.BlockSpec((1, c3, ho3 * wo3), lambda i: (i, 0, 0)),
        ),
        compiler_params=pltpu.CompilerParams(
            dimension_semantics=("parallel",),           # v7x: one image per TC
        ),
    )(p1,
      w1.reshape(k1 * k1 * c0, c1), b1.reshape(1, c1),
      w2.reshape(k2 * k2 * c1, c2), b2.reshape(1, c2),
      w3.reshape(k3 * k3 * c2, c3), b3.reshape(1, c3))

    return out.reshape(n, c3, ho3, wo3)                  # bitcast reshape -> NCHW


# ----------------------------------------------------------------------------
# Synthetic parameters (the PyTorch module loads a state_dict; none here).
# ----------------------------------------------------------------------------
def init_params(key):
    params = []
    keys = jax.random.split(key, 2 * len(_CFG))
    for i, (cin, cout, k, _) in enumerate(_CFG):
        std = 1.0 / jnp.sqrt(float(k * k * cin))
        w = jax.random.normal(keys[2 * i], (k, k, cin, cout), jnp.float32) * std
        b = jax.random.normal(keys[2 * i + 1], (cout,), jnp.float32) * 0.05
        params.append((w, b))
    return params


def spre_reference(x_nchw, params):
    """Plain-JAX reference for correctness checking."""
    x = jnp.transpose(x_nchw, (0, 2, 3, 1))
    (w1, b1), (w2, b2), (w3, b3) = params

    def conv(x, w, b, s):
        return lax.conv_general_dilated(
            x, w, window_strides=(s, s), padding="VALID",
            dimension_numbers=("NHWC", "HWIO", "NHWC"),
            precision=lax.Precision.HIGHEST) + b

    x = jax.nn.relu(conv(x, w1, b1, 2))
    x = jax.nn.relu(conv(x, w2, b2, 2))
    x = conv(x, w3, b3, 1)
    return jnp.transpose(x, (0, 3, 1, 2))


if __name__ == "__main__":
    key = jax.random.PRNGKey(0)
    kx, kp = jax.random.split(key)
    # 33x33 input: 33 -> 15 -> 7 -> 5 (matches the module's size arithmetic)
    x = jax.random.normal(kx, (2, 3, 33, 33), jnp.float32)   # PyTorch NCHW
    params = init_params(kp)

    out = jax.block_until_ready(spre_forward(x, params))
    assert out.shape == (2, 12, 5, 5), out.shape

    ref = jax.block_until_ready(spre_reference(x, params))
    if not bool(jnp.allclose(out, ref, rtol=1e-3, atol=1e-4)):
        err = float(jnp.max(jnp.abs(out - ref)))
        raise AssertionError(
            f"Pallas SpReTestCNN output mismatch vs JAX reference (max |err|={err:.3e})")

    print("KERNEL_OK")
</pallas_src>

<mosaic_0001>
module attributes {stable_mosaic.version = 11 : i64} {
  func.func @_fused_kernel(%arg0: i32, %arg1: memref<1x256x75xf32, #tpu.memory_space<vmem>>, %arg2: memref<75x10xf32, #tpu.memory_space<vmem>>, %arg3: memref<1x10xf32, #tpu.memory_space<vmem>>, %arg4: memref<90x64xf32, #tpu.memory_space<vmem>>, %arg5: memref<1x64xf32, #tpu.memory_space<vmem>>, %arg6: memref<576x12xf32, #tpu.memory_space<vmem>>, %arg7: memref<1x12xf32, #tpu.memory_space<vmem>>, %arg8: memref<1x12x25xf32, #tpu.memory_space<vmem>>) attributes {dimension_semantics = [#tpu.dimension_semantics<parallel>], iteration_bounds = array<i64: 2>, scalar_prefetch = 0 : i64, scratch_operands = 0 : i64, tpu.core_type = #tpu.core_type<tc>, window_params = [{transform_indices = @transform_0, window_bounds = array<i64: 1, 256, 75>}, {pipeline_mode = #tpu.pipeline_mode<synchronous>, transform_indices = @transform_1, window_bounds = array<i64: 75, 10>}, {pipeline_mode = #tpu.pipeline_mode<synchronous>, transform_indices = @transform_2, window_bounds = array<i64: 1, 10>}, {pipeline_mode = #tpu.pipeline_mode<synchronous>, transform_indices = @transform_3, window_bounds = array<i64: 90, 64>}, {pipeline_mode = #tpu.pipeline_mode<synchronous>, transform_indices = @transform_4, window_bounds = array<i64: 1, 64>}, {pipeline_mode = #tpu.pipeline_mode<synchronous>, transform_indices = @transform_5, window_bounds = array<i64: 576, 12>}, {pipeline_mode = #tpu.pipeline_mode<synchronous>, transform_indices = @transform_6, window_bounds = array<i64: 1, 12>}, {transform_indices = @transform_7, window_bounds = array<i64: 1, 12, 25>}]} {
    %c0 = arith.constant 0 : index
    %c0_0 = arith.constant 0 : index
    %c0_1 = arith.constant 0 : index
    %0 = vector.load %arg1[%c0, %c0_0, %c0_1] : memref<1x256x75xf32, #tpu.memory_space<vmem>>, vector<1x256x75xf32>
    %1 = vector.shape_cast %0 : vector<1x256x75xf32> to vector<256x75xf32>
    %c0_2 = arith.constant 0 : index
    %c0_3 = arith.constant 0 : index
    %2 = vector.load %arg2[%c0_2, %c0_3] : memref<75x10xf32, #tpu.memory_space<vmem>>, vector<75x10xf32>
    %cst = arith.constant dense<0.000000e+00> : vector<256x10xf32>
    %3 = tpu.matmul %1, %2, %cst {dimension_numbers = #tpu.dot_dimension_numbers<[1], [0], [0], [1], [0, 0, 1, 1], [], []>, precision = #tpu.contract_precision<fp32>} : vector<256x75xf32>, vector<75x10xf32>, vector<256x10xf32> -> vector<256x10xf32>
    %c0_4 = arith.constant 0 : index
    %c0_5 = arith.constant 0 : index
    %4 = vector.load %arg3[%c0_4, %c0_5] : memref<1x10xf32, #tpu.memory_space<vmem>>, vector<1x10xf32>
    %5 = vector.broadcast %4 : vector<1x10xf32> to vector<256x10xf32>
    %6 = arith.addf %3, %5 : vector<256x10xf32>
    %cst_6 = arith.constant 0.000000e+00 : f32
    %7 = vector.broadcast %cst_6 : f32 to vector<256x10xf32>
    %8 = arith.maximumf %6, %7 : vector<256x10xf32>
    %9 = vector.shape_cast %8 : vector<256x10xf32> to vector<2x2x8x8x10xf32>
    %10 = vector.extract_strided_slice %9 {offsets = [0, 0, 0, 0, 0], sizes = [1, 1, 7, 7, 10], strides = [1, 1, 1, 1, 1]} : vector<2x2x8x8x10xf32> to vector<1x1x7x7x10xf32>
    %11 = vector.shape_cast %10 : vector<1x1x7x7x10xf32> to vector<7x7x10xf32>
    %12 = vector.extract_strided_slice %9 {offsets = [0, 1, 0, 0, 0], sizes = [1, 1, 7, 7, 10], strides = [1, 1, 1, 1, 1]} : vector<2x2x8x8x10xf32> to vector<1x1x7x7x10xf32>
    %13 = vector.shape_cast %12 : vector<1x1x7x7x10xf32> to vector<7x7x10xf32>
    %14 = vector.extract_strided_slice %9 {offsets = [0, 0, 0, 1, 0], sizes = [1, 1, 7, 7, 10], strides = [1, 1, 1, 1, 1]} : vector<2x2x8x8x10xf32> to vector<1x1x7x7x10xf32>
    %15 = vector.shape_cast %14 : vector<1x1x7x7x10xf32> to vector<7x7x10xf32>
    %16 = vector.extract_strided_slice %9 {offsets = [1, 0, 0, 0, 0], sizes = [1, 1, 7, 7, 10], strides = [1, 1, 1, 1, 1]} : vector<2x2x8x8x10xf32> to vector<1x1x7x7x10xf32>
    %17 = vector.shape_cast %16 : vector<1x1x7x7x10xf32> to vector<7x7x10xf32>
    %18 = vector.extract_strided_slice %9 {offsets = [1, 1, 0, 0, 0], sizes = [1, 1, 7, 7, 10], strides = [1, 1, 1, 1, 1]} : vector<2x2x8x8x10xf32> to vector<1x1x7x7x10xf32>
    %19 = vector.shape_cast %18 : vector<1x1x7x7x10xf32> to vector<7x7x10xf32>
    %20 = vector.extract_strided_slice %9 {offsets = [1, 0, 0, 1, 0], sizes = [1, 1, 7, 7, 10], strides = [1, 1, 1, 1, 1]} : vector<2x2x8x8x10xf32> to vector<1x1x7x7x10xf32>
    %21 = vector.shape_cast %20 : vector<1x1x7x7x10xf32> to vector<7x7x10xf32>
    %22 = vector.extract_strided_slice %9 {offsets = [0, 0, 1, 0, 0], sizes = [1, 1, 7, 7, 10], strides = [1, 1, 1, 1, 1]} : vector<2x2x8x8x10xf32> to vector<1x1x7x7x10xf32>
    %23 = vector.shape_cast %22 : vector<1x1x7x7x10xf32> to vector<7x7x10xf32>
    %24 = vector.extract_strided_slice %9 {offsets = [0, 1, 1, 0, 0], sizes = [1, 1, 7, 7, 10], strides = [1, 1, 1, 1, 1]} : vector<2x2x8x8x10xf32> to vector<1x1x7x7x10xf32>
    %25 = vector.shape_cast %24 : vector<1x1x7x7x10xf32> to vector<7x7x10xf32>
    %26 = vector.extract_strided_slice %9 {offsets = [0, 0, 1, 1, 0], sizes = [1, 1, 7, 7, 10], strides = [1, 1, 1, 1, 1]} : vector<2x2x8x8x10xf32> to vector<1x1x7x7x10xf32>
    %27 = vector.shape_cast %26 : vector<1x1x7x7x10xf32> to vector<7x7x10xf32>
    %28 = tpu.concatenate %11, %13, %15, %17, %19, %21, %23, %25, %27 in 2 : vector<7x7x10xf32>, vector<7x7x10xf32>, vector<7x7x10xf32>, vector<7x7x10xf32>, vector<7x7x10xf32>, vector<7x7x10xf32>, vector<7x7x10xf32>, vector<7x7x10xf32>, vector<7x7x10xf32> -> vector<7x7x90xf32>
    %29 = vector.shape_cast %28 : vector<7x7x90xf32> to vector<49x90xf32>
    %c0_7 = arith.constant 0 : index
    %c0_8 = arith.constant 0 : index
    %30 = vector.load %arg4[%c0_7, %c0_8] : memref<90x64xf32, #tpu.memory_space<vmem>>, vector<90x64xf32>
    %cst_9 = arith.constant dense<0.000000e+00> : vector<49x64xf32>
    %31 = tpu.matmul %29, %30, %cst_9 {dimension_numbers = #tpu.dot_dimension_numbers<[1], [0], [0], [1], [0, 0, 1, 1], [], []>, precision = #tpu.contract_precision<fp32>} : vector<49x90xf32>, vector<90x64xf32>, vector<49x64xf32> -> vector<49x64xf32>
    %c0_10 = arith.constant 0 : index
    %c0_11 = arith.constant 0 : index
    %32 = vector.load %arg5[%c0_10, %c0_11] : memref<1x64xf32, #tpu.memory_space<vmem>>, vector<1x64xf32>
    %33 = vector.broadcast %32 : vector<1x64xf32> to vector<49x64xf32>
    %34 = arith.addf %31, %33 : vector<49x64xf32>
    %cst_12 = arith.constant 0.000000e+00 : f32
    %35 = vector.broadcast %cst_12 : f32 to vector<49x64xf32>
    %36 = arith.maximumf %34, %35 : vector<49x64xf32>
    %37 = vector.shape_cast %36 : vector<49x64xf32> to vector<7x7x64xf32>
    %38 = vector.extract_strided_slice %37 {offsets = [0, 0, 0], sizes = [5, 5, 64], strides = [1, 1, 1]} : vector<7x7x64xf32> to vector<5x5x64xf32>
    %39 = vector.extract_strided_slice %37 {offsets = [0, 1, 0], sizes = [5, 5, 64], strides = [1, 1, 1]} : vector<7x7x64xf32> to vector<5x5x64xf32>
    %40 = vector.extract_strided_slice %37 {offsets = [0, 2, 0], sizes = [5, 5, 64], strides = [1, 1, 1]} : vector<7x7x64xf32> to vector<5x5x64xf32>
    %41 = vector.extract_strided_slice %37 {offsets = [1, 0, 0], sizes = [5, 5, 64], strides = [1, 1, 1]} : vector<7x7x64xf32> to vector<5x5x64xf32>
    %42 = vector.extract_strided_slice %37 {offsets = [1, 1, 0], sizes = [5, 5, 64], strides = [1, 1, 1]} : vector<7x7x64xf32> to vector<5x5x64xf32>
    %43 = vector.extract_strided_slice %37 {offsets = [1, 2, 0], sizes = [5, 5, 64], strides = [1, 1, 1]} : vector<7x7x64xf32> to vector<5x5x64xf32>
    %44 = vector.extract_strided_slice %37 {offsets = [2, 0, 0], sizes = [5, 5, 64], strides = [1, 1, 1]} : vector<7x7x64xf32> to vector<5x5x64xf32>
    %45 = vector.extract_strided_slice %37 {offsets = [2, 1, 0], sizes = [5, 5, 64], strides = [1, 1, 1]} : vector<7x7x64xf32> to vector<5x5x64xf32>
    %46 = vector.extract_strided_slice %37 {offsets = [2, 2, 0], sizes = [5, 5, 64], strides = [1, 1, 1]} : vector<7x7x64xf32> to vector<5x5x64xf32>
    %47 = tpu.concatenate %38, %39, %40, %41, %42, %43, %44, %45, %46 in 2 : vector<5x5x64xf32>, vector<5x5x64xf32>, vector<5x5x64xf32>, vector<5x5x64xf32>, vector<5x5x64xf32>, vector<5x5x64xf32>, vector<5x5x64xf32>, vector<5x5x64xf32>, vector<5x5x64xf32> -> vector<5x5x576xf32>
    %48 = vector.shape_cast %47 : vector<5x5x576xf32> to vector<25x576xf32>
    %c0_13 = arith.constant 0 : index
    %c0_14 = arith.constant 0 : index
    %49 = vector.load %arg6[%c0_13, %c0_14] : memref<576x12xf32, #tpu.memory_space<vmem>>, vector<576x12xf32>
    %cst_15 = arith.constant dense<0.000000e+00> : vector<25x12xf32>
    %50 = tpu.matmul %48, %49, %cst_15 {dimension_numbers = #tpu.dot_dimension_numbers<[1], [0], [0], [1], [0, 0, 1, 1], [], []>, precision = #tpu.contract_precision<fp32>} : vector<25x576xf32>, vector<576x12xf32>, vector<25x12xf32> -> vector<25x12xf32>
    %c0_16 = arith.constant 0 : index
    %c0_17 = arith.constant 0 : index
    %51 = vector.load %arg7[%c0_16, %c0_17] : memref<1x12xf32, #tpu.memory_space<vmem>>, vector<1x12xf32>
    %52 = vector.broadcast %51 : vector<1x12xf32> to vector<25x12xf32>
    %53 = arith.addf %50, %52 : vector<25x12xf32>
    %54 = tpu.transpose %53, [1, 0] : vector<25x12xf32> -> vector<12x25xf32>
    %c0_18 = arith.constant 0 : index
    %c0_19 = arith.constant 0 : index
    %c0_20 = arith.constant 0 : index
    %55 = vector.load %arg8[%c0_18, %c0_19, %c0_20] : memref<1x12x25xf32, #tpu.memory_space<vmem>>, vector<1x12x25xf32>
    %56 = vector.shape_cast %55 : vector<1x12x25xf32> to vector<12x25xf32>
    %57 = vector.shape_cast %54 : vector<12x25xf32> to vector<1x12x25xf32>
    tpu.vector_store %arg8[%c0_18, %c0_19, %c0_20], %57 {strides = array<i32>} : memref<1x12x25xf32, #tpu.memory_space<vmem>>, vector<1x12x25xf32>,
    return
  }
  func.func @transform_0(%arg0: i32) -> (i32, i32, i32) {
    %c0_i32 = arith.constant 0 : i32
    %c0_i32_0 = arith.constant 0 : i32
    %c0_i32_1 = arith.constant 0 : i32
    return %arg0, %c0_i32, %c0_i32_0 : i32, i32, i32
  }
  func.func @transform_1(%arg0: i32) -> (i32, i32) {
    %c0_i32 = arith.constant 0 : i32
    %c0_i32_0 = arith.constant 0 : i32
    %c0_i32_1 = arith.constant 0 : i32
    return %c0_i32, %c0_i32_0 : i32, i32
  }
  func.func @transform_2(%arg0: i32) -> (i32, i32) {
    %c0_i32 = arith.constant 0 : i32
    %c0_i32_0 = arith.constant 0 : i32
    %c0_i32_1 = arith.constant 0 : i32
    return %c0_i32, %c0_i32_0 : i32, i32
  }
  func.func @transform_3(%arg0: i32) -> (i32, i32) {
    %c0_i32 = arith.constant 0 : i32
    %c0_i32_0 = arith.constant 0 : i32
    %c0_i32_1 = arith.constant 0 : i32
    return %c0_i32, %c0_i32_0 : i32, i32
  }
  func.func @transform_4(%arg0: i32) -> (i32, i32) {
    %c0_i32 = arith.constant 0 : i32
    %c0_i32_0 = arith.constant 0 : i32
    %c0_i32_1 = arith.constant 0 : i32
    return %c0_i32, %c0_i32_0 : i32, i32
  }
  func.func @transform_5(%arg0: i32) -> (i32, i32) {
    %c0_i32 = arith.constant 0 : i32
    %c0_i32_0 = arith.constant 0 : i32
    %c0_i32_1 = arith.constant 0 : i32
    return %c0_i32, %c0_i32_0 : i32, i32
  }
  func.func @transform_6(%arg0: i32) -> (i32, i32) {
    %c0_i32 = arith.constant 0 : i32
    %c0_i32_0 = arith.constant 0 : i32
    %c0_i32_1 = arith.constant 0 : i32
    return %c0_i32, %c0_i32_0 : i32, i32
  }
  func.func @transform_7(%arg0: i32) -> (i32, i32, i32) {
    %c0_i32 = arith.constant 0 : i32
    %c0_i32_0 = arith.constant 0 : i32
    %c0_i32_1 = arith.constant 0 : i32
    return %arg0, %c0_i32, %c0_i32_0 : i32, i32, i32
  }
}

</mosaic_0001>

<llo_original>
// kernel: spre_forward.1
$region0: #{spre_forward.1}
  #allocation0 [shape = 'u32[]', space=smem, size = 0x4, offset = 0x4, fixed_abs, tag = 'smem constant byte address 0x4 - core index']
  #allocation1 [shape = 'u32[72,128]{1,0:T(1,128)}', space=vmem, size = 0x9000, scoped, tag = 'internal scratch']
  %s0 = inlined_call_operand.vmem [shape: f32[2,256,75], index: 0, kind: input, shape index: {}]
  %s1 = inlined_call_operand.vmem [shape: f32[75,10], index: 1, kind: input, shape index: {}]
  %s2 = inlined_call_operand.vmem [shape: f32[1,10], index: 2, kind: input, shape index: {}]
  %s3 = inlined_call_operand.vmem [shape: f32[90,64], index: 3, kind: input, shape index: {}]
  %s4 = inlined_call_operand.vmem [shape: f32[1,64], index: 4, kind: input, shape index: {}]
  %s5 = inlined_call_operand.vmem [shape: f32[576,12], index: 5, kind: input, shape index: {}]
  %s6 = inlined_call_operand.vmem [shape: f32[1,12], index: 6, kind: input, shape index: {}]
  %s7 = inlined_call_operand.vmem [shape: f32[2,12,25], index: 7, kind: output, shape index: {}]
  %s8 = sld [smem:[#allocation0]]
  $region61: #{spre_forward.1} parent=0
    _
  %s10 = ssub.s32 1, %s8
  %s11 = scalar_select 0, %s10, %s8
  loop: start=0, step=1, limit=4
  $region2: #{spre_forward.1} parent=0 // loop_pre_header
    _
  $region3: #{spre_forward.1} parent=0 // loop_header
    %s13 = sphi 0, %s17
    %p14 = scmp.ge.s32.totalorder %s13, 4
    %s23 = sphi 0, %s25
    %s26 = sphi 0, %s23
    %s27 = sphi 0, %s26
    %s43 = sphi 0, %s27
    %s47 = sphi 0, %s47
    %s49 = sphi 0, %s47
    %s50 = sphi 0, %s49
    %s64 = sphi 0, %s50
    %s68 = sphi 0, %s68
    %s70 = sphi 0, %s68
    %s71 = sphi 0, %s70
    %s85 = sphi 0, %s71
    %s89 = sphi 0, %s89
    %s91 = sphi 0, %s89
    %s92 = sphi 0, %s91
    %s106 = sphi 0, %s92
    %s110 = sphi 0, %s110
    %s112 = sphi 0, %s110
    %s113 = sphi 0, %s112
    %s127 = sphi 0, %s113
    %s131 = sphi 0, %s131
    %s133 = sphi 0, %s131
    %s134 = sphi 0, %s133
    %s148 = sphi 0, %s134
    %s152 = sphi 0, %s152
    %s154 = sphi 0, %s152
    %s155 = sphi 0, %s154
    %s169 = sphi 0, %s155
    %s175 = sphi 0, %s177
    %s178 = sphi 0, %s175
    %s179 = sphi 0, %s178
    %s195 = sphi 0, %s179
  $region4: #{spre_forward.1} parent=0 // loop_header_branch
    %16 = sbr.rel (%p14) target = $region8
  $region5: #{spre_forward.1} parent=0 // loop_body
    %s18 = ssub.s32 %s13, 1
    %s19 = ssub.s32 %s13, 2
    %s20 = sadd.s32 %s13, 1
    %s21 = ssub.s32 %s13, %s20
    %p22 = scmp.eq.s32.totalorder %s21, 0
    %s24 = sadd.s32 %s23, 1
    %s25 = scalar_select %p22, %s23, %s24
    %p28 = pneg %p22
    %p29 = scmp.eq.s32.totalorder %s13, 1
    %p30 = por %p28, %p29
    %p31 = scmp.ne.s32.totalorder %s23, %s26
    %p32 = scmp.eq.s32.totalorder %s13, 0
    %p33 = por %p31, %p32
    %p34 = scmp.ne.s32.totalorder %s23, %s26
    %p35 = scmp.eq.s32.totalorder %s18, 1
    %p36 = por %p34, %p35
    %p37 = scmp.ne.s32.totalorder %s26, %s27
    %p38 = scmp.eq.s32.totalorder %s18, 0
    %p39 = por %p37, %p38
    %p40 = scmp.ne.s32.totalorder %s26, %s27
    %p41 = scmp.eq.s32.totalorder %s19, 1
    %p42 = por %p40, %p41
    %p44 = scmp.ne.s32.totalorder %s27, %s43
    %p45 = scmp.eq.s32.totalorder %s19, 0
    %p46 = por %p44, %p45
    %s48 = sadd.s32 %s47, 1
    %p51 = scmp.eq.s32.totalorder %s13, 1
    %p52 = scmp.ne.s32.totalorder %s47, %s49
    %p53 = scmp.eq.s32.totalorder %s13, 0
    %p54 = por %p52, %p53
    %p55 = scmp.ne.s32.totalorder %s47, %s49
    %p56 = scmp.eq.s32.totalorder %s18, 1
    %p57 = por %p55, %p56
    %p58 = scmp.ne.s32.totalorder %s49, %s50
    %p59 = scmp.eq.s32.totalorder %s18, 0
    %p60 = por %p58, %p59
    %p61 = scmp.ne.s32.totalorder %s49, %s50
    %p62 = scmp.eq.s32.totalorder %s19, 1
    %p63 = por %p61, %p62
    %p65 = scmp.ne.s32.totalorder %s50, %s64
    %p66 = scmp.eq.s32.totalorder %s19, 0
    %p67 = por %p65, %p66
    %s69 = sadd.s32 %s68, 1
    %p72 = scmp.eq.s32.totalorder %s13, 1
    %p73 = scmp.ne.s32.totalorder %s68, %s70
    %p74 = scmp.eq.s32.totalorder %s13, 0
    %p75 = por %p73, %p74
    %p76 = scmp.ne.s32.totalorder %s68, %s70
    %p77 = scmp.eq.s32.totalorder %s18, 1
    %p78 = por %p76, %p77
    %p79 = scmp.ne.s32.totalorder %s70, %s71
    %p80 = scmp.eq.s32.totalorder %s18, 0
    %p81 = por %p79, %p80
    %p82 = scmp.ne.s32.totalorder %s70, %s71
    %p83 = scmp.eq.s32.totalorder %s19, 1
    %p84 = por %p82, %p83
    %p86 = scmp.ne.s32.totalorder %s71, %s85
    %p87 = scmp.eq.s32.totalorder %s19, 0
    %p88 = por %p86, %p87
    %s90 = sadd.s32 %s89, 1
    %p93 = scmp.eq.s32.totalorder %s13, 1
    %p94 = scmp.ne.s32.totalorder %s89, %s91
    %p95 = scmp.eq.s32.totalorder %s13, 0
    %p96 = por %p94, %p95
    %p97 = scmp.ne.s32.totalorder %s89, %s91
    %p98 = scmp.eq.s32.totalorder %s18, 1
    %p99 = por %p97, %p98
    %p100 = scmp.ne.s32.totalorder %s91, %s92
    %p101 = scmp.eq.s32.totalorder %s18, 0
    %p102 = por %p100, %p101
    %p103 = scmp.ne.s32.totalorder %s91, %s92
    %p104 = scmp.eq.s32.totalorder %s19, 1
    %p105 = por %p103, %p104
    %p107 = scmp.ne.s32.totalorder %s92, %s106
    %p108 = scmp.eq.s32.totalorder %s19, 0
    %p109 = por %p107, %p108
    %s111 = sadd.s32 %s110, 1
    %p114 = scmp.eq.s32.totalorder %s13, 1
    %p115 = scmp.ne.s32.totalorder %s110, %s112
    %p116 = scmp.eq.s32.totalorder %s13, 0
    %p117 = por %p115, %p116
    %p118 = scmp.ne.s32.totalorder %s110, %s112
    %p119 = scmp.eq.s32.totalorder %s18, 1
    %p120 = por %p118, %p119
    %p121 = scmp.ne.s32.totalorder %s112, %s113
    %p122 = scmp.eq.s32.totalorder %s18, 0
    %p123 = por %p121, %p122
    %p124 = scmp.ne.s32.totalorder %s112, %s113
    %p125 = scmp.eq.s32.totalorder %s19, 1
    %p126 = por %p124, %p125
    %p128 = scmp.ne.s32.totalorder %s113, %s127
    %p129 = scmp.eq.s32.totalorder %s19, 0
    %p130 = por %p128, %p129
    %s132 = sadd.s32 %s131, 1
    %p135 = scmp.eq.s32.totalorder %s13, 1
    %p136 = scmp.ne.s32.totalorder %s131, %s133
    %p137 = scmp.eq.s32.totalorder %s13, 0
    %p138 = por %p136, %p137
    %p139 = scmp.ne.s32.totalorder %s131, %s133
    %p140 = scmp.eq.s32.totalorder %s18, 1
    %p141 = por %p139, %p140
    %p142 = scmp.ne.s32.totalorder %s133, %s134
    %p143 = scmp.eq.s32.totalorder %s18, 0
    %p144 = por %p142, %p143
    %p145 = scmp.ne.s32.totalorder %s133, %s134
    %p146 = scmp.eq.s32.totalorder %s19, 1
    %p147 = por %p145, %p146
    %p149 = scmp.ne.s32.totalorder %s134, %s148
    %p150 = scmp.eq.s32.totalorder %s19, 0
    %p151 = por %p149, %p150
    %s153 = sadd.s32 %s152, 1
    %p156 = scmp.eq.s32.totalorder %s13, 1
    %p157 = scmp.ne.s32.totalorder %s152, %s154
    %p158 = scmp.eq.s32.totalorder %s13, 0
    %p159 = por %p157, %p158
    %p160 = scmp.ne.s32.totalorder %s152, %s154
    %p161 = scmp.eq.s32.totalorder %s18, 1
    %p162 = por %p160, %p161
    %p163 = scmp.ne.s32.totalorder %s154, %s155
    %p164 = scmp.eq.s32.totalorder %s18, 0
    %p165 = por %p163, %p164
    %p166 = scmp.ne.s32.totalorder %s154, %s155
    %p167 = scmp.eq.s32.totalorder %s19, 1
    %p168 = por %p166, %p167
    %p170 = scmp.ne.s32.totalorder %s155, %s169
    %p171 = scmp.eq.s32.totalorder %s19, 0
    %p172 = por %p170, %p171
    %s173 = ssub.s32 %s13, %s20
    %p174 = scmp.eq.s32.totalorder %s173, 0
    %s176 = sadd.s32 %s175, 1
    %s177 = scalar_select %p174, %s175, %s176
    %p180 = pneg %p174
    %p181 = scmp.eq.s32.totalorder %s13, 1
    %p182 = por %p180, %p181
    %p183 = scmp.ne.s32.totalorder %s175, %s178
    %p184 = scmp.eq.s32.totalorder %s13, 0
    %p185 = por %p183, %p184
    %p186 = scmp.ne.s32.totalorder %s175, %s178
    %p187 = scmp.eq.s32.totalorder %s18, 1
    %p188 = por %p186, %p187
    %p189 = scmp.ne.s32.totalorder %s178, %s179
    %p190 = scmp.eq.s32.totalorder %s18, 0
    %p191 = por %p189, %p190
    %p192 = scmp.ne.s32.totalorder %s178, %s179
    %p193 = scmp.eq.s32.totalorder %s19, 1
    %p194 = por %p192, %p193
    %p196 = scmp.ne.s32.totalorder %s179, %s195
    %p197 = scmp.eq.s32.totalorder %s19, 0
    %p198 = por %p196, %p197
    %p199 = scmp.le.s32.totalorder 1, %s13
    %p200 = scmp.lt.s32.totalorder %s13, 3
    %p201 = pnand %p199, %p200
    %p202 = pneg %p201
    // Predicated region
    $region9: #{spre_forward.1} parent=5 // pred_check
      _
    $region10: #{spre_forward.1} parent=5 // pred_check_branch
      %204 = sbr.rel (%p201) target = $region12
    $region11: #{spre_forward.1} parent=5 // pred_region
      %s205 = ssub.s32 %s13, 1
      // Predicated region
      $region13: #{spre_forward.1} parent=11 // pred_check
        %p206 = pneg %p60
      $region14: #{spre_forward.1} parent=11 // pred_check_branch
        %208 = sbr.rel (%p206) target = $region16
      $region15: #{spre_forward.1} parent=11 // pred_region
        _
      $region16: #{spre_forward.1} parent=11 // pred_fallthru
        _
      // Predicated region
      $region17: #{spre_forward.1} parent=11 // pred_check
        %p209 = pneg %p81
      $region18: #{spre_forward.1} parent=11 // pred_check_branch
        %211 = sbr.rel (%p209) target = $region20
      $region19: #{spre_forward.1} parent=11 // pred_region
        _
      $region20: #{spre_forward.1} parent=11 // pred_fallthru
        _
      // Predicated region
      $region21: #{spre_forward.1} parent=11 // pred_check
        %p212 = pneg %p102
      $region22: #{spre_forward.1} parent=11 // pred_check_branch
        %214 = sbr.rel (%p212) target = $region24
      $region23: #{spre_forward.1} parent=11 // pred_region
        _
      $region24: #{spre_forward.1} parent=11 // pred_fallthru
        _
      // Predicated region
      $region25: #{spre_forward.1} parent=11 // pred_check
        %p215 = pneg %p123
      $region26: #{spre_forward.1} parent=11 // pred_check_branch
        %217 = sbr.rel (%p215) target = $region28
      $region27: #{spre_forward.1} parent=11 // pred_region
        _
      $region28: #{spre_forward.1} parent=11 // pred_fallthru
        _
      // Predicated region
      $region29: #{spre_forward.1} parent=11 // pred_check
        %p218 = pneg %p144
      $region30: #{spre_forward.1} parent=11 // pred_check_branch
        %220 = sbr.rel (%p218) target = $region32
      $region31: #{spre_forward.1} parent=11 // pred_region
        _
      $region32: #{spre_forward.1} parent=11 // pred_fallthru
        _
      // Predicated region
      $region33: #{spre_forward.1} parent=11 // pred_check
        %p221 = pneg %p165
      $region34: #{spre_forward.1} parent=11 // pred_check_branch
        %223 = sbr.rel (%p221) target = $region36
      $region35: #{spre_forward.1} parent=11 // pred_region
        _
      $region36: #{spre_forward.1} parent=11 // pred_fallthru
        _
    $region12: #{spre_forward.1} parent=5 // pred_fallthru
      _
    %p224 = scmp.lt.s32.totalorder %s13, 2
    // Predicated region
    $region37: #{spre_forward.1} parent=5 // pred_check
      %p225 = pneg %p224
    $region38: #{spre_forward.1} parent=5 // pred_check_branch
      %227 = sbr.rel (%p225) target = $region40
    $region39: #{spre_forward.1} parent=5 // pred_region
      // Predicated region
      $region41: #{spre_forward.1} parent=39 // pred_check
        %p228 = pneg %p33
      $region42: #{spre_forward.1} parent=39 // pred_check_branch
        %230 = sbr.rel (%p228) target = $region44
      $region43: #{spre_forward.1} parent=39 // pred_region
        %p231 = scmp.lt.s32.totalorder %s13, 1
        %s232 = scalar_select %p231, %s13, 1
        %s233 = smul.addr %s232, 32
        %s234 = smul.addr %s233, 8
        %s235 = scalar_lea.vmem %s0, %s234
      $region44: #{spre_forward.1} parent=39 // pred_fallthru
        _
    $region40: #{spre_forward.1} parent=5 // pred_fallthru
      _
    %p236 = scmp.le.s32.totalorder 1, %s13
    %p237 = scmp.lt.s32.totalorder %s13, 3
    %p238 = pnand %p236, %p237
    %p239 = pneg %p238
    // Predicated region
    $region45: #{spre_forward.1} parent=5 // pred_check
      _
    $region46: #{spre_forward.1} parent=5 // pred_check_branch
      %241 = sbr.rel (%p238) target = $region48
    $region47: #{spre_forward.1} parent=5 // pred_region
      %s242 = ssub.s32 %s13, 1
      %p243 = scmp.lt.s32.totalorder %s18, 1
      %s244 = scalar_select %p243, %s18, 1
      %s245 = smul.addr %s244, 32
      %s246 = smul.addr %s245, 8
      %s247 = scalar_lea.vmem %s0, %s246
      %p248 = pneg %p39
      %p249 = pneg %p36
      %p250 = pneg %p60
      %p251 = pneg %p57
      %p252 = pneg %p81
      %p253 = pneg %p78
      %p254 = pneg %p102
      %p255 = pneg %p99
      %p256 = pneg %p123
      %p257 = pneg %p120
      %p258 = pneg %p144
      %p259 = pneg %p141
      %p260 = pneg %p165
      %p261 = pneg %p162
      %p262 = pneg %p191
      %p263 = pneg %p188
      %p264 = scmp.lt.s32.totalorder %s18, 1
      %s265 = scalar_select %p264, %s18, 1
      %s266 = smul.addr %s265, 2
      %s267 = smul.addr %s266, 8
      %s268 = scalar_lea.vmem %s7, %s267
      %p269 = scmp.lt.s32.totalorder %s18, 1
      %s270 = scalar_select %p269, %s18, 1
      %s271 = smul.addr %s270, 32
      %s272 = smul.addr %s271, 8
      %s273 = scalar_lea.vmem %s0, %s272
      %p274 = scmp.lt.s32.totalorder %s18, 1
      %s275 = scalar_select %p274, %s18, 1
      %s276 = smul.addr %s275, 2
      %s277 = smul.addr %s276, 8
      %s278 = scalar_lea.vmem %s7, %s277
      %v279 = vld [vmem:[%s273] sm:$0xff]
      %v280 = vld [vmem:[%s273 + $0x8] sm:$0xff]
      %v281 = vld [vmem:[%s273 + $0x10] sm:$0xff]
      %v282 = vld [vmem:[%s273 + $0x18] sm:$0xff]
      %v283 = vld [vmem:[%s273 + $0x20] sm:$0xff]
      %v284 = vld [vmem:[%s273 + $0x28] sm:$0xff]
      %v285 = vld [vmem:[%s273 + $0x30] sm:$0xff]
      %v286 = vld [vmem:[%s273 + $0x38] sm:$0xff]
      %v287 = vld [vmem:[%s273 + $0x40] sm:$0xff]
      %v288 = vld [vmem:[%s273 + $0x48] sm:$0xff]
      %v289 = vld [vmem:[%s273 + $0x50] sm:$0xff]
      %v290 = vld [vmem:[%s273 + $0x58] sm:$0xff]
      %v291 = vld [vmem:[%s273 + $0x60] sm:$0xff]
      %v292 = vld [vmem:[%s273 + $0x68] sm:$0xff]
      %v293 = vld [vmem:[%s273 + $0x70] sm:$0xff]
      %v294 = vld [vmem:[%s273 + $0x78] sm:$0xff]
      %v295 = vld [vmem:[%s273 + $0x80] sm:$0xff]
      %v296 = vld [vmem:[%s273 + $0x88] sm:$0xff]
      %v297 = vld [vmem:[%s273 + $0x90] sm:$0xff]
      %v298 = vld [vmem:[%s273 + $0x98] sm:$0xff]
      %v299 = vld [vmem:[%s273 + $0xa0] sm:$0xff]
      %v300 = vld [vmem:[%s273 + $0xa8] sm:$0xff]
      %v301 = vld [vmem:[%s273 + $0xb0] sm:$0xff]
      %v302 = vld [vmem:[%s273 + $0xb8] sm:$0xff]
      %v303 = vld [vmem:[%s273 + $0xc0] sm:$0xff]
      %v304 = vld [vmem:[%s273 + $0xc8] sm:$0xff]
      %v305 = vld [vmem:[%s273 + $0xd0] sm:$0xff]
      %v306 = vld [vmem:[%s273 + $0xd8] sm:$0xff]
      %v307 = vld [vmem:[%s273 + $0xe0] sm:$0xff]
      %v308 = vld [vmem:[%s273 + $0xe8] sm:$0xff]
      %v309 = vld [vmem:[%s273 + $0xf0] sm:$0xff]
      %v310 = vld [vmem:[%s273 + $0xf8] sm:$0xff]
      %v311 = vld [vmem:[%s1] sm:$0xff]
      %v312 = vld [vmem:[%s1 + $0x8] sm:$0xff]
      %v313 = vld [vmem:[%s1 + $0x10] sm:$0xff]
      %v314 = vld [vmem:[%s1 + $0x18] sm:$0xff]
      %v315 = vld [vmem:[%s1 + $0x20] sm:$0xff]
      %v316 = vld [vmem:[%s1 + $0x28] sm:$0xff]
      %v317 = vld [vmem:[%s1 + $0x30] sm:$0xff]
      %v318 = vld [vmem:[%s1 + $0x38] sm:$0xff]
      %v319 = vld [vmem:[%s1 + $0x40] sm:$0xff]
      %v320 = vld [vmem:[%s1 + $0x48] sm:$0x7]
      %v321 = vld [vmem:[%s2] sm:$0x1]
      %v323 = vperm.slane %v321, 0
      %vm325 = vcmask 613376
      %v327 = vsel %vm325, %v279, 0
      %v330 = vsel %vm325, %v280, 0
      %v333 = vsel %vm325, %v281, 0
      %v336 = vsel %vm325, %v282, 0
      %v339 = vsel %vm325, %v283, 0
      %v342 = vsel %vm325, %v284, 0
      %v345 = vsel %vm325, %v285, 0
      %v348 = vsel %vm325, %v286, 0
      %v351 = vsel %vm325, %v287, 0
      %v354 = vsel %vm325, %v288, 0
      %v357 = vsel %vm325, %v289, 0
      %v360 = vsel %vm325, %v290, 0
      %v363 = vsel %vm325, %v291, 0
      %v366 = vsel %vm325, %v292, 0
      %v369 = vsel %vm325, %v293, 0
      %v372 = vsel %vm325, %v294, 0
      %v375 = vsel %vm325, %v295, 0
      %v378 = vsel %vm325, %v296, 0
      %v381 = vsel %vm325, %v297, 0
      %v384 = vsel %vm325, %v298, 0
      %v387 = vsel %vm325, %v299, 0
      %v390 = vsel %vm325, %v300, 0
      %v393 = vsel %vm325, %v301, 0
      %v396 = vsel %vm325, %v302, 0
      %v399 = vsel %vm325, %v303, 0
      %v402 = vsel %vm325, %v304, 0
      %v405 = vsel %vm325, %v305, 0
      %v408 = vsel %vm325, %v306, 0
      %v411 = vsel %vm325, %v307, 0
      %v414 = vsel %vm325, %v308, 0
      %v417 = vsel %vm325, %v309, 0
      %v420 = vsel %vm325, %v310, 0
      %vm422 = vcmask 1042432
      %v424 = vsel %vm422, %v320, 0
      %426 = vmatpush.msra.mxu0 0.0
      %427 = vmatpush.msra.mxu0 0.0
      %428 = vmatpush.msra.mxu0 0.0
      %429 = vmatpush.msra.mxu0 0.0
      %430 = vmatpush.msra.mxu0 0.0
      %431 = vmatpush.msra.mxu0 0.0
      %v432 = vand.u32 %v424, 4294901760
      %433 = vmatpush.msra.mxu0 %v432
      %v434 = vand.u32 %v319, 4294901760
      %435 = vmatpush.msra.mxu0 %v434
      %v436 = vand.u32 %v318, 4294901760
      %437 = vmatpush.msra.mxu0 %v436
      %v438 = vand.u32 %v317, 4294901760
      %439 = vmatpush.msra.mxu0 %v438
      %v440 = vand.u32 %v316, 4294901760
      %441 = vmatpush.msra.mxu0 %v440
      %v442 = vand.u32 %v315, 4294901760
      %443 = vmatpush.msra.mxu0 %v442
      %v444 = vand.u32 %v314, 4294901760
      %445 = vmatpush.msra.mxu0 %v444
      %v446 = vand.u32 %v313, 4294901760
      %447 = vmatpush.msra.mxu0 %v446
      %v448 = vand.u32 %v312, 4294901760
      %449 = vmatpush.msra.mxu0 %v448
      %v450 = vand.u32 %v311, 4294901760
      %451 = vmatpush.msra.mxu0 %v450
      %v452 = vand.u32 %v327, 4294901760
      %v453 = vsub.f32 %v327, %v452
      %v454 = vand.u32 %v453, 4294901760
      %v455 = vsub.f32 %v453, %v454
      %v456 = vand.u32 %v455, 4294901760
      %457 = vmatmul.f32.gmra.mxu0 %v456
      %v458 = vpop.f32.mrf.mxu0
      %v459 = vadd.f32 %v323, %v458
      %v460 = vand.u32 %v330, 4294901760
      %v461 = vsub.f32 %v330, %v460
      %v462 = vand.u32 %v461, 4294901760
      %v463 = vsub.f32 %v461, %v462
      %v464 = vand.u32 %v463, 4294901760
      %465 = vmatmul.f32.gmra.mxu0 %v464
      %v466 = vpop.f32.mrf.mxu0
      %v467 = vadd.f32 %v323, %v466
      %v468 = vand.u32 %v333, 4294901760
      %v469 = vsub.f32 %v333, %v468
      %v470 = vand.u32 %v469, 4294901760
      %v471 = vsub.f32 %v469, %v470
      %v472 = vand.u32 %v471, 4294901760
      %473 = vmatmul.f32.gmra.mxu0 %v472
      %v474 = vpop.f32.mrf.mxu0
      %v475 = vadd.f32 %v323, %v474
      %v476 = vand.u32 %v336, 4294901760
      %v477 = vsub.f32 %v336, %v476
      %v478 = vand.u32 %v477, 4294901760
      %v479 = vsub.f32 %v477, %v478
      %v480 = vand.u32 %v479, 4294901760
      %481 = vmatmul.f32.gmra.mxu0 %v480
      %v482 = vpop.f32.mrf.mxu0
      %v483 = vadd.f32 %v323, %v482
      %v484 = vand.u32 %v339, 4294901760
      %v485 = vsub.f32 %v339, %v484
      %v486 = vand.u32 %v485, 4294901760
      %v487 = vsub.f32 %v485, %v486
      %v488 = vand.u32 %v487, 4294901760
      %489 = vmatmul.f32.gmra.mxu0 %v488
      %v490 = vpop.f32.mrf.mxu0
      %v491 = vadd.f32 %v323, %v490
      %v492 = vand.u32 %v342, 4294901760
      %v493 = vsub.f32 %v342, %v492
      %v494 = vand.u32 %v493, 4294901760
      %v495 = vsub.f32 %v493, %v494
      %v496 = vand.u32 %v495, 4294901760
      %497 = vmatmul.f32.gmra.mxu0 %v496
      %v498 = vpop.f32.mrf.mxu0
      %v499 = vadd.f32 %v323, %v498
      %v500 = vand.u32 %v345, 4294901760
      %v501 = vsub.f32 %v345, %v500
      %v502 = vand.u32 %v501, 4294901760
      %v503 = vsub.f32 %v501, %v502
      %v504 = vand.u32 %v503, 4294901760
      %505 = vmatmul.f32.gmra.mxu0 %v504
      %v506 = vpop.f32.mrf.mxu0
      %v507 = vadd.f32 %v323, %v506
      %v508 = vand.u32 %v348, 4294901760
      %v509 = vsub.f32 %v348, %v508
      %v510 = vand.u32 %v509, 4294901760
      %v511 = vsub.f32 %v509, %v510
      %v512 = vand.u32 %v511, 4294901760
      %513 = vmatmul.f32.gmra.mxu0 %v512
      %v514 = vpop.f32.mrf.mxu0
      %v515 = vadd.f32 %v323, %v514
      %v516 = vand.u32 %v351, 4294901760
      %v517 = vsub.f32 %v351, %v516
      %v518 = vand.u32 %v517, 4294901760
      %v519 = vsub.f32 %v517, %v518
      %v520 = vand.u32 %v519, 4294901760
      %521 = vmatmul.f32.gmra.mxu0 %v520
      %v522 = vpop.f32.mrf.mxu0
      %v523 = vadd.f32 %v323, %v522
      %v524 = vand.u32 %v354, 4294901760
      %v525 = vsub.f32 %v354, %v524
      %v526 = vand.u32 %v525, 4294901760
      %v527 = vsub.f32 %v525, %v526
      %v528 = vand.u32 %v527, 4294901760
      %529 = vmatmul.f32.gmra.mxu0 %v528
      %v530 = vpop.f32.mrf.mxu0
      %v531 = vadd.f32 %v323, %v530
      %v532 = vand.u32 %v357, 4294901760
      %v533 = vsub.f32 %v357, %v532
      %v534 = vand.u32 %v533, 4294901760
      %v535 = vsub.f32 %v533, %v534
      %v536 = vand.u32 %v535, 4294901760
      %537 = vmatmul.f32.gmra.mxu0 %v536
      %v538 = vpop.f32.mrf.mxu0
      %v539 = vadd.f32 %v323, %v538
      %v540 = vand.u32 %v360, 4294901760
      %v541 = vsub.f32 %v360, %v540
      %v542 = vand.u32 %v541, 4294901760
      %v543 = vsub.f32 %v541, %v542
      %v544 = vand.u32 %v543, 4294901760
      %545 = vmatmul.f32.gmra.mxu0 %v544
      %v546 = vpop.f32.mrf.mxu0
      %v547 = vadd.f32 %v323, %v546
      %v548 = vand.u32 %v363, 4294901760
      %v549 = vsub.f32 %v363, %v548
      %v550 = vand.u32 %v549, 4294901760
      %v551 = vsub.f32 %v549, %v550
      %v552 = vand.u32 %v551, 4294901760
      %553 = vmatmul.f32.gmra.mxu0 %v552
      %v554 = vpop.f32.mrf.mxu0
      %v555 = vadd.f32 %v323, %v554
      %v556 = vand.u32 %v366, 4294901760
      %v557 = vsub.f32 %v366, %v556
      %v558 = vand.u32 %v557, 4294901760
      %v559 = vsub.f32 %v557, %v558
      %v560 = vand.u32 %v559, 4294901760
      %561 = vmatmul.f32.gmra.mxu0 %v560
      %v562 = vpop.f32.mrf.mxu0
      %v563 = vadd.f32 %v323, %v562
      %v564 = vand.u32 %v369, 4294901760
      %v565 = vsub.f32 %v369, %v564
      %v566 = vand.u32 %v565, 4294901760
      %v567 = vsub.f32 %v565, %v566
      %v568 = vand.u32 %v567, 4294901760
      %569 = vmatmul.f32.gmra.mxu0 %v568
      %v570 = vpop.f32.mrf.mxu0
      %v571 = vadd.f32 %v323, %v570
      %v572 = vand.u32 %v372, 4294901760
      %v573 = vsub.f32 %v372, %v572
      %v574 = vand.u32 %v573, 4294901760
      %v575 = vsub.f32 %v573, %v574
      %v576 = vand.u32 %v575, 4294901760
      %577 = vmatmul.f32.gmra.mxu0 %v576
      %v578 = vpop.f32.mrf.mxu0
      %v579 = vadd.f32 %v323, %v578
      %v580 = vand.u32 %v375, 4294901760
      %v581 = vsub.f32 %v375, %v580
      %v582 = vand.u32 %v581, 4294901760
      %v583 = vsub.f32 %v581, %v582
      %v584 = vand.u32 %v583, 4294901760
      %585 = vmatmul.f32.gmra.mxu0 %v584
      %v586 = vpop.f32.mrf.mxu0
      %v587 = vadd.f32 %v323, %v586
      %v588 = vand.u32 %v378, 4294901760
      %v589 = vsub.f32 %v378, %v588
      %v590 = vand.u32 %v589, 4294901760
      %v591 = vsub.f32 %v589, %v590
      %v592 = vand.u32 %v591, 4294901760
      %593 = vmatmul.f32.gmra.mxu0 %v592
      %v594 = vpop.f32.mrf.mxu0
      %v595 = vadd.f32 %v323, %v594
      %v596 = vand.u32 %v381, 4294901760
      %v597 = vsub.f32 %v381, %v596
      %v598 = vand.u32 %v597, 4294901760
      %v599 = vsub.f32 %v597, %v598
      %v600 = vand.u32 %v599, 4294901760
      %601 = vmatmul.f32.gmra.mxu0 %v600
      %v602 = vpop.f32.mrf.mxu0
      %v603 = vadd.f32 %v323, %v602
      %v604 = vand.u32 %v384, 4294901760
      %v605 = vsub.f32 %v384, %v604
      %v606 = vand.u32 %v605, 4294901760
      %v607 = vsub.f32 %v605, %v606
      %v608 = vand.u32 %v607, 4294901760
      %609 = vmatmul.f32.gmra.mxu0 %v608
      %v610 = vpop.f32.mrf.mxu0
      %v611 = vadd.f32 %v323, %v610
      %v612 = vand.u32 %v387, 4294901760
      %v613 = vsub.f32 %v387, %v612
      %v614 = vand.u32 %v613, 4294901760
      %v615 = vsub.f32 %v613, %v614
      %v616 = vand.u32 %v615, 4294901760
      %617 = vmatmul.f32.gmra.mxu0 %v616
      %v618 = vpop.f32.mrf.mxu0
      %v619 = vadd.f32 %v323, %v618
      %v620 = vand.u32 %v390, 4294901760
      %v621 = vsub.f32 %v390, %v620
      %v622 = vand.u32 %v621, 4294901760
      %v623 = vsub.f32 %v621, %v622
      %v624 = vand.u32 %v623, 4294901760
      %625 = vmatmul.f32.gmra.mxu0 %v624
      %v626 = vpop.f32.mrf.mxu0
      %v627 = vadd.f32 %v323, %v626
      %v628 = vand.u32 %v393, 4294901760
      %v629 = vsub.f32 %v393, %v628
      %v630 = vand.u32 %v629, 4294901760
      %v631 = vsub.f32 %v629, %v630
      %v632 = vand.u32 %v631, 4294901760
      %633 = vmatmul.f32.gmra.mxu0 %v632
      %v634 = vpop.f32.mrf.mxu0
      %v635 = vadd.f32 %v323, %v634
      %v636 = vand.u32 %v396, 4294901760
      %v637 = vsub.f32 %v396, %v636
      %v638 = vand.u32 %v637, 4294901760
      %v639 = vsub.f32 %v637, %v638
      %v640 = vand.u32 %v639, 4294901760
      %641 = vmatmul.f32.gmra.mxu0 %v640
      %v642 = vpop.f32.mrf.mxu0
      %v643 = vand.u32 %v399, 4294901760
      %v644 = vsub.f32 %v399, %v643
      %v645 = vand.u32 %v644, 4294901760
      %v646 = vsub.f32 %v644, %v645
      %v647 = vand.u32 %v646, 4294901760
      %648 = vmatmul.f32.gmra.mxu0 %v647
      %v649 = vpop.f32.mrf.mxu0
      %v650 = vadd.f32 %v323, %v649
      %v651 = vand.u32 %v402, 4294901760
      %v652 = vsub.f32 %v402, %v651
      %v653 = vand.u32 %v652, 4294901760
      %v654 = vsub.f32 %v652, %v653
      %v655 = vand.u32 %v654, 4294901760
      %656 = vmatmul.f32.gmra.mxu0 %v655
      %v657 = vpop.f32.mrf.mxu0
      %v658 = vadd.f32 %v323, %v657
      %v659 = vand.u32 %v405, 4294901760
      %v660 = vsub.f32 %v405, %v659
      %v661 = vand.u32 %v660, 4294901760
      %v662 = vsub.f32 %v660, %v661
      %v663 = vand.u32 %v662, 4294901760
      %664 = vmatmul.f32.gmra.mxu0 %v663
      %v665 = vpop.f32.mrf.mxu0
      %v666 = vadd.f32 %v323, %v665
      %v667 = vand.u32 %v408, 4294901760
      %v668 = vsub.f32 %v408, %v667
      %v669 = vand.u32 %v668, 4294901760
      %v670 = vsub.f32 %v668, %v669
      %v671 = vand.u32 %v670, 4294901760
      %672 = vmatmul.f32.gmra.mxu0 %v671
      %v673 = vpop.f32.mrf.mxu0
      %v674 = vadd.f32 %v323, %v673
      %v675 = vand.u32 %v411, 4294901760
      %v676 = vsub.f32 %v411, %v675
      %v677 = vand.u32 %v676, 4294901760
      %v678 = vsub.f32 %v676, %v677
      %v679 = vand.u32 %v678, 4294901760
      %680 = vmatmul.f32.gmra.mxu0 %v679
      %v681 = vpop.f32.mrf.mxu0
      %v682 = vadd.f32 %v323, %v681
      %v683 = vand.u32 %v414, 4294901760
      %v684 = vsub.f32 %v414, %v683
      %v685 = vand.u32 %v684, 4294901760
      %v686 = vsub.f32 %v684, %v685
      %v687 = vand.u32 %v686, 4294901760
      %688 = vmatmul.f32.gmra.mxu0 %v687
      %v689 = vpop.f32.mrf.mxu0
      %v690 = vadd.f32 %v323, %v689
      %v691 = vand.u32 %v417, 4294901760
      %v692 = vsub.f32 %v417, %v691
      %v693 = vand.u32 %v692, 4294901760
      %v694 = vsub.f32 %v692, %v693
      %v695 = vand.u32 %v694, 4294901760
      %696 = vmatmul.f32.gmra.mxu0 %v695
      %v697 = vpop.f32.mrf.mxu0
      %v698 = vadd.f32 %v323, %v697
      %v699 = vand.u32 %v420, 4294901760
      %v700 = vsub.f32 %v420, %v699
      %v701 = vand.u32 %v700, 4294901760
      %v702 = vsub.f32 %v700, %v701
      %v703 = vand.u32 %v702, 4294901760
      %704 = vmatmul.f32.gmra.mxu0 %v703
      %v705 = vpop.f32.mrf.mxu0
      %706 = vdwg.mxu0
      %707 = vmatpush.msra.mxu0 0.0
      %708 = vmatpush.msra.mxu0 0.0
      %709 = vmatpush.msra.mxu0 0.0
      %710 = vmatpush.msra.mxu0 0.0
      %711 = vmatpush.msra.mxu0 0.0
      %712 = vmatpush.msra.mxu0 0.0
      %v713 = vand.u32 %v424, 4294901760
      %v714 = vsub.f32 %v424, %v713
      %v715 = vand.u32 %v714, 4294901760
      %v716 = vsub.f32 %v714, %v715
      %v717 = vand.u32 %v716, 4294901760
      %718 = vmatpush.msra.mxu0 %v717
      %v719 = vand.u32 %v319, 4294901760
      %v720 = vsub.f32 %v319, %v719
      %v721 = vand.u32 %v720, 4294901760
      %v722 = vsub.f32 %v720, %v721
      %v723 = vand.u32 %v722, 4294901760
      %724 = vmatpush.msra.mxu0 %v723
      %v725 = vand.u32 %v318, 4294901760
      %v726 = vsub.f32 %v318, %v725
      %v727 = vand.u32 %v726, 4294901760
      %v728 = vsub.f32 %v726, %v727
      %v729 = vand.u32 %v728, 4294901760
      %730 = vmatpush.msra.mxu0 %v729
      %v731 = vand.u32 %v317, 4294901760
      %v732 = vsub.f32 %v317, %v731
      %v733 = vand.u32 %v732, 4294901760
      %v734 = vsub.f32 %v732, %v733
      %v735 = vand.u32 %v734, 4294901760
      %736 = vmatpush.msra.mxu0 %v735
      %v737 = vand.u32 %v316, 4294901760
      %v738 = vsub.f32 %v316, %v737
      %v739 = vand.u32 %v738, 4294901760
      %v740 = vsub.f32 %v738, %v739
      %v741 = vand.u32 %v740, 4294901760
      %742 = vmatpush.msra.mxu0 %v741
      %v743 = vand.u32 %v315, 4294901760
      %v744 = vsub.f32 %v315, %v743
      %v745 = vand.u32 %v744, 4294901760
      %v746 = vsub.f32 %v744, %v745
      %v747 = vand.u32 %v746, 4294901760
      %748 = vmatpush.msra.mxu0 %v747
      %v749 = vand.u32 %v314, 4294901760
      %v750 = vsub.f32 %v314, %v749
      %v751 = vand.u32 %v750, 4294901760
      %v752 = vsub.f32 %v750, %v751
      %v753 = vand.u32 %v752, 4294901760
      %754 = vmatpush.msra.mxu0 %v753
      %v755 = vand.u32 %v313, 4294901760
      %v756 = vsub.f32 %v313, %v755
      %v757 = vand.u32 %v756, 4294901760
      %v758 = vsub.f32 %v756, %v757
      %v759 = vand.u32 %v758, 4294901760
      %760 = vmatpush.msra.mxu0 %v759
      %v761 = vand.u32 %v312, 4294901760
      %v762 = vsub.f32 %v312, %v761
      %v763 = vand.u32 %v762, 4294901760
      %v764 = vsub.f32 %v762, %v763
      %v765 = vand.u32 %v764, 4294901760
      %766 = vmatpush.msra.mxu0 %v765
      %v767 = vand.u32 %v311, 4294901760
      %v768 = vsub.f32 %v311, %v767
      %v769 = vand.u32 %v768, 4294901760
      %v770 = vsub.f32 %v768, %v769
      %v771 = vand.u32 %v770, 4294901760
      %772 = vmatpush.msra.mxu0 %v771
      %v773 = vand.u32 %v327, 4294901760
      %774 = vmatmul.f32.gmra.mxu0 %v773
      %v775 = vpop.f32.mrf.mxu0
      %v776 = vadd.f32 %v459, %v775
      %v777 = vand.u32 %v330, 4294901760
      %778 = vmatmul.f32.gmra.mxu0 %v777
      %v779 = vpop.f32.mrf.mxu0
      %v780 = vadd.f32 %v467, %v779
      %v781 = vand.u32 %v333, 4294901760
      %782 = vmatmul.f32.gmra.mxu0 %v781
      %v783 = vpop.f32.mrf.mxu0
      %v784 = vadd.f32 %v475, %v783
      %v785 = vand.u32 %v336, 4294901760
      %786 = vmatmul.f32.gmra.mxu0 %v785
      %v787 = vpop.f32.mrf.mxu0
      %v788 = vadd.f32 %v483, %v787
      %v789 = vand.u32 %v339, 4294901760
      %790 = vmatmul.f32.gmra.mxu0 %v789
      %v791 = vpop.f32.mrf.mxu0
      %v792 = vadd.f32 %v491, %v791
      %v793 = vand.u32 %v342, 4294901760
      %794 = vmatmul.f32.gmra.mxu0 %v793
      %v795 = vpop.f32.mrf.mxu0
      %v796 = vadd.f32 %v499, %v795
      %v797 = vand.u32 %v345, 4294901760
      %798 = vmatmul.f32.gmra.mxu0 %v797
      %v799 = vpop.f32.mrf.mxu0
      %v800 = vadd.f32 %v507, %v799
      %v801 = vand.u32 %v348, 4294901760
      %802 = vmatmul.f32.gmra.mxu0 %v801
      %v803 = vpop.f32.mrf.mxu0
      %v804 = vadd.f32 %v515, %v803
      %v805 = vand.u32 %v351, 4294901760
      %806 = vmatmul.f32.gmra.mxu0 %v805
      %v807 = vpop.f32.mrf.mxu0
      %v808 = vadd.f32 %v523, %v807
      %v809 = vand.u32 %v354, 4294901760
      %810 = vmatmul.f32.gmra.mxu0 %v809
      %v811 = vpop.f32.mrf.mxu0
      %v812 = vadd.f32 %v531, %v811
      %v813 = vand.u32 %v357, 4294901760
      %814 = vmatmul.f32.gmra.mxu0 %v813
      %v815 = vpop.f32.mrf.mxu0
      %v816 = vadd.f32 %v539, %v815
      %v817 = vand.u32 %v360, 4294901760
      %818 = vmatmul.f32.gmra.mxu0 %v817
      %v819 = vpop.f32.mrf.mxu0
      %v820 = vadd.f32 %v547, %v819
      %v821 = vand.u32 %v363, 4294901760
      %822 = vmatmul.f32.gmra.mxu0 %v821
      %v823 = vpop.f32.mrf.mxu0
      %v824 = vadd.f32 %v555, %v823
      %v825 = vand.u32 %v366, 4294901760
      %826 = vmatmul.f32.gmra.mxu0 %v825
      %v827 = vpop.f32.mrf.mxu0
      %v828 = vadd.f32 %v563, %v827
      %v829 = vand.u32 %v369, 4294901760
      %830 = vmatmul.f32.gmra.mxu0 %v829
      %v831 = vpop.f32.mrf.mxu0
      %v832 = vadd.f32 %v571, %v831
      %v833 = vand.u32 %v372, 4294901760
      %834 = vmatmul.f32.gmra.mxu0 %v833
      %v835 = vpop.f32.mrf.mxu0
      %v836 = vadd.f32 %v579, %v835
      %v837 = vand.u32 %v375, 4294901760
      %838 = vmatmul.f32.gmra.mxu0 %v837
      %v839 = vpop.f32.mrf.mxu0
      %v840 = vadd.f32 %v587, %v839
      %v841 = vand.u32 %v378, 4294901760
      %842 = vmatmul.f32.gmra.mxu0 %v841
      %v843 = vpop.f32.mrf.mxu0
      %v844 = vadd.f32 %v595, %v843
      %v845 = vand.u32 %v381, 4294901760
      %846 = vmatmul.f32.gmra.mxu0 %v845
      %v847 = vpop.f32.mrf.mxu0
      %v848 = vadd.f32 %v603, %v847
      %v849 = vand.u32 %v384, 4294901760
      %850 = vmatmul.f32.gmra.mxu0 %v849
      %v851 = vpop.f32.mrf.mxu0
      %v852 = vadd.f32 %v611, %v851
      %v853 = vand.u32 %v387, 4294901760
      %854 = vmatmul.f32.gmra.mxu0 %v853
      %v855 = vpop.f32.mrf.mxu0
      %v856 = vadd.f32 %v619, %v855
      %v857 = vand.u32 %v390, 4294901760
      %858 = vmatmul.f32.gmra.mxu0 %v857
      %v859 = vpop.f32.mrf.mxu0
      %v860 = vadd.f32 %v627, %v859
      %v861 = vand.u32 %v393, 4294901760
      %862 = vmatmul.f32.gmra.mxu0 %v861
      %v863 = vpop.f32.mrf.mxu0
      %v864 = vadd.f32 %v635, %v863
      %v865 = vand.u32 %v396, 4294901760
      %866 = vmatmul.f32.gmra.mxu0 %v865
      %v867 = vpop.f32.mrf.mxu0
      %v868 = vand.u32 %v399, 4294901760
      %869 = vmatmul.f32.gmra.mxu0 %v868
      %v870 = vpop.f32.mrf.mxu0
      %v871 = vadd.f32 %v650, %v870
      %v872 = vand.u32 %v402, 4294901760
      %873 = vmatmul.f32.gmra.mxu0 %v872
      %v874 = vpop.f32.mrf.mxu0
      %v875 = vadd.f32 %v658, %v874
      %v876 = vand.u32 %v405, 4294901760
      %877 = vmatmul.f32.gmra.mxu0 %v876
      %v878 = vpop.f32.mrf.mxu0
      %v879 = vadd.f32 %v666, %v878
      %v880 = vand.u32 %v408, 4294901760
      %881 = vmatmul.f32.gmra.mxu0 %v880
      %v882 = vpop.f32.mrf.mxu0
      %v883 = vadd.f32 %v674, %v882
      %v884 = vand.u32 %v411, 4294901760
      %885 = vmatmul.f32.gmra.mxu0 %v884
      %v886 = vpop.f32.mrf.mxu0
      %v887 = vadd.f32 %v682, %v886
      %v888 = vand.u32 %v414, 4294901760
      %889 = vmatmul.f32.gmra.mxu0 %v888
      %v890 = vpop.f32.mrf.mxu0
      %v891 = vadd.f32 %v690, %v890
      %v892 = vand.u32 %v417, 4294901760
      %893 = vmatmul.f32.gmra.mxu0 %v892
      %v894 = vpop.f32.mrf.mxu0
      %v895 = vadd.f32 %v698, %v894
      %v896 = vand.u32 %v420, 4294901760
      %897 = vmatmul.f32.gmra.mxu0 %v896
      %v898 = vpop.f32.mrf.mxu0
      %899 = vdwg.mxu0
      %900 = vmatpush.msra.mxu0 0.0
      %901 = vmatpush.msra.mxu0 0.0
      %902 = vmatpush.msra.mxu0 0.0
      %903 = vmatpush.msra.mxu0 0.0
      %904 = vmatpush.msra.mxu0 0.0
      %905 = vmatpush.msra.mxu0 0.0
      %v906 = vand.u32 %v424, 4294901760
      %v907 = vsub.f32 %v424, %v906
      %908 = vmatpush.msra.mxu0 %v907
      %v909 = vand.u32 %v319, 4294901760
      %v910 = vsub.f32 %v319, %v909
      %911 = vmatpush.msra.mxu0 %v910
      %v912 = vand.u32 %v318, 4294901760
      %v913 = vsub.f32 %v318, %v912
      %914 = vmatpush.msra.mxu0 %v913
      %v915 = vand.u32 %v317, 4294901760
      %v916 = vsub.f32 %v317, %v915
      %917 = vmatpush.msra.mxu0 %v916
      %v918 = vand.u32 %v316, 4294901760
      %v919 = vsub.f32 %v316, %v918
      %920 = vmatpush.msra.mxu0 %v919
      %v921 = vand.u32 %v315, 4294901760
      %v922 = vsub.f32 %v315, %v921
      %923 = vmatpush.msra.mxu0 %v922
      %v924 = vand.u32 %v314, 4294901760
      %v925 = vsub.f32 %v314, %v924
      %926 = vmatpush.msra.mxu0 %v925
      %v927 = vand.u32 %v313, 4294901760
      %v928 = vsub.f32 %v313, %v927
      %929 = vmatpush.msra.mxu0 %v928
      %v930 = vand.u32 %v312, 4294901760
      %v931 = vsub.f32 %v312, %v930
      %932 = vmatpush.msra.mxu0 %v931
      %v933 = vand.u32 %v311, 4294901760
      %v934 = vsub.f32 %v311, %v933
      %935 = vmatpush.msra.mxu0 %v934
      %v936 = vand.u32 %v327, 4294901760
      %v937 = vsub.f32 %v327, %v936
      %938 = vmatmul.f32.gmra.mxu0 %v937
      %v939 = vpop.f32.mrf.mxu0
      %v940 = vadd.f32 %v776, %v939
      %v941 = vand.u32 %v330, 4294901760
      %v942 = vsub.f32 %v330, %v941
      %943 = vmatmul.f32.gmra.mxu0 %v942
      %v944 = vpop.f32.mrf.mxu0
      %v945 = vadd.f32 %v780, %v944
      %v946 = vand.u32 %v333, 4294901760
      %v947 = vsub.f32 %v333, %v946
      %948 = vmatmul.f32.gmra.mxu0 %v947
      %v949 = vpop.f32.mrf.mxu0
      %v950 = vadd.f32 %v784, %v949
      %v951 = vand.u32 %v336, 4294901760
      %v952 = vsub.f32 %v336, %v951
      %953 = vmatmul.f32.gmra.mxu0 %v952
      %v954 = vpop.f32.mrf.mxu0
      %v955 = vadd.f32 %v788, %v954
      %v956 = vand.u32 %v339, 4294901760
      %v957 = vsub.f32 %v339, %v956
      %958 = vmatmul.f32.gmra.mxu0 %v957
      %v959 = vpop.f32.mrf.mxu0
      %v960 = vadd.f32 %v792, %v959
      %v961 = vand.u32 %v342, 4294901760
      %v962 = vsub.f32 %v342, %v961
      %963 = vmatmul.f32.gmra.mxu0 %v962
      %v964 = vpop.f32.mrf.mxu0
      %v965 = vadd.f32 %v796, %v964
      %v966 = vand.u32 %v345, 4294901760
      %v967 = vsub.f32 %v345, %v966
      %968 = vmatmul.f32.gmra.mxu0 %v967
      %v969 = vpop.f32.mrf.mxu0
      %v970 = vadd.f32 %v800, %v969
      %v971 = vand.u32 %v348, 4294901760
      %v972 = vsub.f32 %v348, %v971
      %973 = vmatmul.f32.gmra.mxu0 %v972
      %v974 = vpop.f32.mrf.mxu0
      %v975 = vadd.f32 %v804, %v974
      %v976 = vand.u32 %v351, 4294901760
      %v977 = vsub.f32 %v351, %v976
      %978 = vmatmul.f32.gmra.mxu0 %v977
      %v979 = vpop.f32.mrf.mxu0
      %v980 = vadd.f32 %v808, %v979
      %v981 = vand.u32 %v354, 4294901760
      %v982 = vsub.f32 %v354, %v981
      %983 = vmatmul.f32.gmra.mxu0 %v982
      %v984 = vpop.f32.mrf.mxu0
      %v985 = vadd.f32 %v812, %v984
      %v986 = vand.u32 %v357, 4294901760
      %v987 = vsub.f32 %v357, %v986
      %988 = vmatmul.f32.gmra.mxu0 %v987
      %v989 = vpop.f32.mrf.mxu0
      %v990 = vadd.f32 %v816, %v989
      %v991 = vand.u32 %v360, 4294901760
      %v992 = vsub.f32 %v360, %v991
      %993 = vmatmul.f32.gmra.mxu0 %v992
      %v994 = vpop.f32.mrf.mxu0
      %v995 = vadd.f32 %v820, %v994
      %v996 = vand.u32 %v363, 4294901760
      %v997 = vsub.f32 %v363, %v996
      %998 = vmatmul.f32.gmra.mxu0 %v997
      %v999 = vpop.f32.mrf.mxu0
      %v1000 = vadd.f32 %v824, %v999
      %v1001 = vand.u32 %v366, 4294901760
      %v1002 = vsub.f32 %v366, %v1001
      %1003 = vmatmul.f32.gmra.mxu0 %v1002
      %v1004 = vpop.f32.mrf.mxu0
      %v1005 = vadd.f32 %v828, %v1004
      %v1006 = vand.u32 %v369, 4294901760
      %v1007 = vsub.f32 %v369, %v1006
      %1008 = vmatmul.f32.gmra.mxu0 %v1007
      %v1009 = vpop.f32.mrf.mxu0
      %v1010 = vadd.f32 %v832, %v1009
      %v1011 = vand.u32 %v372, 4294901760
      %v1012 = vsub.f32 %v372, %v1011
      %1013 = vmatmul.f32.gmra.mxu0 %v1012
      %v1014 = vpop.f32.mrf.mxu0
      %v1015 = vadd.f32 %v836, %v1014
      %v1016 = vand.u32 %v375, 4294901760
      %v1017 = vsub.f32 %v375, %v1016
      %1018 = vmatmul.f32.gmra.mxu0 %v1017
      %v1019 = vpop.f32.mrf.mxu0
      %v1020 = vadd.f32 %v840, %v1019
      %v1021 = vand.u32 %v378, 4294901760
      %v1022 = vsub.f32 %v378, %v1021
      %1023 = vmatmul.f32.gmra.mxu0 %v1022
      %v1024 = vpop.f32.mrf.mxu0
      %v1025 = vadd.f32 %v844, %v1024
      %v1026 = vand.u32 %v381, 4294901760
      %v1027 = vsub.f32 %v381, %v1026
      %1028 = vmatmul.f32.gmra.mxu0 %v1027
      %v1029 = vpop.f32.mrf.mxu0
      %v1030 = vadd.f32 %v848, %v1029
      %v1031 = vand.u32 %v384, 4294901760
      %v1032 = vsub.f32 %v384, %v1031
      %1033 = vmatmul.f32.gmra.mxu0 %v1032
      %v1034 = vpop.f32.mrf.mxu0
      %v1035 = vadd.f32 %v852, %v1034
      %v1036 = vand.u32 %v387, 4294901760
      %v1037 = vsub.f32 %v387, %v1036
      %1038 = vmatmul.f32.gmra.mxu0 %v1037
      %v1039 = vpop.f32.mrf.mxu0
      %v1040 = vadd.f32 %v856, %v1039
      %v1041 = vand.u32 %v390, 4294901760
      %v1042 = vsub.f32 %v390, %v1041
      %1043 = vmatmul.f32.gmra.mxu0 %v1042
      %v1044 = vpop.f32.mrf.mxu0
      %v1045 = vadd.f32 %v860, %v1044
      %v1046 = vand.u32 %v393, 4294901760
      %v1047 = vsub.f32 %v393, %v1046
      %1048 = vmatmul.f32.gmra.mxu0 %v1047
      %v1049 = vpop.f32.mrf.mxu0
      %v1050 = vadd.f32 %v864, %v1049
      %v1051 = vand.u32 %v396, 4294901760
      %v1052 = vsub.f32 %v396, %v1051
      %1053 = vmatmul.f32.gmra.mxu0 %v1052
      %v1054 = vpop.f32.mrf.mxu0
      %v1055 = vand.u32 %v399, 4294901760
      %v1056 = vsub.f32 %v399, %v1055
      %1057 = vmatmul.f32.gmra.mxu0 %v1056
      %v1058 = vpop.f32.mrf.mxu0
      %v1059 = vadd.f32 %v871, %v1058
      %v1060 = vand.u32 %v402, 4294901760
      %v1061 = vsub.f32 %v402, %v1060
      %1062 = vmatmul.f32.gmra.mxu0 %v1061
      %v1063 = vpop.f32.mrf.mxu0
      %v1064 = vadd.f32 %v875, %v1063
      %v1065 = vand.u32 %v405, 4294901760
      %v1066 = vsub.f32 %v405, %v1065
      %1067 = vmatmul.f32.gmra.mxu0 %v1066
      %v1068 = vpop.f32.mrf.mxu0
      %v1069 = vadd.f32 %v879, %v1068
      %v1070 = vand.u32 %v408, 4294901760
      %v1071 = vsub.f32 %v408, %v1070
      %1072 = vmatmul.f32.gmra.mxu0 %v1071
      %v1073 = vpop.f32.mrf.mxu0
      %v1074 = vadd.f32 %v883, %v1073
      %v1075 = vand.u32 %v411, 4294901760
      %v1076 = vsub.f32 %v411, %v1075
      %1077 = vmatmul.f32.gmra.mxu0 %v1076
      %v1078 = vpop.f32.mrf.mxu0
      %v1079 = vadd.f32 %v887, %v1078
      %v1080 = vand.u32 %v414, 4294901760
      %v1081 = vsub.f32 %v414, %v1080
      %1082 = vmatmul.f32.gmra.mxu0 %v1081
      %v1083 = vpop.f32.mrf.mxu0
      %v1084 = vadd.f32 %v891, %v1083
      %v1085 = vand.u32 %v417, 4294901760
      %v1086 = vsub.f32 %v417, %v1085
      %1087 = vmatmul.f32.gmra.mxu0 %v1086
      %v1088 = vpop.f32.mrf.mxu0
      %v1089 = vadd.f32 %v895, %v1088
      %v1090 = vand.u32 %v420, 4294901760
      %v1091 = vsub.f32 %v420, %v1090
      %1092 = vmatmul.f32.gmra.mxu0 %v1091
      %v1093 = vpop.f32.mrf.mxu0
      %1094 = vdwg.mxu0
      %1095 = vmatpush.msra.mxu0 0.0
      %1096 = vmatpush.msra.mxu0 0.0
      %1097 = vmatpush.msra.mxu0 0.0
      %1098 = vmatpush.msra.mxu0 0.0
      %1099 = vmatpush.msra.mxu0 0.0
      %1100 = vmatpush.msra.mxu0 0.0
      %v1101 = vand.u32 %v424, 4294901760
      %1102 = vmatpush.msra.mxu0 %v1101
      %v1103 = vand.u32 %v319, 4294901760
      %1104 = vmatpush.msra.mxu0 %v1103
      %v1105 = vand.u32 %v318, 4294901760
      %1106 = vmatpush.msra.mxu0 %v1105
      %v1107 = vand.u32 %v317, 4294901760
      %1108 = vmatpush.msra.mxu0 %v1107
      %v1109 = vand.u32 %v316, 4294901760
      %1110 = vmatpush.msra.mxu0 %v1109
      %v1111 = vand.u32 %v315, 4294901760
      %1112 = vmatpush.msra.mxu0 %v1111
      %v1113 = vand.u32 %v314, 4294901760
      %1114 = vmatpush.msra.mxu0 %v1113
      %v1115 = vand.u32 %v313, 4294901760
      %1116 = vmatpush.msra.mxu0 %v1115
      %v1117 = vand.u32 %v312, 4294901760
      %1118 = vmatpush.msra.mxu0 %v1117
      %v1119 = vand.u32 %v311, 4294901760
      %1120 = vmatpush.msra.mxu0 %v1119
      %v1121 = vand.u32 %v327, 4294901760
      %v1122 = vsub.f32 %v327, %v1121
      %v1123 = vand.u32 %v1122, 4294901760
      %1124 = vmatmul.f32.gmra.mxu0 %v1123
      %v1125 = vpop.f32.mrf.mxu0
      %v1126 = vadd.f32 %v940, %v1125
      %v1127 = vand.u32 %v330, 4294901760
      %v1128 = vsub.f32 %v330, %v1127
      %v1129 = vand.u32 %v1128, 4294901760
      %1130 = vmatmul.f32.gmra.mxu0 %v1129
      %v1131 = vpop.f32.mrf.mxu0
      %v1132 = vadd.f32 %v945, %v1131
      %v1133 = vand.u32 %v333, 4294901760
      %v1134 = vsub.f32 %v333, %v1133
      %v1135 = vand.u32 %v1134, 4294901760
      %1136 = vmatmul.f32.gmra.mxu0 %v1135
      %v1137 = vpop.f32.mrf.mxu0
      %v1138 = vadd.f32 %v950, %v1137
      %v1139 = vand.u32 %v336, 4294901760
      %v1140 = vsub.f32 %v336, %v1139
      %v1141 = vand.u32 %v1140, 4294901760
      %1142 = vmatmul.f32.gmra.mxu0 %v1141
      %v1143 = vpop.f32.mrf.mxu0
      %v1144 = vadd.f32 %v955, %v1143
      %v1145 = vand.u32 %v339, 4294901760
      %v1146 = vsub.f32 %v339, %v1145
      %v1147 = vand.u32 %v1146, 4294901760
      %1148 = vmatmul.f32.gmra.mxu0 %v1147
      %v1149 = vpop.f32.mrf.mxu0
      %v1150 = vadd.f32 %v960, %v1149
      %v1151 = vand.u32 %v342, 4294901760
      %v1152 = vsub.f32 %v342, %v1151
      %v1153 = vand.u32 %v1152, 4294901760
      %1154 = vmatmul.f32.gmra.mxu0 %v1153
      %v1155 = vpop.f32.mrf.mxu0
      %v1156 = vadd.f32 %v965, %v1155
      %v1157 = vand.u32 %v345, 4294901760
      %v1158 = vsub.f32 %v345, %v1157
      %v1159 = vand.u32 %v1158, 4294901760
      %1160 = vmatmul.f32.gmra.mxu0 %v1159
      %v1161 = vpop.f32.mrf.mxu0
      %v1162 = vadd.f32 %v970, %v1161
      %v1163 = vand.u32 %v348, 4294901760
      %v1164 = vsub.f32 %v348, %v1163
      %v1165 = vand.u32 %v1164, 4294901760
      %1166 = vmatmul.f32.gmra.mxu0 %v1165
      %v1167 = vpop.f32.mrf.mxu0
      %v1168 = vadd.f32 %v975, %v1167
      %v1169 = vand.u32 %v351, 4294901760
      %v1170 = vsub.f32 %v351, %v1169
      %v1171 = vand.u32 %v1170, 4294901760
      %1172 = vmatmul.f32.gmra.mxu0 %v1171
      %v1173 = vpop.f32.mrf.mxu0
      %v1174 = vadd.f32 %v980, %v1173
      %v1175 = vand.u32 %v354, 4294901760
      %v1176 = vsub.f32 %v354, %v1175
      %v1177 = vand.u32 %v1176, 4294901760
      %1178 = vmatmul.f32.gmra.mxu0 %v1177
      %v1179 = vpop.f32.mrf.mxu0
      %v1180 = vadd.f32 %v985, %v1179
      %v1181 = vand.u32 %v357, 4294901760
      %v1182 = vsub.f32 %v357, %v1181
      %v1183 = vand.u32 %v1182, 4294901760
      %1184 = vmatmul.f32.gmra.mxu0 %v1183
      %v1185 = vpop.f32.mrf.mxu0
      %v1186 = vadd.f32 %v990, %v1185
      %v1187 = vand.u32 %v360, 4294901760
      %v1188 = vsub.f32 %v360, %v1187
      %v1189 = vand.u32 %v1188, 4294901760
      %1190 = vmatmul.f32.gmra.mxu0 %v1189
      %v1191 = vpop.f32.mrf.mxu0
      %v1192 = vadd.f32 %v995, %v1191
      %v1193 = vand.u32 %v363, 4294901760
      %v1194 = vsub.f32 %v363, %v1193
      %v1195 = vand.u32 %v1194, 4294901760
      %1196 = vmatmul.f32.gmra.mxu0 %v1195
      %v1197 = vpop.f32.mrf.mxu0
      %v1198 = vadd.f32 %v1000, %v1197
      %v1199 = vand.u32 %v366, 4294901760
      %v1200 = vsub.f32 %v366, %v1199
      %v1201 = vand.u32 %v1200, 4294901760
      %1202 = vmatmul.f32.gmra.mxu0 %v1201
      %v1203 = vpop.f32.mrf.mxu0
      %v1204 = vadd.f32 %v1005, %v1203
      %v1205 = vand.u32 %v369, 4294901760
      %v1206 = vsub.f32 %v369, %v1205
      %v1207 = vand.u32 %v1206, 4294901760
      %1208 = vmatmul.f32.gmra.mxu0 %v1207
      %v1209 = vpop.f32.mrf.mxu0
      %v1210 = vadd.f32 %v1010, %v1209
      %v1211 = vand.u32 %v372, 4294901760
      %v1212 = vsub.f32 %v372, %v1211
      %v1213 = vand.u32 %v1212, 4294901760
      %1214 = vmatmul.f32.gmra.mxu0 %v1213
      %v1215 = vpop.f32.mrf.mxu0
      %v1216 = vadd.f32 %v1015, %v1215
      %v1217 = vand.u32 %v375, 4294901760
      %v1218 = vsub.f32 %v375, %v1217
      %v1219 = vand.u32 %v1218, 4294901760
      %1220 = vmatmul.f32.gmra.mxu0 %v1219
      %v1221 = vpop.f32.mrf.mxu0
      %v1222 = vadd.f32 %v1020, %v1221
      %v1223 = vand.u32 %v378, 4294901760
      %v1224 = vsub.f32 %v378, %v1223
      %v1225 = vand.u32 %v1224, 4294901760
      %1226 = vmatmul.f32.gmra.mxu0 %v1225
      %v1227 = vpop.f32.mrf.mxu0
      %v1228 = vadd.f32 %v1025, %v1227
      %v1229 = vand.u32 %v381, 4294901760
      %v1230 = vsub.f32 %v381, %v1229
      %v1231 = vand.u32 %v1230, 4294901760
      %1232 = vmatmul.f32.gmra.mxu0 %v1231
      %v1233 = vpop.f32.mrf.mxu0
      %v1234 = vadd.f32 %v1030, %v1233
      %v1235 = vand.u32 %v384, 4294901760
      %v1236 = vsub.f32 %v384, %v1235
      %v1237 = vand.u32 %v1236, 4294901760
      %1238 = vmatmul.f32.gmra.mxu0 %v1237
      %v1239 = vpop.f32.mrf.mxu0
      %v1240 = vadd.f32 %v1035, %v1239
      %v1241 = vand.u32 %v387, 4294901760
      %v1242 = vsub.f32 %v387, %v1241
      %v1243 = vand.u32 %v1242, 4294901760
      %1244 = vmatmul.f32.gmra.mxu0 %v1243
      %v1245 = vpop.f32.mrf.mxu0
      %v1246 = vadd.f32 %v1040, %v1245
      %v1247 = vand.u32 %v390, 4294901760
      %v1248 = vsub.f32 %v390, %v1247
      %v1249 = vand.u32 %v1248, 4294901760
      %1250 = vmatmul.f32.gmra.mxu0 %v1249
      %v1251 = vpop.f32.mrf.mxu0
      %v1252 = vadd.f32 %v1045, %v1251
      %v1253 = vand.u32 %v393, 4294901760
      %v1254 = vsub.f32 %v393, %v1253
      %v1255 = vand.u32 %v1254, 4294901760
      %1256 = vmatmul.f32.gmra.mxu0 %v1255
      %v1257 = vpop.f32.mrf.mxu0
      %v1258 = vadd.f32 %v1050, %v1257
      %v1259 = vand.u32 %v396, 4294901760
      %v1260 = vsub.f32 %v396, %v1259
      %v1261 = vand.u32 %v1260, 4294901760
      %1262 = vmatmul.f32.gmra.mxu0 %v1261
      %v1263 = vpop.f32.mrf.mxu0
      %v1264 = vand.u32 %v399, 4294901760
      %v1265 = vsub.f32 %v399, %v1264
      %v1266 = vand.u32 %v1265, 4294901760
      %1267 = vmatmul.f32.gmra.mxu0 %v1266
      %v1268 = vpop.f32.mrf.mxu0
      %v1269 = vadd.f32 %v1059, %v1268
      %v1270 = vand.u32 %v402, 4294901760
      %v1271 = vsub.f32 %v402, %v1270
      %v1272 = vand.u32 %v1271, 4294901760
      %1273 = vmatmul.f32.gmra.mxu0 %v1272
      %v1274 = vpop.f32.mrf.mxu0
      %v1275 = vadd.f32 %v1064, %v1274
      %v1276 = vand.u32 %v405, 4294901760
      %v1277 = vsub.f32 %v405, %v1276
      %v1278 = vand.u32 %v1277, 4294901760
      %1279 = vmatmul.f32.gmra.mxu0 %v1278
      %v1280 = vpop.f32.mrf.mxu0
      %v1281 = vadd.f32 %v1069, %v1280
      %v1282 = vand.u32 %v408, 4294901760
      %v1283 = vsub.f32 %v408, %v1282
      %v1284 = vand.u32 %v1283, 4294901760
      %1285 = vmatmul.f32.gmra.mxu0 %v1284
      %v1286 = vpop.f32.mrf.mxu0
      %v1287 = vadd.f32 %v1074, %v1286
      %v1288 = vand.u32 %v411, 4294901760
      %v1289 = vsub.f32 %v411, %v1288
      %v1290 = vand.u32 %v1289, 4294901760
      %1291 = vmatmul.f32.gmra.mxu0 %v1290
      %v1292 = vpop.f32.mrf.mxu0
      %v1293 = vadd.f32 %v1079, %v1292
      %v1294 = vand.u32 %v414, 4294901760
      %v1295 = vsub.f32 %v414, %v1294
      %v1296 = vand.u32 %v1295, 4294901760
      %1297 = vmatmul.f32.gmra.mxu0 %v1296
      %v1298 = vpop.f32.mrf.mxu0
      %v1299 = vadd.f32 %v1084, %v1298
      %v1300 = vand.u32 %v417, 4294901760
      %v1301 = vsub.f32 %v417, %v1300
      %v1302 = vand.u32 %v1301, 4294901760
      %1303 = vmatmul.f32.gmra.mxu0 %v1302
      %v1304 = vpop.f32.mrf.mxu0
      %v1305 = vadd.f32 %v1089, %v1304
      %v1306 = vand.u32 %v420, 4294901760
      %v1307 = vsub.f32 %v420, %v1306
      %v1308 = vand.u32 %v1307, 4294901760
      %1309 = vmatmul.f32.gmra.mxu0 %v1308
      %v1310 = vpop.f32.mrf.mxu0
      %1311 = vdwg.mxu0
      %1312 = vmatpush.msra.mxu0 0.0
      %1313 = vmatpush.msra.mxu0 0.0
      %1314 = vmatpush.msra.mxu0 0.0
      %1315 = vmatpush.msra.mxu0 0.0
      %1316 = vmatpush.msra.mxu0 0.0
      %1317 = vmatpush.msra.mxu0 0.0
      %v1318 = vand.u32 %v424, 4294901760
      %v1319 = vsub.f32 %v424, %v1318
      %v1320 = vand.u32 %v1319, 4294901760
      %1321 = vmatpush.msra.mxu0 %v1320
      %v1322 = vand.u32 %v319, 4294901760
      %v1323 = vsub.f32 %v319, %v1322
      %v1324 = vand.u32 %v1323, 4294901760
      %1325 = vmatpush.msra.mxu0 %v1324
      %v1326 = vand.u32 %v318, 4294901760
      %v1327 = vsub.f32 %v318, %v1326
      %v1328 = vand.u32 %v1327, 4294901760
      %1329 = vmatpush.msra.mxu0 %v1328
      %v1330 = vand.u32 %v317, 4294901760
      %v1331 = vsub.f32 %v317, %v1330
      %v1332 = vand.u32 %v1331, 4294901760
      %1333 = vmatpush.msra.mxu0 %v1332
      %v1334 = vand.u32 %v316, 4294901760
      %v1335 = vsub.f32 %v316, %v1334
      %v1336 = vand.u32 %v1335, 4294901760
      %1337 = vmatpush.msra.mxu0 %v1336
      %v1338 = vand.u32 %v315, 4294901760
      %v1339 = vsub.f32 %v315, %v1338
      %v1340 = vand.u32 %v1339, 4294901760
      %1341 = vmatpush.msra.mxu0 %v1340
      %v1342 = vand.u32 %v314, 4294901760
      %v1343 = vsub.f32 %v314, %v1342
      %v1344 = vand.u32 %v1343, 4294901760
      %1345 = vmatpush.msra.mxu0 %v1344
      %v1346 = vand.u32 %v313, 4294901760
      %v1347 = vsub.f32 %v313, %v1346
      %v1348 = vand.u32 %v1347, 4294901760
      %1349 = vmatpush.msra.mxu0 %v1348
      %v1350 = vand.u32 %v312, 4294901760
      %v1351 = vsub.f32 %v312, %v1350
      %v1352 = vand.u32 %v1351, 4294901760
      %1353 = vmatpush.msra.mxu0 %v1352
      %v1354 = vand.u32 %v311, 4294901760
      %v1355 = vsub.f32 %v311, %v1354
      %v1356 = vand.u32 %v1355, 4294901760
      %1357 = vmatpush.msra.mxu0 %v1356
      %v1358 = vand.u32 %v327, 4294901760
      %1359 = vmatmul.f32.gmra.mxu0 %v1358
      %v1360 = vpop.f32.mrf.mxu0
      %v1361 = vadd.f32 %v1126, %v1360
      %v1362 = vand.u32 %v330, 4294901760
      %1363 = vmatmul.f32.gmra.mxu0 %v1362
      %v1364 = vpop.f32.mrf.mxu0
      %v1365 = vadd.f32 %v1132, %v1364
      %v1366 = vand.u32 %v333, 4294901760
      %1367 = vmatmul.f32.gmra.mxu0 %v1366
      %v1368 = vpop.f32.mrf.mxu0
      %v1369 = vadd.f32 %v1138, %v1368
      %v1370 = vand.u32 %v336, 4294901760
      %1371 = vmatmul.f32.gmra.mxu0 %v1370
      %v1372 = vpop.f32.mrf.mxu0
      %v1373 = vadd.f32 %v1144, %v1372
      %v1374 = vand.u32 %v339, 4294901760
      %1375 = vmatmul.f32.gmra.mxu0 %v1374
      %v1376 = vpop.f32.mrf.mxu0
      %v1377 = vadd.f32 %v1150, %v1376
      %v1378 = vand.u32 %v342, 4294901760
      %1379 = vmatmul.f32.gmra.mxu0 %v1378
      %v1380 = vpop.f32.mrf.mxu0
      %v1381 = vadd.f32 %v1156, %v1380
      %v1382 = vand.u32 %v345, 4294901760
      %1383 = vmatmul.f32.gmra.mxu0 %v1382
      %v1384 = vpop.f32.mrf.mxu0
      %v1385 = vadd.f32 %v1162, %v1384
      %v1386 = vand.u32 %v348, 4294901760
      %1387 = vmatmul.f32.gmra.mxu0 %v1386
      %v1388 = vpop.f32.mrf.mxu0
      %v1389 = vadd.f32 %v1168, %v1388
      %v1390 = vand.u32 %v351, 4294901760
      %1391 = vmatmul.f32.gmra.mxu0 %v1390
      %v1392 = vpop.f32.mrf.mxu0
      %v1393 = vadd.f32 %v1174, %v1392
      %v1394 = vand.u32 %v354, 4294901760
      %1395 = vmatmul.f32.gmra.mxu0 %v1394
      %v1396 = vpop.f32.mrf.mxu0
      %v1397 = vadd.f32 %v1180, %v1396
      %v1398 = vand.u32 %v357, 4294901760
      %1399 = vmatmul.f32.gmra.mxu0 %v1398
      %v1400 = vpop.f32.mrf.mxu0
      %v1401 = vadd.f32 %v1186, %v1400
      %v1402 = vand.u32 %v360, 4294901760
      %1403 = vmatmul.f32.gmra.mxu0 %v1402
      %v1404 = vpop.f32.mrf.mxu0
      %v1405 = vadd.f32 %v1192, %v1404
      %v1406 = vand.u32 %v363, 4294901760
      %1407 = vmatmul.f32.gmra.mxu0 %v1406
      %v1408 = vpop.f32.mrf.mxu0
      %v1409 = vadd.f32 %v1198, %v1408
      %v1410 = vand.u32 %v366, 4294901760
      %1411 = vmatmul.f32.gmra.mxu0 %v1410
      %v1412 = vpop.f32.mrf.mxu0
      %v1413 = vadd.f32 %v1204, %v1412
      %v1414 = vand.u32 %v369, 4294901760
      %1415 = vmatmul.f32.gmra.mxu0 %v1414
      %v1416 = vpop.f32.mrf.mxu0
      %v1417 = vadd.f32 %v1210, %v1416
      %v1418 = vand.u32 %v372, 4294901760
      %1419 = vmatmul.f32.gmra.mxu0 %v1418
      %v1420 = vpop.f32.mrf.mxu0
      %v1421 = vadd.f32 %v1216, %v1420
      %v1422 = vand.u32 %v375, 4294901760
      %1423 = vmatmul.f32.gmra.mxu0 %v1422
      %v1424 = vpop.f32.mrf.mxu0
      %v1425 = vadd.f32 %v1222, %v1424
      %v1426 = vand.u32 %v378, 4294901760
      %1427 = vmatmul.f32.gmra.mxu0 %v1426
      %v1428 = vpop.f32.mrf.mxu0
      %v1429 = vadd.f32 %v1228, %v1428
      %v1430 = vand.u32 %v381, 4294901760
      %1431 = vmatmul.f32.gmra.mxu0 %v1430
      %v1432 = vpop.f32.mrf.mxu0
      %v1433 = vadd.f32 %v1234, %v1432
      %v1434 = vand.u32 %v384, 4294901760
      %1435 = vmatmul.f32.gmra.mxu0 %v1434
      %v1436 = vpop.f32.mrf.mxu0
      %v1437 = vadd.f32 %v1240, %v1436
      %v1438 = vand.u32 %v387, 4294901760
      %1439 = vmatmul.f32.gmra.mxu0 %v1438
      %v1440 = vpop.f32.mrf.mxu0
      %v1441 = vadd.f32 %v1246, %v1440
      %v1442 = vand.u32 %v390, 4294901760
      %1443 = vmatmul.f32.gmra.mxu0 %v1442
      %v1444 = vpop.f32.mrf.mxu0
      %v1445 = vadd.f32 %v1252, %v1444
      %v1446 = vand.u32 %v393, 4294901760
      %1447 = vmatmul.f32.gmra.mxu0 %v1446
      %v1448 = vpop.f32.mrf.mxu0
      %v1449 = vadd.f32 %v1258, %v1448
      %v1450 = vand.u32 %v396, 4294901760
      %1451 = vmatmul.f32.gmra.mxu0 %v1450
      %v1452 = vpop.f32.mrf.mxu0
      %v1453 = vand.u32 %v399, 4294901760
      %1454 = vmatmul.f32.gmra.mxu0 %v1453
      %v1455 = vpop.f32.mrf.mxu0
      %v1456 = vadd.f32 %v1269, %v1455
      %v1457 = vand.u32 %v402, 4294901760
      %1458 = vmatmul.f32.gmra.mxu0 %v1457
      %v1459 = vpop.f32.mrf.mxu0
      %v1460 = vadd.f32 %v1275, %v1459
      %v1461 = vand.u32 %v405, 4294901760
      %1462 = vmatmul.f32.gmra.mxu0 %v1461
      %v1463 = vpop.f32.mrf.mxu0
      %v1464 = vadd.f32 %v1281, %v1463
      %v1465 = vand.u32 %v408, 4294901760
      %1466 = vmatmul.f32.gmra.mxu0 %v1465
      %v1467 = vpop.f32.mrf.mxu0
      %v1468 = vadd.f32 %v1287, %v1467
      %v1469 = vand.u32 %v411, 4294901760
      %1470 = vmatmul.f32.gmra.mxu0 %v1469
      %v1471 = vpop.f32.mrf.mxu0
      %v1472 = vadd.f32 %v1293, %v1471
      %v1473 = vand.u32 %v414, 4294901760
      %1474 = vmatmul.f32.gmra.mxu0 %v1473
      %v1475 = vpop.f32.mrf.mxu0
      %v1476 = vadd.f32 %v1299, %v1475
      %v1477 = vand.u32 %v417, 4294901760
      %1478 = vmatmul.f32.gmra.mxu0 %v1477
      %v1479 = vpop.f32.mrf.mxu0
      %v1480 = vadd.f32 %v1305, %v1479
      %v1481 = vand.u32 %v420, 4294901760
      %1482 = vmatmul.f32.gmra.mxu0 %v1481
      %v1483 = vpop.f32.mrf.mxu0
      %1484 = vdwg.mxu0
      %1485 = vmatpush.msra.mxu0 0.0
      %1486 = vmatpush.msra.mxu0 0.0
      %1487 = vmatpush.msra.mxu0 0.0
      %1488 = vmatpush.msra.mxu0 0.0
      %1489 = vmatpush.msra.mxu0 0.0
      %1490 = vmatpush.msra.mxu0 0.0
      %v1491 = vand.u32 %v424, 4294901760
      %1492 = vmatpush.msra.mxu0 %v1491
      %v1493 = vand.u32 %v319, 4294901760
      %1494 = vmatpush.msra.mxu0 %v1493
      %v1495 = vand.u32 %v318, 4294901760
      %1496 = vmatpush.msra.mxu0 %v1495
      %v1497 = vand.u32 %v317, 4294901760
      %1498 = vmatpush.msra.mxu0 %v1497
      %v1499 = vand.u32 %v316, 4294901760
      %1500 = vmatpush.msra.mxu0 %v1499
      %v1501 = vand.u32 %v315, 4294901760
      %1502 = vmatpush.msra.mxu0 %v1501
      %v1503 = vand.u32 %v314, 4294901760
      %1504 = vmatpush.msra.mxu0 %v1503
      %v1505 = vand.u32 %v313, 4294901760
      %1506 = vmatpush.msra.mxu0 %v1505
      %v1507 = vand.u32 %v312, 4294901760
      %1508 = vmatpush.msra.mxu0 %v1507
      %v1509 = vand.u32 %v311, 4294901760
      %1510 = vmatpush.msra.mxu0 %v1509
      %v1511 = vand.u32 %v327, 4294901760
      %1512 = vmatmul.f32.gmra.mxu0 %v1511
      %v1513 = vpop.f32.mrf.mxu0
      %v1514 = vadd.f32 %v1361, %v1513
      %v1515 = vand.u32 %v330, 4294901760
      %1516 = vmatmul.f32.gmra.mxu0 %v1515
      %v1517 = vpop.f32.mrf.mxu0
      %v1518 = vadd.f32 %v1365, %v1517
      %v1519 = vand.u32 %v333, 4294901760
      %1520 = vmatmul.f32.gmra.mxu0 %v1519
      %v1521 = vpop.f32.mrf.mxu0
      %v1522 = vadd.f32 %v1369, %v1521
      %v1523 = vand.u32 %v336, 4294901760
      %1524 = vmatmul.f32.gmra.mxu0 %v1523
      %v1525 = vpop.f32.mrf.mxu0
      %v1526 = vadd.f32 %v1373, %v1525
      %v1527 = vand.u32 %v339, 4294901760
      %1528 = vmatmul.f32.gmra.mxu0 %v1527
      %v1529 = vpop.f32.mrf.mxu0
      %v1530 = vadd.f32 %v1377, %v1529
      %v1531 = vand.u32 %v342, 4294901760
      %1532 = vmatmul.f32.gmra.mxu0 %v1531
      %v1533 = vpop.f32.mrf.mxu0
      %v1534 = vadd.f32 %v1381, %v1533
      %v1535 = vand.u32 %v345, 4294901760
      %1536 = vmatmul.f32.gmra.mxu0 %v1535
      %v1537 = vpop.f32.mrf.mxu0
      %v1538 = vadd.f32 %v1385, %v1537
      %v1539 = vand.u32 %v348, 4294901760
      %1540 = vmatmul.f32.gmra.mxu0 %v1539
      %v1541 = vpop.f32.mrf.mxu0
      %v1542 = vadd.f32 %v1389, %v1541
      %v1543 = vand.u32 %v351, 4294901760
      %1544 = vmatmul.f32.gmra.mxu0 %v1543
      %v1545 = vpop.f32.mrf.mxu0
      %v1546 = vadd.f32 %v1393, %v1545
      %v1547 = vand.u32 %v354, 4294901760
      %1548 = vmatmul.f32.gmra.mxu0 %v1547
      %v1549 = vpop.f32.mrf.mxu0
      %v1550 = vadd.f32 %v1397, %v1549
      %v1551 = vand.u32 %v357, 4294901760
      %1552 = vmatmul.f32.gmra.mxu0 %v1551
      %v1553 = vpop.f32.mrf.mxu0
      %v1554 = vadd.f32 %v1401, %v1553
      %v1555 = vand.u32 %v360, 4294901760
      %1556 = vmatmul.f32.gmra.mxu0 %v1555
      %v1557 = vpop.f32.mrf.mxu0
      %v1558 = vadd.f32 %v1405, %v1557
      %v1559 = vand.u32 %v363, 4294901760
      %1560 = vmatmul.f32.gmra.mxu0 %v1559
      %v1561 = vpop.f32.mrf.mxu0
      %v1562 = vadd.f32 %v1409, %v1561
      %v1563 = vand.u32 %v366, 4294901760
      %1564 = vmatmul.f32.gmra.mxu0 %v1563
      %v1565 = vpop.f32.mrf.mxu0
      %v1566 = vadd.f32 %v1413, %v1565
      %v1567 = vand.u32 %v369, 4294901760
      %1568 = vmatmul.f32.gmra.mxu0 %v1567
      %v1569 = vpop.f32.mrf.mxu0
      %v1570 = vadd.f32 %v1417, %v1569
      %v1571 = vand.u32 %v372, 4294901760
      %1572 = vmatmul.f32.gmra.mxu0 %v1571
      %v1573 = vpop.f32.mrf.mxu0
      %v1574 = vadd.f32 %v1421, %v1573
      %v1575 = vand.u32 %v375, 4294901760
      %1576 = vmatmul.f32.gmra.mxu0 %v1575
      %v1577 = vpop.f32.mrf.mxu0
      %v1578 = vadd.f32 %v1425, %v1577
      %v1579 = vand.u32 %v378, 4294901760
      %1580 = vmatmul.f32.gmra.mxu0 %v1579
      %v1581 = vpop.f32.mrf.mxu0
      %v1582 = vadd.f32 %v1429, %v1581
      %v1583 = vand.u32 %v381, 4294901760
      %1584 = vmatmul.f32.gmra.mxu0 %v1583
      %v1585 = vpop.f32.mrf.mxu0
      %v1586 = vadd.f32 %v1433, %v1585
      %v1587 = vand.u32 %v384, 4294901760
      %1588 = vmatmul.f32.gmra.mxu0 %v1587
      %v1589 = vpop.f32.mrf.mxu0
      %v1590 = vadd.f32 %v1437, %v1589
      %v1591 = vand.u32 %v387, 4294901760
      %1592 = vmatmul.f32.gmra.mxu0 %v1591
      %v1593 = vpop.f32.mrf.mxu0
      %v1594 = vadd.f32 %v1441, %v1593
      %v1595 = vand.u32 %v390, 4294901760
      %1596 = vmatmul.f32.gmra.mxu0 %v1595
      %v1597 = vpop.f32.mrf.mxu0
      %v1598 = vadd.f32 %v1445, %v1597
      %v1599 = vand.u32 %v393, 4294901760
      %1600 = vmatmul.f32.gmra.mxu0 %v1599
      %v1601 = vpop.f32.mrf.mxu0
      %v1602 = vadd.f32 %v1449, %v1601
      %v1603 = vand.u32 %v396, 4294901760
      %1604 = vmatmul.f32.gmra.mxu0 %v1603
      %v1605 = vpop.f32.mrf.mxu0
      %v1606 = vand.u32 %v399, 4294901760
      %1607 = vmatmul.f32.gmra.mxu0 %v1606
      %v1608 = vpop.f32.mrf.mxu0
      %v1609 = vadd.f32 %v1456, %v1608
      %v1610 = vand.u32 %v402, 4294901760
      %1611 = vmatmul.f32.gmra.mxu0 %v1610
      %v1612 = vpop.f32.mrf.mxu0
      %v1613 = vadd.f32 %v1460, %v1612
      %v1614 = vand.u32 %v405, 4294901760
      %1615 = vmatmul.f32.gmra.mxu0 %v1614
      %v1616 = vpop.f32.mrf.mxu0
      %v1617 = vadd.f32 %v1464, %v1616
      %v1618 = vand.u32 %v408, 4294901760
      %1619 = vmatmul.f32.gmra.mxu0 %v1618
      %v1620 = vpop.f32.mrf.mxu0
      %v1621 = vadd.f32 %v1468, %v1620
      %v1622 = vand.u32 %v411, 4294901760
      %1623 = vmatmul.f32.gmra.mxu0 %v1622
      %v1624 = vpop.f32.mrf.mxu0
      %v1625 = vadd.f32 %v1472, %v1624
      %v1626 = vand.u32 %v414, 4294901760
      %1627 = vmatmul.f32.gmra.mxu0 %v1626
      %v1628 = vpop.f32.mrf.mxu0
      %v1629 = vadd.f32 %v1476, %v1628
      %v1630 = vand.u32 %v417, 4294901760
      %1631 = vmatmul.f32.gmra.mxu0 %v1630
      %v1632 = vpop.f32.mrf.mxu0
      %v1633 = vadd.f32 %v1480, %v1632
      %v1634 = vand.u32 %v420, 4294901760
      %1635 = vmatmul.f32.gmra.mxu0 %v1634
      %v1636 = vpop.f32.mrf.mxu0
      %1637 = vdwg.mxu0
      %v1638 = vmax.f32 %v1514, 0.0
      %v1639 = vmax.f32 %v1518, 0.0
      %v1640 = vmax.f32 %v1522, 0.0
      %v1641 = vmax.f32 %v1526, 0.0
      %v1642 = vmax.f32 %v1530, 0.0
      %v1643 = vmax.f32 %v1534, 0.0
      %v1644 = vmax.f32 %v1538, 0.0
      %v1645 = vmax.f32 %v1542, 0.0
      %v1646 = vmax.f32 %v1546, 0.0
      %v1647 = vmax.f32 %v1550, 0.0
      %v1648 = vmax.f32 %v1554, 0.0
      %v1649 = vmax.f32 %v1558, 0.0
      %v1650 = vmax.f32 %v1562, 0.0
      %v1651 = vmax.f32 %v1566, 0.0
      %v1652 = vmax.f32 %v1570, 0.0
      %v1653 = vmax.f32 %v1574, 0.0
      %v1654 = vmax.f32 %v1578, 0.0
      %v1655 = vmax.f32 %v1582, 0.0
      %v1656 = vmax.f32 %v1586, 0.0
      %v1657 = vmax.f32 %v1590, 0.0
      %v1658 = vmax.f32 %v1594, 0.0
      %v1659 = vmax.f32 %v1598, 0.0
      %v1660 = vmax.f32 %v1602, 0.0
      %v1661 = vmax.f32 %v1609, 0.0
      %v1662 = vmax.f32 %v1613, 0.0
      %v1663 = vmax.f32 %v1617, 0.0
      %v1664 = vmax.f32 %v1621, 0.0
      %v1665 = vmax.f32 %v1625, 0.0
      %v1666 = vmax.f32 %v1629, 0.0
      %v1667 = vmax.f32 %v1633, 0.0
      %1675 = vrot.lane.b32.xlu0 %v1646, 10
      %v1676 = vpop.permute.xlu0 %1675
      %1677 = vrot.lane.b32.xlu0 %v1647, 10
      %v1678 = vpop.permute.xlu0 %1677
      %1679 = vrot.lane.b32.xlu0 %v1648, 10
      %v1680 = vpop.permute.xlu0 %1679
      %1681 = vrot.lane.b32.xlu0 %v1649, 10
      %v1682 = vpop.permute.xlu0 %1681
      %1683 = vrot.lane.b32.xlu0 %v1650, 10
      %v1684 = vpop.permute.xlu0 %1683
      %1685 = vrot.lane.b32.xlu0 %v1651, 10
      %v1686 = vpop.permute.xlu0 %1685
      %1687 = vrot.lane.b32.xlu0 %v1652, 10
      %v1688 = vpop.permute.xlu0 %1687
      %v1703 = vrot.slane %v1638, 1
      %v1704 = vrot.slane %v1639, 1
      %v1705 = vrot.slane %v1640, 1
      %v1706 = vrot.slane %v1641, 1
      %v1707 = vrot.slane %v1642, 1
      %v1708 = vrot.slane %v1643, 1
      %v1709 = vrot.slane %v1644, 1
      %1710 = vrot.lane.b32.xlu0 %v1703, 20
      %v1711 = vpop.permute.xlu0 %1710
      %1712 = vrot.lane.b32.xlu0 %v1704, 20
      %v1713 = vpop.permute.xlu0 %1712
      %1714 = vrot.lane.b32.xlu0 %v1705, 20
      %v1715 = vpop.permute.xlu0 %1714
      %1716 = vrot.lane.b32.xlu0 %v1706, 20
      %v1717 = vpop.permute.xlu0 %1716
      %1718 = vrot.lane.b32.xlu0 %v1707, 20
      %v1719 = vpop.permute.xlu0 %1718
      %1720 = vrot.lane.b32.xlu0 %v1708, 20
      %v1721 = vpop.permute.xlu0 %1720
      %1722 = vrot.lane.b32.xlu0 %v1709, 20
      %v1723 = vpop.permute.xlu0 %1722
      %1738 = vrot.lane.b32.xlu0 %v1654, 30
      %v1739 = vpop.permute.xlu0 %1738
      %1740 = vrot.lane.b32.xlu0 %v1655, 30
      %v1741 = vpop.permute.xlu0 %1740
      %1742 = vrot.lane.b32.xlu0 %v1656, 30
      %v1743 = vpop.permute.xlu0 %1742
      %1744 = vrot.lane.b32.xlu0 %v1657, 30
      %v1745 = vpop.permute.xlu0 %1744
      %1746 = vrot.lane.b32.xlu0 %v1658, 30
      %v1747 = vpop.permute.xlu0 %1746
      %1748 = vrot.lane.b32.xlu0 %v1659, 30
      %v1749 = vpop.permute.xlu0 %1748
      %1750 = vrot.lane.b32.xlu0 %v1660, 30
      %v1751 = vpop.permute.xlu0 %1750
      %1766 = vrot.lane.b32.xlu0 %v1661, 40
      %v1767 = vpop.permute.xlu0 %1766
      %1768 = vrot.lane.b32.xlu0 %v1662, 40
      %v1769 = vpop.permute.xlu0 %1768
      %1770 = vrot.lane.b32.xlu0 %v1663, 40
      %v1771 = vpop.permute.xlu0 %1770
      %1772 = vrot.lane.b32.xlu0 %v1664, 40
      %v1773 = vpop.permute.xlu0 %1772
      %1774 = vrot.lane.b32.xlu0 %v1665, 40
      %v1775 = vpop.permute.xlu0 %1774
      %1776 = vrot.lane.b32.xlu0 %v1666, 40
      %v1777 = vpop.permute.xlu0 %1776
      %1778 = vrot.lane.b32.xlu0 %v1667, 40
      %v1779 = vpop.permute.xlu0 %1778
      %v1787 = vrot.slane %v1654, 1
      %v1788 = vrot.slane %v1655, 1
      %v1789 = vrot.slane %v1656, 1
      %v1790 = vrot.slane %v1657, 1
      %v1791 = vrot.slane %v1658, 1
      %v1792 = vrot.slane %v1659, 1
      %v1793 = vrot.slane %v1660, 1
      %1794 = vrot.lane.b32.xlu0 %v1787, 50
      %v1795 = vpop.permute.xlu0 %1794
      %1796 = vrot.lane.b32.xlu0 %v1788, 50
      %v1797 = vpop.permute.xlu0 %1796
      %1798 = vrot.lane.b32.xlu0 %v1789, 50
      %v1799 = vpop.permute.xlu0 %1798
      %1800 = vrot.lane.b32.xlu0 %v1790, 50
      %v1801 = vpop.permute.xlu0 %1800
      %1802 = vrot.lane.b32.xlu0 %v1791, 50
      %v1803 = vpop.permute.xlu0 %1802
      %1804 = vrot.lane.b32.xlu0 %v1792, 50
      %v1805 = vpop.permute.xlu0 %1804
      %1806 = vrot.lane.b32.xlu0 %v1793, 50
      %v1807 = vpop.permute.xlu0 %1806
      %1816 = vrot.lane.b32.xlu0 %v1639, 60
      %v1817 = vpop.permute.xlu0 %1816
      %1818 = vrot.lane.b32.xlu0 %v1640, 60
      %v1819 = vpop.permute.xlu0 %1818
      %1820 = vrot.lane.b32.xlu0 %v1641, 60
      %v1821 = vpop.permute.xlu0 %1820
      %1822 = vrot.lane.b32.xlu0 %v1642, 60
      %v1823 = vpop.permute.xlu0 %1822
      %1824 = vrot.lane.b32.xlu0 %v1643, 60
      %v1825 = vpop.permute.xlu0 %1824
      %1826 = vrot.lane.b32.xlu0 %v1644, 60
      %v1827 = vpop.permute.xlu0 %1826
      %1828 = vrot.lane.b32.xlu0 %v1645, 60
      %v1829 = vpop.permute.xlu0 %1828
      %1838 = vrot.lane.b32.xlu0 %v1647, 70
      %v1839 = vpop.permute.xlu0 %1838
      %1840 = vrot.lane.b32.xlu0 %v1648, 70
      %v1841 = vpop.permute.xlu0 %1840
      %1842 = vrot.lane.b32.xlu0 %v1649, 70
      %v1843 = vpop.permute.xlu0 %1842
      %1844 = vrot.lane.b32.xlu0 %v1650, 70
      %v1845 = vpop.permute.xlu0 %1844
      %1846 = vrot.lane.b32.xlu0 %v1651, 70
      %v1847 = vpop.permute.xlu0 %1846
      %1848 = vrot.lane.b32.xlu0 %v1652, 70
      %v1849 = vpop.permute.xlu0 %1848
      %1850 = vrot.lane.b32.xlu0 %v1653, 70
      %v1851 = vpop.permute.xlu0 %1850
      %v1859 = vrot.slane %v1645, 1
      %1860 = vrot.lane.b32.xlu0 %v1704, 80
      %v1861 = vpop.permute.xlu0 %1860
      %1862 = vrot.lane.b32.xlu0 %v1705, 80
      %v1863 = vpop.permute.xlu0 %1862
      %1864 = vrot.lane.b32.xlu0 %v1706, 80
      %v1865 = vpop.permute.xlu0 %1864
      %1866 = vrot.lane.b32.xlu0 %v1707, 80
      %v1867 = vpop.permute.xlu0 %1866
      %1868 = vrot.lane.b32.xlu0 %v1708, 80
      %v1869 = vpop.permute.xlu0 %1868
      %1870 = vrot.lane.b32.xlu0 %v1709, 80
      %v1871 = vpop.permute.xlu0 %1870
      %1872 = vrot.lane.b32.xlu0 %v1859, 80
      %v1873 = vpop.permute.xlu0 %1872
      %vm1881 = vcmask 80896
      %v1882 = vsel %vm1881, %v1638, %v1676
      %v1883 = vsel %vm1881, %v1639, %v1678
      %v1884 = vsel %vm1881, %v1640, %v1680
      %v1885 = vsel %vm1881, %v1641, %v1682
      %v1886 = vsel %vm1881, %v1642, %v1684
      %v1887 = vsel %vm1881, %v1643, %v1686
      %v1888 = vsel %vm1881, %v1644, %v1688
      %vm1889 = vcmask 162816
      %v1890 = vsel %vm1889, %v1882, %v1711
      %v1891 = vsel %vm1889, %v1883, %v1713
      %v1892 = vsel %vm1889, %v1884, %v1715
      %v1893 = vsel %vm1889, %v1885, %v1717
      %v1894 = vsel %vm1889, %v1886, %v1719
      %v1895 = vsel %vm1889, %v1887, %v1721
      %v1896 = vsel %vm1889, %v1888, %v1723
      %vm1897 = vcmask 244736
      %v1898 = vsel %vm1897, %v1890, %v1739
      %v1899 = vsel %vm1897, %v1891, %v1741
      %v1900 = vsel %vm1897, %v1892, %v1743
      %v1901 = vsel %vm1897, %v1893, %v1745
      %v1902 = vsel %vm1897, %v1894, %v1747
      %v1903 = vsel %vm1897, %v1895, %v1749
      %v1904 = vsel %vm1897, %v1896, %v1751
      %vm1905 = vcmask 326656
      %v1906 = vsel %vm1905, %v1898, %v1767
      %v1907 = vsel %vm1905, %v1899, %v1769
      %v1908 = vsel %vm1905, %v1900, %v1771
      %v1909 = vsel %vm1905, %v1901, %v1773
      %v1910 = vsel %vm1905, %v1902, %v1775
      %v1911 = vsel %vm1905, %v1903, %v1777
      %v1912 = vsel %vm1905, %v1904, %v1779
      %vm1913 = vcmask 408576
      %v1914 = vsel %vm1913, %v1906, %v1795
      %v1915 = vsel %vm1913, %v1907, %v1797
      %v1916 = vsel %vm1913, %v1908, %v1799
      %v1917 = vsel %vm1913, %v1909, %v1801
      %v1918 = vsel %vm1913, %v1910, %v1803
      %v1919 = vsel %vm1913, %v1911, %v1805
      %v1920 = vsel %vm1913, %v1912, %v1807
      %vm1921 = vcmask 490496
      %v1922 = vsel %vm1921, %v1914, %v1817
      %v1923 = vsel %vm1921, %v1915, %v1819
      %v1924 = vsel %vm1921, %v1916, %v1821
      %v1925 = vsel %vm1921, %v1917, %v1823
      %v1926 = vsel %vm1921, %v1918, %v1825
      %v1927 = vsel %vm1921, %v1919, %v1827
      %v1928 = vsel %vm1921, %v1920, %v1829
      %vm1929 = vcmask 572416
      %v1930 = vsel %vm1929, %v1922, %v1839
      %v1931 = vsel %vm1929, %v1923, %v1841
      %v1932 = vsel %vm1929, %v1924, %v1843
      %v1933 = vsel %vm1929, %v1925, %v1845
      %v1934 = vsel %vm1929, %v1926, %v1847
      %v1935 = vsel %vm1929, %v1927, %v1849
      %v1936 = vsel %vm1929, %v1928, %v1851
      %vm1937 = vcmask 654336
      %v1938 = vsel %vm1937, %v1930, %v1861
      %v1939 = vsel %vm1937, %v1931, %v1863
      %v1940 = vsel %vm1937, %v1932, %v1865
      %v1941 = vsel %vm1937, %v1933, %v1867
      %v1942 = vsel %vm1937, %v1934, %v1869
      %v1943 = vsel %vm1937, %v1935, %v1871
      %v1944 = vsel %vm1937, %v1936, %v1873
      %v1952 = vrot.slane %v1938, 1
      %v1953 = vrot.slane %v1938, 2
      %v1954 = vrot.slane %v1938, 3
      %v1955 = vrot.slane %v1938, 4
      %v1956 = vrot.slane %v1938, 5
      %v1957 = vrot.slane %v1938, 6
      %v1958 = vrot.slane %v1939, 1
      %v1959 = vrot.slane %v1939, 2
      %v1960 = vrot.slane %v1939, 3
      %v1961 = vrot.slane %v1939, 4
      %v1962 = vrot.slane %v1939, 5
      %v1963 = vrot.slane %v1939, 6
      %v1964 = vrot.slane %v1940, 1
      %v1965 = vrot.slane %v1940, 2
      %v1966 = vrot.slane %v1940, 3
      %v1967 = vrot.slane %v1940, 4
      %v1968 = vrot.slane %v1940, 5
      %v1969 = vrot.slane %v1940, 6
      %v1970 = vrot.slane %v1941, 1
      %v1971 = vrot.slane %v1941, 2
      %v1972 = vrot.slane %v1941, 3
      %v1973 = vrot.slane %v1941, 4
      %v1974 = vrot.slane %v1941, 5
      %v1975 = vrot.slane %v1941, 6
      %v1976 = vrot.slane %v1942, 1
      %v1977 = vrot.slane %v1942, 2
      %v1978 = vrot.slane %v1942, 3
      %v1979 = vrot.slane %v1942, 4
      %v1980 = vrot.slane %v1942, 5
      %v1981 = vrot.slane %v1942, 6
      %v1982 = vrot.slane %v1943, 1
      %v1983 = vrot.slane %v1943, 2
      %v1984 = vrot.slane %v1943, 3
      %v1985 = vrot.slane %v1943, 4
      %v1986 = vrot.slane %v1943, 5
      %v1987 = vrot.slane %v1943, 6
      %v1988 = vrot.slane %v1944, 1
      %v1989 = vrot.slane %v1944, 2
      %v1990 = vrot.slane %v1944, 3
      %v1991 = vrot.slane %v1944, 4
      %v1992 = vrot.slane %v1944, 5
      %v1993 = vrot.slane %v1944, 6
      %v1994 = vld [vmem:[%s3] sm:$0xff]
      %v1995 = vld [vmem:[%s3 + $0x8] sm:$0xff]
      %v1996 = vld [vmem:[%s3 + $0x10] sm:$0xff]
      %v1997 = vld [vmem:[%s3 + $0x18] sm:$0xff]
      %v1998 = vld [vmem:[%s3 + $0x20] sm:$0xff]
      %v1999 = vld [vmem:[%s3 + $0x28] sm:$0xff]
      %v2000 = vld [vmem:[%s3 + $0x30] sm:$0xff]
      %v2001 = vld [vmem:[%s3 + $0x38] sm:$0xff]
      %v2002 = vld [vmem:[%s3 + $0x40] sm:$0xff]
      %v2003 = vld [vmem:[%s3 + $0x48] sm:$0xff]
      %v2004 = vld [vmem:[%s3 + $0x50] sm:$0xff]
      %v2005 = vld [vmem:[%s3 + $0x58] sm:$0x3]
      %v2006 = vld [vmem:[%s4] sm:$0x1]
      %v2008 = vperm.slane %v2006, 0
      %2010 = vst [vmem:[#allocation1] ss:$9 sm:$0xff] %v1938
      %s2011 = scalar_lea.vmem [#allocation1], 1
      %2012 = vst [vmem:[%s2011] ss:$9 sm:$0xff] %v1952
      %s2013 = scalar_lea.vmem [#allocation1], 2
      %2014 = vst [vmem:[%s2013] ss:$9 sm:$0xff] %v1953
      %s2015 = scalar_lea.vmem [#allocation1], 3
      %2016 = vst [vmem:[%s2015] ss:$9 sm:$0xff] %v1954
      %s2017 = scalar_lea.vmem [#allocation1], 4
      %2018 = vst [vmem:[%s2017] ss:$9 sm:$0xff] %v1955
      %s2019 = scalar_lea.vmem [#allocation1], 5
      %2020 = vst [vmem:[%s2019] ss:$9 sm:$0xff] %v1956
      %s2021 = scalar_lea.vmem [#allocation1], 6
      %2022 = vst [vmem:[%s2021] ss:$9 sm:$0xff] %v1957
      %s2023 = scalar_lea.vmem [#allocation1], 7
      %2024 = vst [vmem:[%s2023] ss:$9 sm:$0xff] %v1939
      %v2025 = vld [vmem:[#allocation1] sm:$0xff]
      %2026 = vst [vmem:[#allocation1] ss:$9 sm:$0xff] %v1958
      %2027 = vst [vmem:[%s2011] ss:$9 sm:$0xff] %v1959
      %2028 = vst [vmem:[%s2013] ss:$9 sm:$0xff] %v1960
      %2029 = vst [vmem:[%s2015] ss:$9 sm:$0xff] %v1961
      %2030 = vst [vmem:[%s2017] ss:$9 sm:$0xff] %v1962
      %2031 = vst [vmem:[%s2019] ss:$9 sm:$0xff] %v1963
      %2032 = vst [vmem:[%s2021] ss:$9 sm:$0xff] %v1940
      %2033 = vst [vmem:[%s2023] ss:$9 sm:$0xff] %v1964
      %v2034 = vld [vmem:[#allocation1] sm:$0xff]
      %2035 = vst [vmem:[#allocation1] ss:$9 sm:$0xff] %v1965
      %2036 = vst [vmem:[%s2011] ss:$9 sm:$0xff] %v1966
      %2037 = vst [vmem:[%s2013] ss:$9 sm:$0xff] %v1967
      %2038 = vst [vmem:[%s2015] ss:$9 sm:$0xff] %v1968
      %2039 = vst [vmem:[%s2017] ss:$9 sm:$0xff] %v1969
      %2040 = vst [vmem:[%s2019] ss:$9 sm:$0xff] %v1941
      %2041 = vst [vmem:[%s2021] ss:$9 sm:$0xff] %v1970
      %2042 = vst [vmem:[%s2023] ss:$9 sm:$0xff] %v1971
      %v2043 = vld [vmem:[#allocation1] sm:$0xff]
      %2044 = vst [vmem:[#allocation1] ss:$9 sm:$0xff] %v1972
      %2045 = vst [vmem:[%s2011] ss:$9 sm:$0xff] %v1973
      %2046 = vst [vmem:[%s2013] ss:$9 sm:$0xff] %v1974
      %2047 = vst [vmem:[%s2015] ss:$9 sm:$0xff] %v1975
      %2048 = vst [vmem:[%s2017] ss:$9 sm:$0xff] %v1942
      %2049 = vst [vmem:[%s2019] ss:$9 sm:$0xff] %v1976
      %2050 = vst [vmem:[%s2021] ss:$9 sm:$0xff] %v1977
      %2051 = vst [vmem:[%s2023] ss:$9 sm:$0xff] %v1978
      %v2052 = vld [vmem:[#allocation1] sm:$0xff]
      %2053 = vst [vmem:[#allocation1] ss:$9 sm:$0xff] %v1979
      %2054 = vst [vmem:[%s2011] ss:$9 sm:$0xff] %v1980
      %2055 = vst [vmem:[%s2013] ss:$9 sm:$0xff] %v1981
      %2056 = vst [vmem:[%s2015] ss:$9 sm:$0xff] %v1943
      %2057 = vst [vmem:[%s2017] ss:$9 sm:$0xff] %v1982
      %2058 = vst [vmem:[%s2019] ss:$9 sm:$0xff] %v1983
      %2059 = vst [vmem:[%s2021] ss:$9 sm:$0xff] %v1984
      %2060 = vst [vmem:[%s2023] ss:$9 sm:$0xff] %v1985
      %v2061 = vld [vmem:[#allocation1] sm:$0xff]
      %2062 = vst [vmem:[#allocation1] ss:$9 sm:$0xff] %v1986
      %2063 = vst [vmem:[%s2011] ss:$9 sm:$0xff] %v1987
      %2064 = vst [vmem:[%s2013] ss:$9 sm:$0xff] %v1944
      %2065 = vst [vmem:[%s2015] ss:$9 sm:$0xff] %v1988
      %2066 = vst [vmem:[%s2017] ss:$9 sm:$0xff] %v1989
      %2067 = vst [vmem:[%s2019] ss:$9 sm:$0xff] %v1990
      %2068 = vst [vmem:[%s2021] ss:$9 sm:$0xff] %v1991
      %2069 = vst [vmem:[%s2023] ss:$9 sm:$0xff] %v1992
      %v2070 = vld [vmem:[#allocation1] sm:$0xff]
      %2071 = vst [vmem:[#allocation1] ss:$9 sm:$0xff] %v1993
      %v2072 = vld [vmem:[#allocation1] sm:$0xff]
      %vm2073 = vcmask 736256
      %v2074 = vsel %vm2073, %v2025, 0
      %v2076 = vsel %vm2073, %v2034, 0
      %v2078 = vsel %vm2073, %v2043, 0
      %v2080 = vsel %vm2073, %v2052, 0
      %v2082 = vsel %vm2073, %v2061, 0
      %v2084 = vsel %vm2073, %v2070, 0
      %v2086 = vsel %vm2073, %v2072, 0
      %vm2088 = vcmask 1041408
      %v2090 = vsel %vm2088, %v2005, 0
      %2092 = vmatpush.msra.mxu0 0.0
      %2093 = vmatpush.msra.mxu0 0.0
      %2094 = vmatpush.msra.mxu0 0.0
      %2095 = vmatpush.msra.mxu0 0.0
      %v2096 = vand.u32 %v2090, 4294901760
      %2097 = vmatpush.msra.mxu0 %v2096
      %v2098 = vand.u32 %v2004, 4294901760
      %2099 = vmatpush.msra.mxu0 %v2098
      %v2100 = vand.u32 %v2003, 4294901760
      %2101 = vmatpush.msra.mxu0 %v2100
      %v2102 = vand.u32 %v2002, 4294901760
      %2103 = vmatpush.msra.mxu0 %v2102
      %v2104 = vand.u32 %v2001, 4294901760
      %2105 = vmatpush.msra.mxu0 %v2104
      %v2106 = vand.u32 %v2000, 4294901760
      %2107 = vmatpush.msra.mxu0 %v2106
      %v2108 = vand.u32 %v1999, 4294901760
      %2109 = vmatpush.msra.mxu0 %v2108
      %v2110 = vand.u32 %v1998, 4294901760
      %2111 = vmatpush.msra.mxu0 %v2110
      %v2112 = vand.u32 %v1997, 4294901760
      %2113 = vmatpush.msra.mxu0 %v2112
      %v2114 = vand.u32 %v1996, 4294901760
      %2115 = vmatpush.msra.mxu0 %v2114
      %v2116 = vand.u32 %v1995, 4294901760
      %2117 = vmatpush.msra.mxu0 %v2116
      %v2118 = vand.u32 %v1994, 4294901760
      %2119 = vmatpush.msra.mxu0 %v2118
      %v2120 = vand.u32 %v2074, 4294901760
      %v2121 = vsub.f32 %v2074, %v2120
      %v2122 = vand.u32 %v2121, 4294901760
      %v2123 = vsub.f32 %v2121, %v2122
      %v2124 = vand.u32 %v2123, 4294901760
      %2125 = vmatmul.f32.gmra.mxu0 %v2124
      %v2126 = vpop.f32.mrf.mxu0
      %v2127 = vadd.f32 %v2008, %v2126
      %v2128 = vand.u32 %v2076, 4294901760
      %v2129 = vsub.f32 %v2076, %v2128
      %v2130 = vand.u32 %v2129, 4294901760
      %v2131 = vsub.f32 %v2129, %v2130
      %v2132 = vand.u32 %v2131, 4294901760
      %2133 = vmatmul.f32.gmra.mxu0 %v2132
      %v2134 = vpop.f32.mrf.mxu0
      %v2135 = vadd.f32 %v2008, %v2134
      %v2136 = vand.u32 %v2078, 4294901760
      %v2137 = vsub.f32 %v2078, %v2136
      %v2138 = vand.u32 %v2137, 4294901760
      %v2139 = vsub.f32 %v2137, %v2138
      %v2140 = vand.u32 %v2139, 4294901760
      %2141 = vmatmul.f32.gmra.mxu0 %v2140
      %v2142 = vpop.f32.mrf.mxu0
      %v2143 = vadd.f32 %v2008, %v2142
      %v2144 = vand.u32 %v2080, 4294901760
      %v2145 = vsub.f32 %v2080, %v2144
      %v2146 = vand.u32 %v2145, 4294901760
      %v2147 = vsub.f32 %v2145, %v2146
      %v2148 = vand.u32 %v2147, 4294901760
      %2149 = vmatmul.f32.gmra.mxu0 %v2148
      %v2150 = vpop.f32.mrf.mxu0
      %v2151 = vadd.f32 %v2008, %v2150
      %v2152 = vand.u32 %v2082, 4294901760
      %v2153 = vsub.f32 %v2082, %v2152
      %v2154 = vand.u32 %v2153, 4294901760
      %v2155 = vsub.f32 %v2153, %v2154
      %v2156 = vand.u32 %v2155, 4294901760
      %2157 = vmatmul.f32.gmra.mxu0 %v2156
      %v2158 = vpop.f32.mrf.mxu0
      %v2159 = vadd.f32 %v2008, %v2158
      %v2160 = vand.u32 %v2084, 4294901760
      %v2161 = vsub.f32 %v2084, %v2160
      %v2162 = vand.u32 %v2161, 4294901760
      %v2163 = vsub.f32 %v2161, %v2162
      %v2164 = vand.u32 %v2163, 4294901760
      %2165 = vmatmul.f32.gmra.mxu0 %v2164
      %v2166 = vpop.f32.mrf.mxu0
      %v2167 = vadd.f32 %v2008, %v2166
      %v2168 = vand.u32 %v2086, 4294901760
      %v2169 = vsub.f32 %v2086, %v2168
      %v2170 = vand.u32 %v2169, 4294901760
      %v2171 = vsub.f32 %v2169, %v2170
      %v2172 = vand.u32 %v2171, 4294901760
      %2173 = vmatmul.f32.gmra.mxu0 %v2172
      %v2174 = vpop.f32.mrf.mxu0
      %v2175 = vadd.f32 %v2008, %v2174
      %2176 = vdwg.mxu0
      %2177 = vmatpush.msra.mxu0 0.0
      %2178 = vmatpush.msra.mxu0 0.0
      %2179 = vmatpush.msra.mxu0 0.0
      %2180 = vmatpush.msra.mxu0 0.0
      %v2181 = vand.u32 %v2090, 4294901760
      %v2182 = vsub.f32 %v2090, %v2181
      %v2183 = vand.u32 %v2182, 4294901760
      %v2184 = vsub.f32 %v2182, %v2183
      %v2185 = vand.u32 %v2184, 4294901760
      %2186 = vmatpush.msra.mxu0 %v2185
      %v2187 = vand.u32 %v2004, 4294901760
      %v2188 = vsub.f32 %v2004, %v2187
      %v2189 = vand.u32 %v2188, 4294901760
      %v2190 = vsub.f32 %v2188, %v2189
      %v2191 = vand.u32 %v2190, 4294901760
      %2192 = vmatpush.msra.mxu0 %v2191
      %v2193 = vand.u32 %v2003, 4294901760
      %v2194 = vsub.f32 %v2003, %v2193
      %v2195 = vand.u32 %v2194, 4294901760
      %v2196 = vsub.f32 %v2194, %v2195
      %v2197 = vand.u32 %v2196, 4294901760
      %2198 = vmatpush.msra.mxu0 %v2197
      %v2199 = vand.u32 %v2002, 4294901760
      %v2200 = vsub.f32 %v2002, %v2199
      %v2201 = vand.u32 %v2200, 4294901760
      %v2202 = vsub.f32 %v2200, %v2201
      %v2203 = vand.u32 %v2202, 4294901760
      %2204 = vmatpush.msra.mxu0 %v2203
      %v2205 = vand.u32 %v2001, 4294901760
      %v2206 = vsub.f32 %v2001, %v2205
      %v2207 = vand.u32 %v2206, 4294901760
      %v2208 = vsub.f32 %v2206, %v2207
      %v2209 = vand.u32 %v2208, 4294901760
      %2210 = vmatpush.msra.mxu0 %v2209
      %v2211 = vand.u32 %v2000, 4294901760
      %v2212 = vsub.f32 %v2000, %v2211
      %v2213 = vand.u32 %v2212, 4294901760
      %v2214 = vsub.f32 %v2212, %v2213
      %v2215 = vand.u32 %v2214, 4294901760
      %2216 = vmatpush.msra.mxu0 %v2215
      %v2217 = vand.u32 %v1999, 4294901760
      %v2218 = vsub.f32 %v1999, %v2217
      %v2219 = vand.u32 %v2218, 4294901760
      %v2220 = vsub.f32 %v2218, %v2219
      %v2221 = vand.u32 %v2220, 4294901760
      %2222 = vmatpush.msra.mxu0 %v2221
      %v2223 = vand.u32 %v1998, 4294901760
      %v2224 = vsub.f32 %v1998, %v2223
      %v2225 = vand.u32 %v2224, 4294901760
      %v2226 = vsub.f32 %v2224, %v2225
      %v2227 = vand.u32 %v2226, 4294901760
      %2228 = vmatpush.msra.mxu0 %v2227
      %v2229 = vand.u32 %v1997, 4294901760
      %v2230 = vsub.f32 %v1997, %v2229
      %v2231 = vand.u32 %v2230, 4294901760
      %v2232 = vsub.f32 %v2230, %v2231
      %v2233 = vand.u32 %v2232, 4294901760
      %2234 = vmatpush.msra.mxu0 %v2233
      %v2235 = vand.u32 %v1996, 4294901760
      %v2236 = vsub.f32 %v1996, %v2235
      %v2237 = vand.u32 %v2236, 4294901760
      %v2238 = vsub.f32 %v2236, %v2237
      %v2239 = vand.u32 %v2238, 4294901760
      %2240 = vmatpush.msra.mxu0 %v2239
      %v2241 = vand.u32 %v1995, 4294901760
      %v2242 = vsub.f32 %v1995, %v2241
      %v2243 = vand.u32 %v2242, 4294901760
      %v2244 = vsub.f32 %v2242, %v2243
      %v2245 = vand.u32 %v2244, 4294901760
      %2246 = vmatpush.msra.mxu0 %v2245
      %v2247 = vand.u32 %v1994, 4294901760
      %v2248 = vsub.f32 %v1994, %v2247
      %v2249 = vand.u32 %v2248, 4294901760
      %v2250 = vsub.f32 %v2248, %v2249
      %v2251 = vand.u32 %v2250, 4294901760
      %2252 = vmatpush.msra.mxu0 %v2251
      %v2253 = vand.u32 %v2074, 4294901760
      %2254 = vmatmul.f32.gmra.mxu0 %v2253
      %v2255 = vpop.f32.mrf.mxu0
      %v2256 = vadd.f32 %v2127, %v2255
      %v2257 = vand.u32 %v2076, 4294901760
      %2258 = vmatmul.f32.gmra.mxu0 %v2257
      %v2259 = vpop.f32.mrf.mxu0
      %v2260 = vadd.f32 %v2135, %v2259
      %v2261 = vand.u32 %v2078, 4294901760
      %2262 = vmatmul.f32.gmra.mxu0 %v2261
      %v2263 = vpop.f32.mrf.mxu0
      %v2264 = vadd.f32 %v2143, %v2263
      %v2265 = vand.u32 %v2080, 4294901760
      %2266 = vmatmul.f32.gmra.mxu0 %v2265
      %v2267 = vpop.f32.mrf.mxu0
      %v2268 = vadd.f32 %v2151, %v2267
      %v2269 = vand.u32 %v2082, 4294901760
      %2270 = vmatmul.f32.gmra.mxu0 %v2269
      %v2271 = vpop.f32.mrf.mxu0
      %v2272 = vadd.f32 %v2159, %v2271
      %v2273 = vand.u32 %v2084, 4294901760
      %2274 = vmatmul.f32.gmra.mxu0 %v2273
      %v2275 = vpop.f32.mrf.mxu0
      %v2276 = vadd.f32 %v2167, %v2275
      %v2277 = vand.u32 %v2086, 4294901760
      %2278 = vmatmul.f32.gmra.mxu0 %v2277
      %v2279 = vpop.f32.mrf.mxu0
      %v2280 = vadd.f32 %v2175, %v2279
      %2281 = vdwg.mxu0
      %2282 = vmatpush.msra.mxu0 0.0
      %2283 = vmatpush.msra.mxu0 0.0
      %2284 = vmatpush.msra.mxu0 0.0
      %2285 = vmatpush.msra.mxu0 0.0
      %v2286 = vand.u32 %v2090, 4294901760
      %v2287 = vsub.f32 %v2090, %v2286
      %2288 = vmatpush.msra.mxu0 %v2287
      %v2289 = vand.u32 %v2004, 4294901760
      %v2290 = vsub.f32 %v2004, %v2289
      %2291 = vmatpush.msra.mxu0 %v2290
      %v2292 = vand.u32 %v2003, 4294901760
      %v2293 = vsub.f32 %v2003, %v2292
      %2294 = vmatpush.msra.mxu0 %v2293
      %v2295 = vand.u32 %v2002, 4294901760
      %v2296 = vsub.f32 %v2002, %v2295
      %2297 = vmatpush.msra.mxu0 %v2296
      %v2298 = vand.u32 %v2001, 4294901760
      %v2299 = vsub.f32 %v2001, %v2298
      %2300 = vmatpush.msra.mxu0 %v2299
      %v2301 = vand.u32 %v2000, 4294901760
      %v2302 = vsub.f32 %v2000, %v2301
      %2303 = vmatpush.msra.mxu0 %v2302
      %v2304 = vand.u32 %v1999, 4294901760
      %v2305 = vsub.f32 %v1999, %v2304
      %2306 = vmatpush.msra.mxu0 %v2305
      %v2307 = vand.u32 %v1998, 4294901760
      %v2308 = vsub.f32 %v1998, %v2307
      %2309 = vmatpush.msra.mxu0 %v2308
      %v2310 = vand.u32 %v1997, 4294901760
      %v2311 = vsub.f32 %v1997, %v2310
      %2312 = vmatpush.msra.mxu0 %v2311
      %v2313 = vand.u32 %v1996, 4294901760
      %v2314 = vsub.f32 %v1996, %v2313
      %2315 = vmatpush.msra.mxu0 %v2314
      %v2316 = vand.u32 %v1995, 4294901760
      %v2317 = vsub.f32 %v1995, %v2316
      %2318 = vmatpush.msra.mxu0 %v2317
      %v2319 = vand.u32 %v1994, 4294901760
      %v2320 = vsub.f32 %v1994, %v2319
      %2321 = vmatpush.msra.mxu0 %v2320
      %v2322 = vand.u32 %v2074, 4294901760
      %v2323 = vsub.f32 %v2074, %v2322
      %2324 = vmatmul.f32.gmra.mxu0 %v2323
      %v2325 = vpop.f32.mrf.mxu0
      %v2326 = vadd.f32 %v2256, %v2325
      %v2327 = vand.u32 %v2076, 4294901760
      %v2328 = vsub.f32 %v2076, %v2327
      %2329 = vmatmul.f32.gmra.mxu0 %v2328
      %v2330 = vpop.f32.mrf.mxu0
      %v2331 = vadd.f32 %v2260, %v2330
      %v2332 = vand.u32 %v2078, 4294901760
      %v2333 = vsub.f32 %v2078, %v2332
      %2334 = vmatmul.f32.gmra.mxu0 %v2333
      %v2335 = vpop.f32.mrf.mxu0
      %v2336 = vadd.f32 %v2264, %v2335
      %v2337 = vand.u32 %v2080, 4294901760
      %v2338 = vsub.f32 %v2080, %v2337
      %2339 = vmatmul.f32.gmra.mxu0 %v2338
      %v2340 = vpop.f32.mrf.mxu0
      %v2341 = vadd.f32 %v2268, %v2340
      %v2342 = vand.u32 %v2082, 4294901760
      %v2343 = vsub.f32 %v2082, %v2342
      %2344 = vmatmul.f32.gmra.mxu0 %v2343
      %v2345 = vpop.f32.mrf.mxu0
      %v2346 = vadd.f32 %v2272, %v2345
      %v2347 = vand.u32 %v2084, 4294901760
      %v2348 = vsub.f32 %v2084, %v2347
      %2349 = vmatmul.f32.gmra.mxu0 %v2348
      %v2350 = vpop.f32.mrf.mxu0
      %v2351 = vadd.f32 %v2276, %v2350
      %v2352 = vand.u32 %v2086, 4294901760
      %v2353 = vsub.f32 %v2086, %v2352
      %2354 = vmatmul.f32.gmra.mxu0 %v2353
      %v2355 = vpop.f32.mrf.mxu0
      %v2356 = vadd.f32 %v2280, %v2355
      %2357 = vdwg.mxu0
      %2358 = vmatpush.msra.mxu0 0.0
      %2359 = vmatpush.msra.mxu0 0.0
      %2360 = vmatpush.msra.mxu0 0.0
      %2361 = vmatpush.msra.mxu0 0.0
      %v2362 = vand.u32 %v2090, 4294901760
      %2363 = vmatpush.msra.mxu0 %v2362
      %v2364 = vand.u32 %v2004, 4294901760
      %2365 = vmatpush.msra.mxu0 %v2364
      %v2366 = vand.u32 %v2003, 4294901760
      %2367 = vmatpush.msra.mxu0 %v2366
      %v2368 = vand.u32 %v2002, 4294901760
      %2369 = vmatpush.msra.mxu0 %v2368
      %v2370 = vand.u32 %v2001, 4294901760
      %2371 = vmatpush.msra.mxu0 %v2370
      %v2372 = vand.u32 %v2000, 4294901760
      %2373 = vmatpush.msra.mxu0 %v2372
      %v2374 = vand.u32 %v1999, 4294901760
      %2375 = vmatpush.msra.mxu0 %v2374
      %v2376 = vand.u32 %v1998, 4294901760
      %2377 = vmatpush.msra.mxu0 %v2376
      %v2378 = vand.u32 %v1997, 4294901760
      %2379 = vmatpush.msra.mxu0 %v2378
      %v2380 = vand.u32 %v1996, 4294901760
      %2381 = vmatpush.msra.mxu0 %v2380
      %v2382 = vand.u32 %v1995, 4294901760
      %2383 = vmatpush.msra.mxu0 %v2382
      %v2384 = vand.u32 %v1994, 4294901760
      %2385 = vmatpush.msra.mxu0 %v2384
      %v2386 = vand.u32 %v2074, 4294901760
      %v2387 = vsub.f32 %v2074, %v2386
      %v2388 = vand.u32 %v2387, 4294901760
      %2389 = vmatmul.f32.gmra.mxu0 %v2388
      %v2390 = vpop.f32.mrf.mxu0
      %v2391 = vadd.f32 %v2326, %v2390
      %v2392 = vand.u32 %v2076, 4294901760
      %v2393 = vsub.f32 %v2076, %v2392
      %v2394 = vand.u32 %v2393, 4294901760
      %2395 = vmatmul.f32.gmra.mxu0 %v2394
      %v2396 = vpop.f32.mrf.mxu0
      %v2397 = vadd.f32 %v2331, %v2396
      %v2398 = vand.u32 %v2078, 4294901760
      %v2399 = vsub.f32 %v2078, %v2398
      %v2400 = vand.u32 %v2399, 4294901760
      %2401 = vmatmul.f32.gmra.mxu0 %v2400
      %v2402 = vpop.f32.mrf.mxu0
      %v2403 = vadd.f32 %v2336, %v2402
      %v2404 = vand.u32 %v2080, 4294901760
      %v2405 = vsub.f32 %v2080, %v2404
      %v2406 = vand.u32 %v2405, 4294901760
      %2407 = vmatmul.f32.gmra.mxu0 %v2406
      %v2408 = vpop.f32.mrf.mxu0
      %v2409 = vadd.f32 %v2341, %v2408
      %v2410 = vand.u32 %v2082, 4294901760
      %v2411 = vsub.f32 %v2082, %v2410
      %v2412 = vand.u32 %v2411, 4294901760
      %2413 = vmatmul.f32.gmra.mxu0 %v2412
      %v2414 = vpop.f32.mrf.mxu0
      %v2415 = vadd.f32 %v2346, %v2414
      %v2416 = vand.u32 %v2084, 4294901760
      %v2417 = vsub.f32 %v2084, %v2416
      %v2418 = vand.u32 %v2417, 4294901760
      %2419 = vmatmul.f32.gmra.mxu0 %v2418
      %v2420 = vpop.f32.mrf.mxu0
      %v2421 = vadd.f32 %v2351, %v2420
      %v2422 = vand.u32 %v2086, 4294901760
      %v2423 = vsub.f32 %v2086, %v2422
      %v2424 = vand.u32 %v2423, 4294901760
      %2425 = vmatmul.f32.gmra.mxu0 %v2424
      %v2426 = vpop.f32.mrf.mxu0
      %v2427 = vadd.f32 %v2356, %v2426
      %2428 = vdwg.mxu0
      %2429 = vmatpush.msra.mxu0 0.0
      %2430 = vmatpush.msra.mxu0 0.0
      %2431 = vmatpush.msra.mxu0 0.0
      %2432 = vmatpush.msra.mxu0 0.0
      %v2433 = vand.u32 %v2090, 4294901760
      %v2434 = vsub.f32 %v2090, %v2433
      %v2435 = vand.u32 %v2434, 4294901760
      %2436 = vmatpush.msra.mxu0 %v2435
      %v2437 = vand.u32 %v2004, 4294901760
      %v2438 = vsub.f32 %v2004, %v2437
      %v2439 = vand.u32 %v2438, 4294901760
      %2440 = vmatpush.msra.mxu0 %v2439
      %v2441 = vand.u32 %v2003, 4294901760
      %v2442 = vsub.f32 %v2003, %v2441
      %v2443 = vand.u32 %v2442, 4294901760
      %2444 = vmatpush.msra.mxu0 %v2443
      %v2445 = vand.u32 %v2002, 4294901760
      %v2446 = vsub.f32 %v2002, %v2445
      %v2447 = vand.u32 %v2446, 4294901760
      %2448 = vmatpush.msra.mxu0 %v2447
      %v2449 = vand.u32 %v2001, 4294901760
      %v2450 = vsub.f32 %v2001, %v2449
      %v2451 = vand.u32 %v2450, 4294901760
      %2452 = vmatpush.msra.mxu0 %v2451
      %v2453 = vand.u32 %v2000, 4294901760
      %v2454 = vsub.f32 %v2000, %v2453
      %v2455 = vand.u32 %v2454, 4294901760
      %2456 = vmatpush.msra.mxu0 %v2455
      %v2457 = vand.u32 %v1999, 4294901760
      %v2458 = vsub.f32 %v1999, %v2457
      %v2459 = vand.u32 %v2458, 4294901760
      %2460 = vmatpush.msra.mxu0 %v2459
      %v2461 = vand.u32 %v1998, 4294901760
      %v2462 = vsub.f32 %v1998, %v2461
      %v2463 = vand.u32 %v2462, 4294901760
      %2464 = vmatpush.msra.mxu0 %v2463
      %v2465 = vand.u32 %v1997, 4294901760
      %v2466 = vsub.f32 %v1997, %v2465
      %v2467 = vand.u32 %v2466, 4294901760
      %2468 = vmatpush.msra.mxu0 %v2467
      %v2469 = vand.u32 %v1996, 4294901760
      %v2470 = vsub.f32 %v1996, %v2469
      %v2471 = vand.u32 %v2470, 4294901760
      %2472 = vmatpush.msra.mxu0 %v2471
      %v2473 = vand.u32 %v1995, 4294901760
      %v2474 = vsub.f32 %v1995, %v2473
      %v2475 = vand.u32 %v2474, 4294901760
      %2476 = vmatpush.msra.mxu0 %v2475
      %v2477 = vand.u32 %v1994, 4294901760
      %v2478 = vsub.f32 %v1994, %v2477
      %v2479 = vand.u32 %v2478, 4294901760
      %2480 = vmatpush.msra.mxu0 %v2479
      %v2481 = vand.u32 %v2074, 4294901760
      %2482 = vmatmul.f32.gmra.mxu0 %v2481
      %v2483 = vpop.f32.mrf.mxu0
      %v2484 = vadd.f32 %v2391, %v2483
      %v2485 = vand.u32 %v2076, 4294901760
      %2486 = vmatmul.f32.gmra.mxu0 %v2485
      %v2487 = vpop.f32.mrf.mxu0
      %v2488 = vadd.f32 %v2397, %v2487
      %v2489 = vand.u32 %v2078, 4294901760
      %2490 = vmatmul.f32.gmra.mxu0 %v2489
      %v2491 = vpop.f32.mrf.mxu0
      %v2492 = vadd.f32 %v2403, %v2491
      %v2493 = vand.u32 %v2080, 4294901760
      %2494 = vmatmul.f32.gmra.mxu0 %v2493
      %v2495 = vpop.f32.mrf.mxu0
      %v2496 = vadd.f32 %v2409, %v2495
      %v2497 = vand.u32 %v2082, 4294901760
      %2498 = vmatmul.f32.gmra.mxu0 %v2497
      %v2499 = vpop.f32.mrf.mxu0
      %v2500 = vadd.f32 %v2415, %v2499
      %v2501 = vand.u32 %v2084, 4294901760
      %2502 = vmatmul.f32.gmra.mxu0 %v2501
      %v2503 = vpop.f32.mrf.mxu0
      %v2504 = vadd.f32 %v2421, %v2503
      %v2505 = vand.u32 %v2086, 4294901760
      %2506 = vmatmul.f32.gmra.mxu0 %v2505
      %v2507 = vpop.f32.mrf.mxu0
      %v2508 = vadd.f32 %v2427, %v2507
      %2509 = vdwg.mxu0
      %2510 = vmatpush.msra.mxu0 0.0
      %2511 = vmatpush.msra.mxu0 0.0
      %2512 = vmatpush.msra.mxu0 0.0
      %2513 = vmatpush.msra.mxu0 0.0
      %v2514 = vand.u32 %v2090, 4294901760
      %2515 = vmatpush.msra.mxu0 %v2514
      %v2516 = vand.u32 %v2004, 4294901760
      %2517 = vmatpush.msra.mxu0 %v2516
      %v2518 = vand.u32 %v2003, 4294901760
      %2519 = vmatpush.msra.mxu0 %v2518
      %v2520 = vand.u32 %v2002, 4294901760
      %2521 = vmatpush.msra.mxu0 %v2520
      %v2522 = vand.u32 %v2001, 4294901760
      %2523 = vmatpush.msra.mxu0 %v2522
      %v2524 = vand.u32 %v2000, 4294901760
      %2525 = vmatpush.msra.mxu0 %v2524
      %v2526 = vand.u32 %v1999, 4294901760
      %2527 = vmatpush.msra.mxu0 %v2526
      %v2528 = vand.u32 %v1998, 4294901760
      %2529 = vmatpush.msra.mxu0 %v2528
      %v2530 = vand.u32 %v1997, 4294901760
      %2531 = vmatpush.msra.mxu0 %v2530
      %v2532 = vand.u32 %v1996, 4294901760
      %2533 = vmatpush.msra.mxu0 %v2532
      %v2534 = vand.u32 %v1995, 4294901760
      %2535 = vmatpush.msra.mxu0 %v2534
      %v2536 = vand.u32 %v1994, 4294901760
      %2537 = vmatpush.msra.mxu0 %v2536
      %v2538 = vand.u32 %v2074, 4294901760
      %2539 = vmatmul.f32.gmra.mxu0 %v2538
      %v2540 = vpop.f32.mrf.mxu0
      %v2541 = vadd.f32 %v2484, %v2540
      %v2542 = vand.u32 %v2076, 4294901760
      %2543 = vmatmul.f32.gmra.mxu0 %v2542
      %v2544 = vpop.f32.mrf.mxu0
      %v2545 = vadd.f32 %v2488, %v2544
      %v2546 = vand.u32 %v2078, 4294901760
      %2547 = vmatmul.f32.gmra.mxu0 %v2546
      %v2548 = vpop.f32.mrf.mxu0
      %v2549 = vadd.f32 %v2492, %v2548
      %v2550 = vand.u32 %v2080, 4294901760
      %2551 = vmatmul.f32.gmra.mxu0 %v2550
      %v2552 = vpop.f32.mrf.mxu0
      %v2553 = vadd.f32 %v2496, %v2552
      %v2554 = vand.u32 %v2082, 4294901760
      %2555 = vmatmul.f32.gmra.mxu0 %v2554
      %v2556 = vpop.f32.mrf.mxu0
      %v2557 = vadd.f32 %v2500, %v2556
      %v2558 = vand.u32 %v2084, 4294901760
      %2559 = vmatmul.f32.gmra.mxu0 %v2558
      %v2560 = vpop.f32.mrf.mxu0
      %v2561 = vadd.f32 %v2504, %v2560
      %v2562 = vand.u32 %v2086, 4294901760
      %2563 = vmatmul.f32.gmra.mxu0 %v2562
      %v2564 = vpop.f32.mrf.mxu0
      %v2565 = vadd.f32 %v2508, %v2564
      %2566 = vdwg.mxu0
      %v2567 = vmax.f32 %v2541, 0.0
      %v2568 = vmax.f32 %v2545, 0.0
      %v2569 = vmax.f32 %v2549, 0.0
      %v2570 = vmax.f32 %v2553, 0.0
      %v2571 = vmax.f32 %v2557, 0.0
      %v2572 = vmax.f32 %v2561, 0.0
      %v2573 = vmax.f32 %v2565, 0.0
      %v2581 = vrot.slane %v2567, 1
      %v2582 = vrot.slane %v2567, 2
      %v2583 = vrot.slane %v2567, 3
      %v2584 = vrot.slane %v2567, 4
      %v2585 = vrot.slane %v2567, 5
      %v2586 = vrot.slane %v2567, 6
      %v2587 = vrot.slane %v2567, 7
      %v2588 = vrot.slane %v2568, 1
      %v2589 = vrot.slane %v2568, 2
      %v2590 = vrot.slane %v2568, 3
      %v2591 = vrot.slane %v2568, 4
      %v2592 = vrot.slane %v2568, 5
      %v2593 = vrot.slane %v2568, 6
      %v2594 = vrot.slane %v2568, 7
      %v2595 = vrot.slane %v2569, 1
      %v2596 = vrot.slane %v2569, 2
      %v2597 = vrot.slane %v2569, 3
      %v2598 = vrot.slane %v2569, 4
      %v2599 = vrot.slane %v2569, 5
      %v2600 = vrot.slane %v2569, 6
      %v2601 = vrot.slane %v2569, 7
      %v2602 = vrot.slane %v2570, 1
      %v2603 = vrot.slane %v2570, 2
      %v2604 = vrot.slane %v2570, 3
      %v2605 = vrot.slane %v2570, 4
      %v2606 = vrot.slane %v2570, 5
      %v2607 = vrot.slane %v2570, 6
      %v2608 = vrot.slane %v2570, 7
      %v2609 = vrot.slane %v2571, 1
      %v2610 = vrot.slane %v2571, 2
      %v2611 = vrot.slane %v2571, 3
      %v2612 = vrot.slane %v2571, 4
      %v2613 = vrot.slane %v2571, 5
      %v2614 = vrot.slane %v2571, 6
      %v2615 = vrot.slane %v2571, 7
      %v2616 = vrot.slane %v2572, 1
      %v2617 = vrot.slane %v2572, 2
      %v2618 = vrot.slane %v2572, 3
      %v2619 = vrot.slane %v2572, 4
      %v2620 = vrot.slane %v2572, 5
      %v2621 = vrot.slane %v2572, 6
      %v2622 = vrot.slane %v2572, 7
      %2623 = vst [vmem:[#allocation1] ss:$9 sm:$0xff] %v2567
      %s2624 = scalar_lea.vmem [#allocation1], 1
      %2625 = vst [vmem:[%s2624] ss:$9 sm:$0xff] %v2581
      %s2626 = scalar_lea.vmem [#allocation1], 2
      %2627 = vst [vmem:[%s2626] ss:$9 sm:$0xff] %v2582
      %s2628 = scalar_lea.vmem [#allocation1], 3
      %2629 = vst [vmem:[%s2628] ss:$9 sm:$0xff] %v2583
      %s2630 = scalar_lea.vmem [#allocation1], 4
      %2631 = vst [vmem:[%s2630] ss:$9 sm:$0xff] %v2584
      %v2632 = vld [vmem:[#allocation1] sm:$0xff]
      %2633 = vst [vmem:[#allocation1] ss:$9 sm:$0xff] %v2587
      %2634 = vst [vmem:[%s2624] ss:$9 sm:$0xff] %v2568
      %2635 = vst [vmem:[%s2626] ss:$9 sm:$0xff] %v2588
      %2636 = vst [vmem:[%s2628] ss:$9 sm:$0xff] %v2589
      %2637 = vst [vmem:[%s2630] ss:$9 sm:$0xff] %v2590
      %v2638 = vld [vmem:[#allocation1] sm:$0xff]
      %2639 = vst [vmem:[#allocation1] ss:$9 sm:$0xff] %v2593
      %2640 = vst [vmem:[%s2624] ss:$9 sm:$0xff] %v2594
      %2641 = vst [vmem:[%s2626] ss:$9 sm:$0xff] %v2569
      %2642 = vst [vmem:[%s2628] ss:$9 sm:$0xff] %v2595
      %2643 = vst [vmem:[%s2630] ss:$9 sm:$0xff] %v2596
      %v2644 = vld [vmem:[#allocation1] sm:$0xff]
      %2645 = vst [vmem:[#allocation1] ss:$9 sm:$0xff] %v2599
      %2646 = vst [vmem:[%s2624] ss:$9 sm:$0xff] %v2600
      %2647 = vst [vmem:[%s2626] ss:$9 sm:$0xff] %v2601
      %2648 = vst [vmem:[%s2628] ss:$9 sm:$0xff] %v2570
      %2649 = vst [vmem:[%s2630] ss:$9 sm:$0xff] %v2602
      %v2650 = vld [vmem:[#allocation1] sm:$0xff]
      %2651 = vst [vmem:[#allocation1] ss:$9 sm:$0xff] %v2605
      %2652 = vst [vmem:[%s2624] ss:$9 sm:$0xff] %v2606
      %2653 = vst [vmem:[%s2626] ss:$9 sm:$0xff] %v2607
      %2654 = vst [vmem:[%s2628] ss:$9 sm:$0xff] %v2608
      %2655 = vst [vmem:[%s2630] ss:$9 sm:$0xff] %v2571
      %v2656 = vld [vmem:[#allocation1] sm:$0xff]
      %2662 = vst [vmem:[#allocation1] ss:$9 sm:$0xff] %v2581
      %s2663 = scalar_lea.vmem [#allocation1], 1
      %2664 = vst [vmem:[%s2663] ss:$9 sm:$0xff] %v2582
      %s2665 = scalar_lea.vmem [#allocation1], 2
      %2666 = vst [vmem:[%s2665] ss:$9 sm:$0xff] %v2583
      %s2667 = scalar_lea.vmem [#allocation1], 3
      %2668 = vst [vmem:[%s2667] ss:$9 sm:$0xff] %v2584
      %s2669 = scalar_lea.vmem [#allocation1], 4
      %2670 = vst [vmem:[%s2669] ss:$9 sm:$0xff] %v2585
      %v2671 = vld [vmem:[#allocation1] sm:$0xff]
      %2672 = vst [vmem:[#allocation1] ss:$9 sm:$0xff] %v2568
      %2673 = vst [vmem:[%s2663] ss:$9 sm:$0xff] %v2588
      %2674 = vst [vmem:[%s2665] ss:$9 sm:$0xff] %v2589
      %2675 = vst [vmem:[%s2667] ss:$9 sm:$0xff] %v2590
      %2676 = vst [vmem:[%s2669] ss:$9 sm:$0xff] %v2591
      %v2677 = vld [vmem:[#allocation1] sm:$0xff]
      %2678 = vst [vmem:[#allocation1] ss:$9 sm:$0xff] %v2594
      %2679 = vst [vmem:[%s2663] ss:$9 sm:$0xff] %v2569
      %2680 = vst [vmem:[%s2665] ss:$9 sm:$0xff] %v2595
      %2681 = vst [vmem:[%s2667] ss:$9 sm:$0xff] %v2596
      %2682 = vst [vmem:[%s2669] ss:$9 sm:$0xff] %v2597
      %v2683 = vld [vmem:[#allocation1] sm:$0xff]
      %2684 = vst [vmem:[#allocation1] ss:$9 sm:$0xff] %v2600
      %2685 = vst [vmem:[%s2663] ss:$9 sm:$0xff] %v2601
      %2686 = vst [vmem:[%s2665] ss:$9 sm:$0xff] %v2570
      %2687 = vst [vmem:[%s2667] ss:$9 sm:$0xff] %v2602
      %2688 = vst [vmem:[%s2669] ss:$9 sm:$0xff] %v2603
      %v2689 = vld [vmem:[#allocation1] sm:$0xff]
      %2690 = vst [vmem:[#allocation1] ss:$9 sm:$0xff] %v2606
      %2691 = vst [vmem:[%s2663] ss:$9 sm:$0xff] %v2607
      %2692 = vst [vmem:[%s2665] ss:$9 sm:$0xff] %v2608
      %2693 = vst [vmem:[%s2667] ss:$9 sm:$0xff] %v2571
      %2694 = vst [vmem:[%s2669] ss:$9 sm:$0xff] %v2609
      %v2695 = vld [vmem:[#allocation1] sm:$0xff]
      %2696 = vrot.lane.b32.xlu0 %v2671, 64
      %v2697 = vpop.permute.xlu0 %2696
      %2698 = vrot.lane.b32.xlu0 %v2677, 64
      %v2699 = vpop.permute.xlu0 %2698
      %2700 = vrot.lane.b32.xlu0 %v2683, 64
      %v2701 = vpop.permute.xlu0 %2700
      %2702 = vrot.lane.b32.xlu0 %v2689, 64
      %v2703 = vpop.permute.xlu0 %2702
      %2704 = vrot.lane.b32.xlu0 %v2695, 64
      %v2705 = vpop.permute.xlu0 %2704
      %2711 = vst [vmem:[#allocation1] ss:$9 sm:$0xff] %v2582
      %s2712 = scalar_lea.vmem [#allocation1], 1
      %2713 = vst [vmem:[%s2712] ss:$9 sm:$0xff] %v2583
      %s2714 = scalar_lea.vmem [#allocation1], 2
      %2715 = vst [vmem:[%s2714] ss:$9 sm:$0xff] %v2584
      %s2716 = scalar_lea.vmem [#allocation1], 3
      %2717 = vst [vmem:[%s2716] ss:$9 sm:$0xff] %v2585
      %s2718 = scalar_lea.vmem [#allocation1], 4
      %2719 = vst [vmem:[%s2718] ss:$9 sm:$0xff] %v2586
      %v2720 = vld [vmem:[#allocation1] sm:$0xff]
      %2721 = vst [vmem:[#allocation1] ss:$9 sm:$0xff] %v2588
      %2722 = vst [vmem:[%s2712] ss:$9 sm:$0xff] %v2589
      %2723 = vst [vmem:[%s2714] ss:$9 sm:$0xff] %v2590
      %2724 = vst [vmem:[%s2716] ss:$9 sm:$0xff] %v2591
      %2725 = vst [vmem:[%s2718] ss:$9 sm:$0xff] %v2592
      %v2726 = vld [vmem:[#allocation1] sm:$0xff]
      %2727 = vst [vmem:[#allocation1] ss:$9 sm:$0xff] %v2569
      %2728 = vst [vmem:[%s2712] ss:$9 sm:$0xff] %v2595
      %2729 = vst [vmem:[%s2714] ss:$9 sm:$0xff] %v2596
      %2730 = vst [vmem:[%s2716] ss:$9 sm:$0xff] %v2597
      %2731 = vst [vmem:[%s2718] ss:$9 sm:$0xff] %v2598
      %v2732 = vld [vmem:[#allocation1] sm:$0xff]
      %2733 = vst [vmem:[#allocation1] ss:$9 sm:$0xff] %v2601
      %2734 = vst [vmem:[%s2712] ss:$9 sm:$0xff] %v2570
      %2735 = vst [vmem:[%s2714] ss:$9 sm:$0xff] %v2602
      %2736 = vst [vmem:[%s2716] ss:$9 sm:$0xff] %v2603
      %2737 = vst [vmem:[%s2718] ss:$9 sm:$0xff] %v2604
      %v2738 = vld [vmem:[#allocation1] sm:$0xff]
      %2739 = vst [vmem:[#allocation1] ss:$9 sm:$0xff] %v2607
      %2740 = vst [vmem:[%s2712] ss:$9 sm:$0xff] %v2608
      %2741 = vst [vmem:[%s2714] ss:$9 sm:$0xff] %v2571
      %2742 = vst [vmem:[%s2716] ss:$9 sm:$0xff] %v2609
      %2743 = vst [vmem:[%s2718] ss:$9 sm:$0xff] %v2610
      %v2744 = vld [vmem:[#allocation1] sm:$0xff]
      %2750 = vst [vmem:[#allocation1] ss:$9 sm:$0xff] %v2587
      %s2751 = scalar_lea.vmem [#allocation1], 1
      %2752 = vst [vmem:[%s2751] ss:$9 sm:$0xff] %v2568
      %s2753 = scalar_lea.vmem [#allocation1], 2
      %2754 = vst [vmem:[%s2753] ss:$9 sm:$0xff] %v2588
      %s2755 = scalar_lea.vmem [#allocation1], 3
      %2756 = vst [vmem:[%s2755] ss:$9 sm:$0xff] %v2589
      %s2757 = scalar_lea.vmem [#allocation1], 4
      %2758 = vst [vmem:[%s2757] ss:$9 sm:$0xff] %v2590
      %v2759 = vld [vmem:[#allocation1] sm:$0xff]
      %2760 = vst [vmem:[#allocation1] ss:$9 sm:$0xff] %v2593
      %2761 = vst [vmem:[%s2751] ss:$9 sm:$0xff] %v2594
      %2762 = vst [vmem:[%s2753] ss:$9 sm:$0xff] %v2569
      %2763 = vst [vmem:[%s2755] ss:$9 sm:$0xff] %v2595
      %2764 = vst [vmem:[%s2757] ss:$9 sm:$0xff] %v2596
      %v2765 = vld [vmem:[#allocation1] sm:$0xff]
      %2766 = vst [vmem:[#allocation1] ss:$9 sm:$0xff] %v2599
      %2767 = vst [vmem:[%s2751] ss:$9 sm:$0xff] %v2600
      %2768 = vst [vmem:[%s2753] ss:$9 sm:$0xff] %v2601
      %2769 = vst [vmem:[%s2755] ss:$9 sm:$0xff] %v2570
      %2770 = vst [vmem:[%s2757] ss:$9 sm:$0xff] %v2602
      %v2771 = vld [vmem:[#allocation1] sm:$0xff]
      %2772 = vst [vmem:[#allocation1] ss:$9 sm:$0xff] %v2605
      %2773 = vst [vmem:[%s2751] ss:$9 sm:$0xff] %v2606
      %2774 = vst [vmem:[%s2753] ss:$9 sm:$0xff] %v2607
      %2775 = vst [vmem:[%s2755] ss:$9 sm:$0xff] %v2608
      %2776 = vst [vmem:[%s2757] ss:$9 sm:$0xff] %v2571
      %v2777 = vld [vmem:[#allocation1] sm:$0xff]
      %2778 = vst [vmem:[#allocation1] ss:$9 sm:$0xff] %v2611
      %2779 = vst [vmem:[%s2751] ss:$9 sm:$0xff] %v2612
      %2780 = vst [vmem:[%s2753] ss:$9 sm:$0xff] %v2613
      %2781 = vst [vmem:[%s2755] ss:$9 sm:$0xff] %v2614
      %2782 = vst [vmem:[%s2757] ss:$9 sm:$0xff] %v2615
      %v2783 = vld [vmem:[#allocation1] sm:$0xff]
      %2784 = vrot.lane.b32.xlu0 %v2759, 64
      %v2785 = vpop.permute.xlu0 %2784
      %2786 = vrot.lane.b32.xlu0 %v2765, 64
      %v2787 = vpop.permute.xlu0 %2786
      %2788 = vrot.lane.b32.xlu0 %v2771, 64
      %v2789 = vpop.permute.xlu0 %2788
      %2790 = vrot.lane.b32.xlu0 %v2777, 64
      %v2791 = vpop.permute.xlu0 %2790
      %2792 = vrot.lane.b32.xlu0 %v2783, 64
      %v2793 = vpop.permute.xlu0 %2792
      %2799 = vst [vmem:[#allocation1] ss:$9 sm:$0xff] %v2568
      %s2800 = scalar_lea.vmem [#allocation1], 1
      %2801 = vst [vmem:[%s2800] ss:$9 sm:$0xff] %v2588
      %s2802 = scalar_lea.vmem [#allocation1], 2
      %2803 = vst [vmem:[%s2802] ss:$9 sm:$0xff] %v2589
      %s2804 = scalar_lea.vmem [#allocation1], 3
      %2805 = vst [vmem:[%s2804] ss:$9 sm:$0xff] %v2590
      %s2806 = scalar_lea.vmem [#allocation1], 4
      %2807 = vst [vmem:[%s2806] ss:$9 sm:$0xff] %v2591
      %v2808 = vld [vmem:[#allocation1] sm:$0xff]
      %2809 = vst [vmem:[#allocation1] ss:$9 sm:$0xff] %v2594
      %2810 = vst [vmem:[%s2800] ss:$9 sm:$0xff] %v2569
      %2811 = vst [vmem:[%s2802] ss:$9 sm:$0xff] %v2595
      %2812 = vst [vmem:[%s2804] ss:$9 sm:$0xff] %v2596
      %2813 = vst [vmem:[%s2806] ss:$9 sm:$0xff] %v2597
      %v2814 = vld [vmem:[#allocation1] sm:$0xff]
      %2815 = vst [vmem:[#allocation1] ss:$9 sm:$0xff] %v2600
      %2816 = vst [vmem:[%s2800] ss:$9 sm:$0xff] %v2601
      %2817 = vst [vmem:[%s2802] ss:$9 sm:$0xff] %v2570
      %2818 = vst [vmem:[%s2804] ss:$9 sm:$0xff] %v2602
      %2819 = vst [vmem:[%s2806] ss:$9 sm:$0xff] %v2603
      %v2820 = vld [vmem:[#allocation1] sm:$0xff]
      %2821 = vst [vmem:[#allocation1] ss:$9 sm:$0xff] %v2606
      %2822 = vst [vmem:[%s2800] ss:$9 sm:$0xff] %v2607
      %2823 = vst [vmem:[%s2802] ss:$9 sm:$0xff] %v2608
      %2824 = vst [vmem:[%s2804] ss:$9 sm:$0xff] %v2571
      %2825 = vst [vmem:[%s2806] ss:$9 sm:$0xff] %v2609
      %v2826 = vld [vmem:[#allocation1] sm:$0xff]
      %2827 = vst [vmem:[#allocation1] ss:$9 sm:$0xff] %v2612
      %2828 = vst [vmem:[%s2800] ss:$9 sm:$0xff] %v2613
      %2829 = vst [vmem:[%s2802] ss:$9 sm:$0xff] %v2614
      %2830 = vst [vmem:[%s2804] ss:$9 sm:$0xff] %v2615
      %2831 = vst [vmem:[%s2806] ss:$9 sm:$0xff] %v2572
      %v2832 = vld [vmem:[#allocation1] sm:$0xff]
      %2838 = vst [vmem:[#allocation1] ss:$9 sm:$0xff] %v2588
      %s2839 = scalar_lea.vmem [#allocation1], 1
      %2840 = vst [vmem:[%s2839] ss:$9 sm:$0xff] %v2589
      %s2841 = scalar_lea.vmem [#allocation1], 2
      %2842 = vst [vmem:[%s2841] ss:$9 sm:$0xff] %v2590
      %s2843 = scalar_lea.vmem [#allocation1], 3
      %2844 = vst [vmem:[%s2843] ss:$9 sm:$0xff] %v2591
      %s2845 = scalar_lea.vmem [#allocation1], 4
      %2846 = vst [vmem:[%s2845] ss:$9 sm:$0xff] %v2592
      %v2847 = vld [vmem:[#allocation1] sm:$0xff]
      %2848 = vst [vmem:[#allocation1] ss:$9 sm:$0xff] %v2569
      %2849 = vst [vmem:[%s2839] ss:$9 sm:$0xff] %v2595
      %2850 = vst [vmem:[%s2841] ss:$9 sm:$0xff] %v2596
      %2851 = vst [vmem:[%s2843] ss:$9 sm:$0xff] %v2597
      %2852 = vst [vmem:[%s2845] ss:$9 sm:$0xff] %v2598
      %v2853 = vld [vmem:[#allocation1] sm:$0xff]
      %2854 = vst [vmem:[#allocation1] ss:$9 sm:$0xff] %v2601
      %2855 = vst [vmem:[%s2839] ss:$9 sm:$0xff] %v2570
      %2856 = vst [vmem:[%s2841] ss:$9 sm:$0xff] %v2602
      %2857 = vst [vmem:[%s2843] ss:$9 sm:$0xff] %v2603
      %2858 = vst [vmem:[%s2845] ss:$9 sm:$0xff] %v2604
      %v2859 = vld [vmem:[#allocation1] sm:$0xff]
      %2860 = vst [vmem:[#allocation1] ss:$9 sm:$0xff] %v2607
      %2861 = vst [vmem:[%s2839] ss:$9 sm:$0xff] %v2608
      %2862 = vst [vmem:[%s2841] ss:$9 sm:$0xff] %v2571
      %2863 = vst [vmem:[%s2843] ss:$9 sm:$0xff] %v2609
      %2864 = vst [vmem:[%s2845] ss:$9 sm:$0xff] %v2610
      %v2865 = vld [vmem:[#allocation1] sm:$0xff]
      %2866 = vst [vmem:[#allocation1] ss:$9 sm:$0xff] %v2613
      %2867 = vst [vmem:[%s2839] ss:$9 sm:$0xff] %v2614
      %2868 = vst [vmem:[%s2841] ss:$9 sm:$0xff] %v2615
      %2869 = vst [vmem:[%s2843] ss:$9 sm:$0xff] %v2572
      %2870 = vst [vmem:[%s2845] ss:$9 sm:$0xff] %v2616
      %v2871 = vld [vmem:[#allocation1] sm:$0xff]
      %2872 = vrot.lane.b32.xlu0 %v2847, 64
      %v2873 = vpop.permute.xlu0 %2872
      %2874 = vrot.lane.b32.xlu0 %v2853, 64
      %v2875 = vpop.permute.xlu0 %2874
      %2876 = vrot.lane.b32.xlu0 %v2859, 64
      %v2877 = vpop.permute.xlu0 %2876
      %2878 = vrot.lane.b32.xlu0 %v2865, 64
      %v2879 = vpop.permute.xlu0 %2878
      %2880 = vrot.lane.b32.xlu0 %v2871, 64
      %v2881 = vpop.permute.xlu0 %2880
      %2887 = vst [vmem:[#allocation1] ss:$9 sm:$0xff] %v2593
      %s2888 = scalar_lea.vmem [#allocation1], 1
      %2889 = vst [vmem:[%s2888] ss:$9 sm:$0xff] %v2594
      %s2890 = scalar_lea.vmem [#allocation1], 2
      %2891 = vst [vmem:[%s2890] ss:$9 sm:$0xff] %v2569
      %s2892 = scalar_lea.vmem [#allocation1], 3
      %2893 = vst [vmem:[%s2892] ss:$9 sm:$0xff] %v2595
      %s2894 = scalar_lea.vmem [#allocation1], 4
      %2895 = vst [vmem:[%s2894] ss:$9 sm:$0xff] %v2596
      %v2896 = vld [vmem:[#allocation1] sm:$0xff]
      %2897 = vst [vmem:[#allocation1] ss:$9 sm:$0xff] %v2599
      %2898 = vst [vmem:[%s2888] ss:$9 sm:$0xff] %v2600
      %2899 = vst [vmem:[%s2890] ss:$9 sm:$0xff] %v2601
      %2900 = vst [vmem:[%s2892] ss:$9 sm:$0xff] %v2570
      %2901 = vst [vmem:[%s2894] ss:$9 sm:$0xff] %v2602
      %v2902 = vld [vmem:[#allocation1] sm:$0xff]
      %2903 = vst [vmem:[#allocation1] ss:$9 sm:$0xff] %v2605
      %2904 = vst [vmem:[%s2888] ss:$9 sm:$0xff] %v2606
      %2905 = vst [vmem:[%s2890] ss:$9 sm:$0xff] %v2607
      %2906 = vst [vmem:[%s2892] ss:$9 sm:$0xff] %v2608
      %2907 = vst [vmem:[%s2894] ss:$9 sm:$0xff] %v2571
      %v2908 = vld [vmem:[#allocation1] sm:$0xff]
      %2909 = vst [vmem:[#allocation1] ss:$9 sm:$0xff] %v2611
      %2910 = vst [vmem:[%s2888] ss:$9 sm:$0xff] %v2612
      %2911 = vst [vmem:[%s2890] ss:$9 sm:$0xff] %v2613
      %2912 = vst [vmem:[%s2892] ss:$9 sm:$0xff] %v2614
      %2913 = vst [vmem:[%s2894] ss:$9 sm:$0xff] %v2615
      %v2914 = vld [vmem:[#allocation1] sm:$0xff]
      %2915 = vst [vmem:[#allocation1] ss:$9 sm:$0xff] %v2617
      %2916 = vst [vmem:[%s2888] ss:$9 sm:$0xff] %v2618
      %2917 = vst [vmem:[%s2890] ss:$9 sm:$0xff] %v2619
      %2918 = vst [vmem:[%s2892] ss:$9 sm:$0xff] %v2620
      %2919 = vst [vmem:[%s2894] ss:$9 sm:$0xff] %v2621
      %v2920 = vld [vmem:[#allocation1] sm:$0xff]
      %2926 = vst [vmem:[#allocation1] ss:$9 sm:$0xff] %v2594
      %s2927 = scalar_lea.vmem [#allocation1], 1
      %2928 = vst [vmem:[%s2927] ss:$9 sm:$0xff] %v2569
      %s2929 = scalar_lea.vmem [#allocation1], 2
      %2930 = vst [vmem:[%s2929] ss:$9 sm:$0xff] %v2595
      %s2931 = scalar_lea.vmem [#allocation1], 3
      %2932 = vst [vmem:[%s2931] ss:$9 sm:$0xff] %v2596
      %s2933 = scalar_lea.vmem [#allocation1], 4
      %2934 = vst [vmem:[%s2933] ss:$9 sm:$0xff] %v2597
      %v2935 = vld [vmem:[#allocation1] sm:$0xff]
      %2936 = vst [vmem:[#allocation1] ss:$9 sm:$0xff] %v2600
      %2937 = vst [vmem:[%s2927] ss:$9 sm:$0xff] %v2601
      %2938 = vst [vmem:[%s2929] ss:$9 sm:$0xff] %v2570
      %2939 = vst [vmem:[%s2931] ss:$9 sm:$0xff] %v2602
      %2940 = vst [vmem:[%s2933] ss:$9 sm:$0xff] %v2603
      %v2941 = vld [vmem:[#allocation1] sm:$0xff]
      %2942 = vst [vmem:[#allocation1] ss:$9 sm:$0xff] %v2606
      %2943 = vst [vmem:[%s2927] ss:$9 sm:$0xff] %v2607
      %2944 = vst [vmem:[%s2929] ss:$9 sm:$0xff] %v2608
      %2945 = vst [vmem:[%s2931] ss:$9 sm:$0xff] %v2571
      %2946 = vst [vmem:[%s2933] ss:$9 sm:$0xff] %v2609
      %v2947 = vld [vmem:[#allocation1] sm:$0xff]
      %2948 = vst [vmem:[#allocation1] ss:$9 sm:$0xff] %v2612
      %2949 = vst [vmem:[%s2927] ss:$9 sm:$0xff] %v2613
      %2950 = vst [vmem:[%s2929] ss:$9 sm:$0xff] %v2614
      %2951 = vst [vmem:[%s2931] ss:$9 sm:$0xff] %v2615
      %2952 = vst [vmem:[%s2933] ss:$9 sm:$0xff] %v2572
      %v2953 = vld [vmem:[#allocation1] sm:$0xff]
      %2954 = vst [vmem:[#allocation1] ss:$9 sm:$0xff] %v2618
      %2955 = vst [vmem:[%s2927] ss:$9 sm:$0xff] %v2619
      %2956 = vst [vmem:[%s2929] ss:$9 sm:$0xff] %v2620
      %2957 = vst [vmem:[%s2931] ss:$9 sm:$0xff] %v2621
      %2958 = vst [vmem:[%s2933] ss:$9 sm:$0xff] %v2622
      %v2959 = vld [vmem:[#allocation1] sm:$0xff]
      %2960 = vrot.lane.b32.xlu0 %v2935, 64
      %v2961 = vpop.permute.xlu0 %2960
      %2962 = vrot.lane.b32.xlu0 %v2941, 64
      %v2963 = vpop.permute.xlu0 %2962
      %2964 = vrot.lane.b32.xlu0 %v2947, 64
      %v2965 = vpop.permute.xlu0 %2964
      %2966 = vrot.lane.b32.xlu0 %v2953, 64
      %v2967 = vpop.permute.xlu0 %2966
      %2968 = vrot.lane.b32.xlu0 %v2959, 64
      %v2969 = vpop.permute.xlu0 %2968
      %2975 = vst [vmem:[#allocation1] ss:$9 sm:$0xff] %v2569
      %s2976 = scalar_lea.vmem [#allocation1], 1
      %2977 = vst [vmem:[%s2976] ss:$9 sm:$0xff] %v2595
      %s2978 = scalar_lea.vmem [#allocation1], 2
      %2979 = vst [vmem:[%s2978] ss:$9 sm:$0xff] %v2596
      %s2980 = scalar_lea.vmem [#allocation1], 3
      %2981 = vst [vmem:[%s2980] ss:$9 sm:$0xff] %v2597
      %s2982 = scalar_lea.vmem [#allocation1], 4
      %2983 = vst [vmem:[%s2982] ss:$9 sm:$0xff] %v2598
      %v2984 = vld [vmem:[#allocation1] sm:$0xff]
      %2985 = vst [vmem:[#allocation1] ss:$9 sm:$0xff] %v2601
      %2986 = vst [vmem:[%s2976] ss:$9 sm:$0xff] %v2570
      %2987 = vst [vmem:[%s2978] ss:$9 sm:$0xff] %v2602
      %2988 = vst [vmem:[%s2980] ss:$9 sm:$0xff] %v2603
      %2989 = vst [vmem:[%s2982] ss:$9 sm:$0xff] %v2604
      %v2990 = vld [vmem:[#allocation1] sm:$0xff]
      %2991 = vst [vmem:[#allocation1] ss:$9 sm:$0xff] %v2607
      %2992 = vst [vmem:[%s2976] ss:$9 sm:$0xff] %v2608
      %2993 = vst [vmem:[%s2978] ss:$9 sm:$0xff] %v2571
      %2994 = vst [vmem:[%s2980] ss:$9 sm:$0xff] %v2609
      %2995 = vst [vmem:[%s2982] ss:$9 sm:$0xff] %v2610
      %v2996 = vld [vmem:[#allocation1] sm:$0xff]
      %2997 = vst [vmem:[#allocation1] ss:$9 sm:$0xff] %v2613
      %2998 = vst [vmem:[%s2976] ss:$9 sm:$0xff] %v2614
      %2999 = vst [vmem:[%s2978] ss:$9 sm:$0xff] %v2615
      %3000 = vst [vmem:[%s2980] ss:$9 sm:$0xff] %v2572
      %3001 = vst [vmem:[%s2982] ss:$9 sm:$0xff] %v2616
      %v3002 = vld [vmem:[#allocation1] sm:$0xff]
      %3003 = vst [vmem:[#allocation1] ss:$9 sm:$0xff] %v2619
      %3004 = vst [vmem:[%s2976] ss:$9 sm:$0xff] %v2620
      %3005 = vst [vmem:[%s2978] ss:$9 sm:$0xff] %v2621
      %3006 = vst [vmem:[%s2980] ss:$9 sm:$0xff] %v2622
      %3007 = vst [vmem:[%s2982] ss:$9 sm:$0xff] %v2573
      %v3008 = vld [vmem:[#allocation1] sm:$0xff]
      %vm3009 = vcmask 523264
      %v3010 = vsel %vm3009, %v2632, %v2697
      %v3011 = vsel %vm3009, %v2638, %v2699
      %v3012 = vsel %vm3009, %v2644, %v2701
      %v3013 = vsel %vm3009, %v2650, %v2703
      %v3014 = vsel %vm3009, %v2656, %v2705
      %v3015 = vsel %vm3009, %v2720, %v2785
      %v3016 = vsel %vm3009, %v2726, %v2787
      %v3017 = vsel %vm3009, %v2732, %v2789
      %v3018 = vsel %vm3009, %v2738, %v2791
      %v3019 = vsel %vm3009, %v2744, %v2793
      %v3020 = vsel %vm3009, %v2808, %v2873
      %v3021 = vsel %vm3009, %v2814, %v2875
      %v3022 = vsel %vm3009, %v2820, %v2877
      %v3023 = vsel %vm3009, %v2826, %v2879
      %v3024 = vsel %vm3009, %v2832, %v2881
      %v3025 = vsel %vm3009, %v2896, %v2961
      %v3026 = vsel %vm3009, %v2902, %v2963
      %v3027 = vsel %vm3009, %v2908, %v2965
      %v3028 = vsel %vm3009, %v2914, %v2967
      %v3029 = vsel %vm3009, %v2920, %v2969
      %v3050 = vrot.slane %v3015, 7
      %v3051 = vrot.slane %v3020, 6
      %v3052 = vrot.slane %v3025, 5
      %v3053 = vrot.slane %v2984, 4
      %v3054 = vrot.slane %v3016, 7
      %v3055 = vrot.slane %v3021, 6
      %v3056 = vrot.slane %v3026, 5
      %v3057 = vrot.slane %v2990, 4
      %v3058 = vrot.slane %v3017, 7
      %v3059 = vrot.slane %v3022, 6
      %v3060 = vrot.slane %v3027, 5
      %v3061 = vrot.slane %v2996, 4
      %v3062 = vrot.slane %v3018, 7
      %v3063 = vrot.slane %v3023, 6
      %v3064 = vrot.slane %v3028, 5
      %v3065 = vrot.slane %v3002, 4
      %v3066 = vrot.slane %v3019, 7
      %v3067 = vrot.slane %v3024, 6
      %v3068 = vrot.slane %v3029, 5
      %v3069 = vrot.slane %v3008, 4
      %vm3070 = vcmask 1040384
      %v3071 = vsel %vm3070, %v3010, %v3050
      %v3072 = vsel %vm2088, %v3071, %v3051
      %vm3073 = vcmask 1043459
      %v3074 = vsel %vm3073, %v3052, %v3053
      %v3075 = vsel %vm422, %v3072, %v3074
      %vm3076 = vcmask 1041409
      %v3077 = vsel %vm3076, %v3010, %v3050
      %vm3078 = vcmask 1042433
      %v3079 = vsel %vm3078, %v3077, %v3051
      %vm3080 = vcmask 1044484
      %v3081 = vsel %vm3080, %v3052, %v3053
      %vm3082 = vcmask 1043457
      %v3083 = vsel %vm3082, %v3079, %v3081
      %v3084 = vrot.slane %v3083, 1
      %vm3085 = vcmask 1042434
      %v3086 = vsel %vm3085, %v3010, %v3050
      %vm3087 = vcmask 1043458
      %v3088 = vsel %vm3087, %v3086, %v3051
      %vm3089 = vcmask 1045509
      %v3090 = vsel %vm3089, %v3052, %v3053
      %vm3091 = vcmask 1044482
      %v3092 = vsel %vm3091, %v3088, %v3090
      %v3093 = vrot.slane %v3092, 2
      %v3094 = vsel %vm3073, %v3010, %v3050
      %vm3095 = vcmask 1044483
      %v3096 = vsel %vm3095, %v3094, %v3051
      %vm3097 = vcmask 1046534
      %v3098 = vsel %vm3097, %v3052, %v3053
      %vm3099 = vcmask 1045507
      %v3100 = vsel %vm3099, %v3096, %v3098
      %v3101 = vrot.slane %v3100, 3
      %v3102 = vsel %vm3080, %v3010, %v3050
      %vm3103 = vcmask 1045508
      %v3104 = vsel %vm3103, %v3102, %v3051
      %vm3105 = vcmask 1046528
      %v3106 = vsel %vm3105, %v3053, %v3052
      %vm3107 = vcmask 1046532
      %v3108 = vsel %vm3107, %v3104, %v3106
      %v3109 = vrot.slane %v3108, 4
      %v3110 = vsel %vm3070, %v3011, %v3054
      %v3111 = vsel %vm2088, %v3110, %v3055
      %v3112 = vsel %vm3073, %v3056, %v3057
      %v3113 = vsel %vm422, %v3111, %v3112
      %v3114 = vsel %vm3076, %v3011, %v3054
      %v3115 = vsel %vm3078, %v3114, %v3055
      %v3116 = vsel %vm3080, %v3056, %v3057
      %v3117 = vsel %vm3082, %v3115, %v3116
      %v3118 = vrot.slane %v3117, 1
      %v3119 = vsel %vm3085, %v3011, %v3054
      %v3120 = vsel %vm3087, %v3119, %v3055
      %v3121 = vsel %vm3089, %v3056, %v3057
      %v3122 = vsel %vm3091, %v3120, %v3121
      %v3123 = vrot.slane %v3122, 2
      %v3124 = vsel %vm3073, %v3011, %v3054
      %v3125 = vsel %vm3095, %v3124, %v3055
      %v3126 = vsel %vm3097, %v3056, %v3057
      %v3127 = vsel %vm3099, %v3125, %v3126
      %v3128 = vrot.slane %v3127, 3
      %v3129 = vsel %vm3080, %v3011, %v3054
      %v3130 = vsel %vm3103, %v3129, %v3055
      %v3131 = vsel %vm3105, %v3057, %v3056
      %v3132 = vsel %vm3107, %v3130, %v3131
      %v3133 = vrot.slane %v3132, 4
      %v3134 = vsel %vm3070, %v3012, %v3058
      %v3135 = vsel %vm2088, %v3134, %v3059
      %v3136 = vsel %vm3073, %v3060, %v3061
      %v3137 = vsel %vm422, %v3135, %v3136
      %v3138 = vsel %vm3076, %v3012, %v3058
      %v3139 = vsel %vm3078, %v3138, %v3059
      %v3140 = vsel %vm3080, %v3060, %v3061
      %v3141 = vsel %vm3082, %v3139, %v3140
      %v3142 = vrot.slane %v3141, 1
      %v3143 = vsel %vm3085, %v3012, %v3058
      %v3144 = vsel %vm3087, %v3143, %v3059
      %v3145 = vsel %vm3089, %v3060, %v3061
      %v3146 = vsel %vm3091, %v3144, %v3145
      %v3147 = vrot.slane %v3146, 2
      %v3148 = vsel %vm3073, %v3012, %v3058
      %v3149 = vsel %vm3095, %v3148, %v3059
      %v3150 = vsel %vm3097, %v3060, %v3061
      %v3151 = vsel %vm3099, %v3149, %v3150
      %v3152 = vrot.slane %v3151, 3
      %v3153 = vsel %vm3080, %v3012, %v3058
      %v3154 = vsel %vm3103, %v3153, %v3059
      %v3155 = vsel %vm3105, %v3061, %v3060
      %v3156 = vsel %vm3107, %v3154, %v3155
      %v3157 = vrot.slane %v3156, 4
      %v3158 = vsel %vm3070, %v3013, %v3062
      %v3159 = vsel %vm2088, %v3158, %v3063
      %v3160 = vsel %vm3073, %v3064, %v3065
      %v3161 = vsel %vm422, %v3159, %v3160
      %v3162 = vsel %vm3076, %v3013, %v3062
      %v3163 = vsel %vm3078, %v3162, %v3063
      %v3164 = vsel %vm3080, %v3064, %v3065
      %v3165 = vsel %vm3082, %v3163, %v3164
      %v3166 = vrot.slane %v3165, 1
      %v3167 = vsel %vm3085, %v3013, %v3062
      %v3168 = vsel %vm3087, %v3167, %v3063
      %v3169 = vsel %vm3089, %v3064, %v3065
      %v3170 = vsel %vm3091, %v3168, %v3169
      %v3171 = vrot.slane %v3170, 2
      %v3172 = vsel %vm3073, %v3013, %v3062
      %v3173 = vsel %vm3095, %v3172, %v3063
      %v3174 = vsel %vm3097, %v3064, %v3065
      %v3175 = vsel %vm3099, %v3173, %v3174
      %v3176 = vrot.slane %v3175, 3
      %v3177 = vsel %vm3080, %v3013, %v3062
      %v3178 = vsel %vm3103, %v3177, %v3063
      %v3179 = vsel %vm3105, %v3065, %v3064
      %v3180 = vsel %vm3107, %v3178, %v3179
      %v3181 = vrot.slane %v3180, 4
      %v3182 = vsel %vm3070, %v3014, %v3066
      %v3183 = vsel %vm2088, %v3182, %v3067
      %v3184 = vsel %vm3073, %v3068, %v3069
      %v3185 = vsel %vm422, %v3183, %v3184
      %v3186 = vsel %vm3076, %v3014, %v3066
      %v3187 = vsel %vm3078, %v3186, %v3067
      %v3188 = vsel %vm3080, %v3068, %v3069
      %v3189 = vsel %vm3082, %v3187, %v3188
      %v3190 = vrot.slane %v3189, 1
      %v3191 = vsel %vm3085, %v3014, %v3066
      %v3192 = vsel %vm3087, %v3191, %v3067
      %v3193 = vsel %vm3089, %v3068, %v3069
      %v3194 = vsel %vm3091, %v3192, %v3193
      %v3195 = vrot.slane %v3194, 2
      %v3196 = vsel %vm3073, %v3014, %v3066
      %v3197 = vsel %vm3095, %v3196, %v3067
      %v3198 = vsel %vm3097, %v3068, %v3069
      %v3199 = vsel %vm3099, %v3197, %v3198
      %v3200 = vrot.slane %v3199, 3
      %v3201 = vsel %vm3080, %v3014, %v3066
      %v3202 = vsel %vm3103, %v3201, %v3067
      %v3203 = vsel %vm3105, %v3069, %v3068
      %v3204 = vsel %vm3107, %v3202, %v3203
      %v3205 = vrot.slane %v3204, 4
      %v3206 = vld [vmem:[%s5] sm:$0xff]
      %v3207 = vld [vmem:[%s5 + $0x8] sm:$0xff]
      %v3208 = vld [vmem:[%s5 + $0x10] sm:$0xff]
      %v3209 = vld [vmem:[%s5 + $0x18] sm:$0xff]
      %v3210 = vld [vmem:[%s5 + $0x20] sm:$0xff]
      %v3211 = vld [vmem:[%s5 + $0x28] sm:$0xff]
      %v3212 = vld [vmem:[%s5 + $0x30] sm:$0xff]
      %v3213 = vld [vmem:[%s5 + $0x38] sm:$0xff]
      %v3214 = vld [vmem:[%s5 + $0x40] sm:$0xff]
      %v3215 = vld [vmem:[%s5 + $0x48] sm:$0xff]
      %v3216 = vld [vmem:[%s5 + $0x50] sm:$0xff]
      %v3217 = vld [vmem:[%s5 + $0x58] sm:$0xff]
      %v3218 = vld [vmem:[%s5 + $0x60] sm:$0xff]
      %v3219 = vld [vmem:[%s5 + $0x68] sm:$0xff]
      %v3220 = vld [vmem:[%s5 + $0x70] sm:$0xff]
      %v3221 = vld [vmem:[%s5 + $0x78] sm:$0xff]
      %v3222 = vld [vmem:[%s5 + $0x80] sm:$0xff]
      %v3223 = vld [vmem:[%s5 + $0x88] sm:$0xff]
      %v3224 = vld [vmem:[%s5 + $0x90] sm:$0xff]
      %v3225 = vld [vmem:[%s5 + $0x98] sm:$0xff]
      %v3226 = vld [vmem:[%s5 + $0xa0] sm:$0xff]
      %v3227 = vld [vmem:[%s5 + $0xa8] sm:$0xff]
      %v3228 = vld [vmem:[%s5 + $0xb0] sm:$0xff]
      %v3229 = vld [vmem:[%s5 + $0xb8] sm:$0xff]
      %v3230 = vld [vmem:[%s5 + $0xc0] sm:$0xff]
      %v3231 = vld [vmem:[%s5 + $0xc8] sm:$0xff]
      %v3232 = vld [vmem:[%s5 + $0xd0] sm:$0xff]
      %v3233 = vld [vmem:[%s5 + $0xd8] sm:$0xff]
      %v3234 = vld [vmem:[%s5 + $0xe0] sm:$0xff]
      %v3235 = vld [vmem:[%s5 + $0xe8] sm:$0xff]
      %v3236 = vld [vmem:[%s5 + $0xf0] sm:$0xff]
      %v3237 = vld [vmem:[%s5 + $0xf8] sm:$0xff]
      %v3238 = vld [vmem:[%s5 + $0x100] sm:$0xff]
      %v3239 = vld [vmem:[%s5 + $0x108] sm:$0xff]
      %v3240 = vld [vmem:[%s5 + $0x110] sm:$0xff]
      %v3241 = vld [vmem:[%s5 + $0x118] sm:$0xff]
      %v3242 = vld [vmem:[%s5 + $0x120] sm:$0xff]
      %v3243 = vld [vmem:[%s5 + $0x128] sm:$0xff]
      %v3244 = vld [vmem:[%s5 + $0x130] sm:$0xff]
      %v3245 = vld [vmem:[%s5 + $0x138] sm:$0xff]
      %v3246 = vld [vmem:[%s5 + $0x140] sm:$0xff]
      %v3247 = vld [vmem:[%s5 + $0x148] sm:$0xff]
      %v3248 = vld [vmem:[%s5 + $0x150] sm:$0xff]
      %v3249 = vld [vmem:[%s5 + $0x158] sm:$0xff]
      %v3250 = vld [vmem:[%s5 + $0x160] sm:$0xff]
      %v3251 = vld [vmem:[%s5 + $0x168] sm:$0xff]
      %v3252 = vld [vmem:[%s5 + $0x170] sm:$0xff]
      %v3253 = vld [vmem:[%s5 + $0x178] sm:$0xff]
      %v3254 = vld [vmem:[%s5 + $0x180] sm:$0xff]
      %v3255 = vld [vmem:[%s5 + $0x188] sm:$0xff]
      %v3256 = vld [vmem:[%s5 + $0x190] sm:$0xff]
      %v3257 = vld [vmem:[%s5 + $0x198] sm:$0xff]
      %v3258 = vld [vmem:[%s5 + $0x1a0] sm:$0xff]
      %v3259 = vld [vmem:[%s5 + $0x1a8] sm:$0xff]
      %v3260 = vld [vmem:[%s5 + $0x1b0] sm:$0xff]
      %v3261 = vld [vmem:[%s5 + $0x1b8] sm:$0xff]
      %v3262 = vld [vmem:[%s5 + $0x1c0] sm:$0xff]
      %v3263 = vld [vmem:[%s5 + $0x1c8] sm:$0xff]
      %v3264 = vld [vmem:[%s5 + $0x1d0] sm:$0xff]
      %v3265 = vld [vmem:[%s5 + $0x1d8] sm:$0xff]
      %v3266 = vld [vmem:[%s5 + $0x1e0] sm:$0xff]
      %v3267 = vld [vmem:[%s5 + $0x1e8] sm:$0xff]
      %v3268 = vld [vmem:[%s5 + $0x1f0] sm:$0xff]
      %v3269 = vld [vmem:[%s5 + $0x1f8] sm:$0xff]
      %v3270 = vld [vmem:[%s5 + $0x200] sm:$0xff]
      %v3271 = vld [vmem:[%s5 + $0x208] sm:$0xff]
      %v3272 = vld [vmem:[%s5 + $0x210] sm:$0xff]
      %v3273 = vld [vmem:[%s5 + $0x218] sm:$0xff]
      %v3274 = vld [vmem:[%s5 + $0x220] sm:$0xff]
      %v3275 = vld [vmem:[%s5 + $0x228] sm:$0xff]
      %v3276 = vld [vmem:[%s5 + $0x230] sm:$0xff]
      %v3277 = vld [vmem:[%s5 + $0x238] sm:$0xff]
      %v3278 = vld [vmem:[%s6] sm:$0x1]
      %v3280 = vperm.slane %v3278, 0
      %3282 = vst [vmem:[#allocation1] ss:$9 sm:$0xff] %v3075
      %s3283 = scalar_lea.vmem [#allocation1], 1
      %3284 = vst [vmem:[%s3283] ss:$9 sm:$0xff] %v3084
      %s3285 = scalar_lea.vmem [#allocation1], 2
      %3286 = vst [vmem:[%s3285] ss:$9 sm:$0xff] %v3093
      %s3287 = scalar_lea.vmem [#allocation1], 3
      %3288 = vst [vmem:[%s3287] ss:$9 sm:$0xff] %v3101
      %s3289 = scalar_lea.vmem [#allocation1], 4
      %3290 = vst [vmem:[%s3289] ss:$9 sm:$0xff] %v3109
      %s3291 = scalar_lea.vmem [#allocation1], 5
      %3292 = vst [vmem:[%s3291] ss:$9 sm:$0xff] %v3113
      %s3293 = scalar_lea.vmem [#allocation1], 6
      %3294 = vst [vmem:[%s3293] ss:$9 sm:$0xff] %v3118
      %s3295 = scalar_lea.vmem [#allocation1], 7
      %3296 = vst [vmem:[%s3295] ss:$9 sm:$0xff] %v3123
      %v3297 = vld [vmem:[#allocation1] sm:$0xff]
      %v3298 = vld [vmem:[#allocation1 + $0x9] sm:$0xff]
      %v3299 = vld [vmem:[#allocation1 + $0x12] sm:$0xff]
      %v3300 = vld [vmem:[#allocation1 + $0x1b] sm:$0xff]
      %v3301 = vld [vmem:[#allocation1 + $0x24] sm:$0xff]
      %3302 = vst [vmem:[#allocation1] ss:$9 sm:$0xff] %v3128
      %3303 = vst [vmem:[%s3283] ss:$9 sm:$0xff] %v3133
      %3304 = vst [vmem:[%s3285] ss:$9 sm:$0xff] %v3137
      %3305 = vst [vmem:[%s3287] ss:$9 sm:$0xff] %v3142
      %3306 = vst [vmem:[%s3289] ss:$9 sm:$0xff] %v3147
      %3307 = vst [vmem:[%s3291] ss:$9 sm:$0xff] %v3152
      %3308 = vst [vmem:[%s3293] ss:$9 sm:$0xff] %v3157
      %3309 = vst [vmem:[%s3295] ss:$9 sm:$0xff] %v3161
      %v3310 = vld [vmem:[#allocation1] sm:$0xff]
      %v3311 = vld [vmem:[#allocation1 + $0x9] sm:$0xff]
      %v3312 = vld [vmem:[#allocation1 + $0x12] sm:$0xff]
      %v3313 = vld [vmem:[#allocation1 + $0x1b] sm:$0xff]
      %v3314 = vld [vmem:[#allocation1 + $0x24] sm:$0xff]
      %3315 = vst [vmem:[#allocation1] ss:$9 sm:$0xff] %v3166
      %3316 = vst [vmem:[%s3283] ss:$9 sm:$0xff] %v3171
      %3317 = vst [vmem:[%s3285] ss:$9 sm:$0xff] %v3176
      %3318 = vst [vmem:[%s3287] ss:$9 sm:$0xff] %v3181
      %3319 = vst [vmem:[%s3289] ss:$9 sm:$0xff] %v3185
      %3320 = vst [vmem:[%s3291] ss:$9 sm:$0xff] %v3190
      %3321 = vst [vmem:[%s3293] ss:$9 sm:$0xff] %v3195
      %3322 = vst [vmem:[%s3295] ss:$9 sm:$0xff] %v3200
      %v3323 = vld [vmem:[#allocation1] sm:$0xff]
      %v3324 = vld [vmem:[#allocation1 + $0x9] sm:$0xff]
      %v3325 = vld [vmem:[#allocation1 + $0x12] sm:$0xff]
      %v3326 = vld [vmem:[#allocation1 + $0x1b] sm:$0xff]
      %v3327 = vld [vmem:[#allocation1 + $0x24] sm:$0xff]
      %3328 = vst [vmem:[#allocation1] ss:$9 sm:$0xff] %v3205
      %v3329 = vld [vmem:[#allocation1] sm:$0xff]
      %v3330 = vld [vmem:[#allocation1 + $0x9] sm:$0xff]
      %v3331 = vld [vmem:[#allocation1 + $0x12] sm:$0xff]
      %v3332 = vld [vmem:[#allocation1 + $0x1b] sm:$0xff]
      %v3333 = vld [vmem:[#allocation1 + $0x24] sm:$0xff]
      %v3350 = vsel %vm3009, %v3301, 0
      %v3352 = vsel %vm3009, %v3314, 0
      %v3354 = vsel %vm3009, %v3327, 0
      %v3356 = vsel %vm3009, %v3333, 0
      %v3358 = vand.u32 %v3221, 4294901760
      %3359 = vmatpush.msra.mxu0 %v3358
      %v3360 = vand.u32 %v3220, 4294901760
      %3361 = vmatpush.msra.mxu0 %v3360
      %v3362 = vand.u32 %v3219, 4294901760
      %3363 = vmatpush.msra.mxu0 %v3362
      %v3364 = vand.u32 %v3218, 4294901760
      %3365 = vmatpush.msra.mxu0 %v3364
      %v3366 = vand.u32 %v3217, 4294901760
      %3367 = vmatpush.msra.mxu0 %v3366
      %v3368 = vand.u32 %v3216, 4294901760
      %3369 = vmatpush.msra.mxu0 %v3368
      %v3370 = vand.u32 %v3215, 4294901760
      %3371 = vmatpush.msra.mxu0 %v3370
      %v3372 = vand.u32 %v3214, 4294901760
      %3373 = vmatpush.msra.mxu0 %v3372
      %v3374 = vand.u32 %v3213, 4294901760
      %3375 = vmatpush.msra.mxu0 %v3374
      %v3376 = vand.u32 %v3212, 4294901760
      %3377 = vmatpush.msra.mxu0 %v3376
      %v3378 = vand.u32 %v3211, 4294901760
      %3379 = vmatpush.msra.mxu0 %v3378
      %v3380 = vand.u32 %v3210, 4294901760
      %3381 = vmatpush.msra.mxu0 %v3380
      %v3382 = vand.u32 %v3209, 4294901760
      %3383 = vmatpush.msra.mxu0 %v3382
      %v3384 = vand.u32 %v3208, 4294901760
      %3385 = vmatpush.msra.mxu0 %v3384
      %v3386 = vand.u32 %v3207, 4294901760
      %3387 = vmatpush.msra.mxu0 %v3386
      %v3388 = vand.u32 %v3206, 4294901760
      %3389 = vmatpush.msra.mxu0 %v3388
      %v3390 = vand.u32 %v3297, 4294901760
      %v3391 = vsub.f32 %v3297, %v3390
      %v3392 = vand.u32 %v3391, 4294901760
      %v3393 = vsub.f32 %v3391, %v3392
      %v3394 = vand.u32 %v3393, 4294901760
      %3395 = vmatmul.f32.gmra.mxu0 %v3394
      %v3396 = vpop.f32.mrf.mxu0
      %v3397 = vadd.f32 %v3280, %v3396
      %v3398 = vand.u32 %v3310, 4294901760
      %v3399 = vsub.f32 %v3310, %v3398
      %v3400 = vand.u32 %v3399, 4294901760
      %v3401 = vsub.f32 %v3399, %v3400
      %v3402 = vand.u32 %v3401, 4294901760
      %3403 = vmatmul.f32.gmra.mxu0 %v3402
      %v3404 = vpop.f32.mrf.mxu0
      %v3405 = vadd.f32 %v3280, %v3404
      %v3406 = vand.u32 %v3323, 4294901760
      %v3407 = vsub.f32 %v3323, %v3406
      %v3408 = vand.u32 %v3407, 4294901760
      %v3409 = vsub.f32 %v3407, %v3408
      %v3410 = vand.u32 %v3409, 4294901760
      %3411 = vmatmul.f32.gmra.mxu0 %v3410
      %v3412 = vpop.f32.mrf.mxu0
      %v3413 = vadd.f32 %v3280, %v3412
      %v3414 = vand.u32 %v3329, 4294901760
      %v3415 = vsub.f32 %v3329, %v3414
      %v3416 = vand.u32 %v3415, 4294901760
      %v3417 = vsub.f32 %v3415, %v3416
      %v3418 = vand.u32 %v3417, 4294901760
      %3419 = vmatmul.f32.gmra.mxu0 %v3418
      %v3420 = vpop.f32.mrf.mxu0
      %v3421 = vadd.f32 %v3280, %v3420
      %3422 = vdwg.mxu0
      %v3423 = vand.u32 %v3221, 4294901760
      %v3424 = vsub.f32 %v3221, %v3423
      %v3425 = vand.u32 %v3424, 4294901760
      %v3426 = vsub.f32 %v3424, %v3425
      %v3427 = vand.u32 %v3426, 4294901760
      %3428 = vmatpush.msra.mxu0 %v3427
      %v3429 = vand.u32 %v3220, 4294901760
      %v3430 = vsub.f32 %v3220, %v3429
      %v3431 = vand.u32 %v3430, 4294901760
      %v3432 = vsub.f32 %v3430, %v3431
      %v3433 = vand.u32 %v3432, 4294901760
      %3434 = vmatpush.msra.mxu0 %v3433
      %v3435 = vand.u32 %v3219, 4294901760
      %v3436 = vsub.f32 %v3219, %v3435
      %v3437 = vand.u32 %v3436, 4294901760
      %v3438 = vsub.f32 %v3436, %v3437
      %v3439 = vand.u32 %v3438, 4294901760
      %3440 = vmatpush.msra.mxu0 %v3439
      %v3441 = vand.u32 %v3218, 4294901760
      %v3442 = vsub.f32 %v3218, %v3441
      %v3443 = vand.u32 %v3442, 4294901760
      %v3444 = vsub.f32 %v3442, %v3443
      %v3445 = vand.u32 %v3444, 4294901760
      %3446 = vmatpush.msra.mxu0 %v3445
      %v3447 = vand.u32 %v3217, 4294901760
      %v3448 = vsub.f32 %v3217, %v3447
      %v3449 = vand.u32 %v3448, 4294901760
      %v3450 = vsub.f32 %v3448, %v3449
      %v3451 = vand.u32 %v3450, 4294901760
      %3452 = vmatpush.msra.mxu0 %v3451
      %v3453 = vand.u32 %v3216, 4294901760
      %v3454 = vsub.f32 %v3216, %v3453
      %v3455 = vand.u32 %v3454, 4294901760
      %v3456 = vsub.f32 %v3454, %v3455
      %v3457 = vand.u32 %v3456, 4294901760
      %3458 = vmatpush.msra.mxu0 %v3457
      %v3459 = vand.u32 %v3215, 4294901760
      %v3460 = vsub.f32 %v3215, %v3459
      %v3461 = vand.u32 %v3460, 4294901760
      %v3462 = vsub.f32 %v3460, %v3461
      %v3463 = vand.u32 %v3462, 4294901760
      %3464 = vmatpush.msra.mxu0 %v3463
      %v3465 = vand.u32 %v3214, 4294901760
      %v3466 = vsub.f32 %v3214, %v3465
      %v3467 = vand.u32 %v3466, 4294901760
      %v3468 = vsub.f32 %v3466, %v3467
      %v3469 = vand.u32 %v3468, 4294901760
      %3470 = vmatpush.msra.mxu0 %v3469
      %v3471 = vand.u32 %v3213, 4294901760
      %v3472 = vsub.f32 %v3213, %v3471
      %v3473 = vand.u32 %v3472, 4294901760
      %v3474 = vsub.f32 %v3472, %v3473
      %v3475 = vand.u32 %v3474, 4294901760
      %3476 = vmatpush.msra.mxu0 %v3475
      %v3477 = vand.u32 %v3212, 4294901760
      %v3478 = vsub.f32 %v3212, %v3477
      %v3479 = vand.u32 %v3478, 4294901760
      %v3480 = vsub.f32 %v3478, %v3479
      %v3481 = vand.u32 %v3480, 4294901760
      %3482 = vmatpush.msra.mxu0 %v3481
      %v3483 = vand.u32 %v3211, 4294901760
      %v3484 = vsub.f32 %v3211, %v3483
      %v3485 = vand.u32 %v3484, 4294901760
      %v3486 = vsub.f32 %v3484, %v3485
      %v3487 = vand.u32 %v3486, 4294901760
      %3488 = vmatpush.msra.mxu0 %v3487
      %v3489 = vand.u32 %v3210, 4294901760
      %v3490 = vsub.f32 %v3210, %v3489
      %v3491 = vand.u32 %v3490, 4294901760
      %v3492 = vsub.f32 %v3490, %v3491
      %v3493 = vand.u32 %v3492, 4294901760
      %3494 = vmatpush.msra.mxu0 %v3493
      %v3495 = vand.u32 %v3209, 4294901760
      %v3496 = vsub.f32 %v3209, %v3495
      %v3497 = vand.u32 %v3496, 4294901760
      %v3498 = vsub.f32 %v3496, %v3497
      %v3499 = vand.u32 %v3498, 4294901760
      %3500 = vmatpush.msra.mxu0 %v3499
      %v3501 = vand.u32 %v3208, 4294901760
      %v3502 = vsub.f32 %v3208, %v3501
      %v3503 = vand.u32 %v3502, 4294901760
      %v3504 = vsub.f32 %v3502, %v3503
      %v3505 = vand.u32 %v3504, 4294901760
      %3506 = vmatpush.msra.mxu0 %v3505
      %v3507 = vand.u32 %v3207, 4294901760
      %v3508 = vsub.f32 %v3207, %v3507
      %v3509 = vand.u32 %v3508, 4294901760
      %v3510 = vsub.f32 %v3508, %v3509
      %v3511 = vand.u32 %v3510, 4294901760
      %3512 = vmatpush.msra.mxu0 %v3511
      %v3513 = vand.u32 %v3206, 4294901760
      %v3514 = vsub.f32 %v3206, %v3513
      %v3515 = vand.u32 %v3514, 4294901760
      %v3516 = vsub.f32 %v3514, %v3515
      %v3517 = vand.u32 %v3516, 4294901760
      %3518 = vmatpush.msra.mxu0 %v3517
      %v3519 = vand.u32 %v3297, 4294901760
      %3520 = vmatmul.f32.gmra.mxu0 %v3519
      %v3521 = vpop.f32.mrf.mxu0
      %v3522 = vadd.f32 %v3397, %v3521
      %v3523 = vand.u32 %v3310, 4294901760
      %3524 = vmatmul.f32.gmra.mxu0 %v3523
      %v3525 = vpop.f32.mrf.mxu0
      %v3526 = vadd.f32 %v3405, %v3525
      %v3527 = vand.u32 %v3323, 4294901760
      %3528 = vmatmul.f32.gmra.mxu0 %v3527
      %v3529 = vpop.f32.mrf.mxu0
      %v3530 = vadd.f32 %v3413, %v3529
      %v3531 = vand.u32 %v3329, 4294901760
      %3532 = vmatmul.f32.gmra.mxu0 %v3531
      %v3533 = vpop.f32.mrf.mxu0
      %v3534 = vadd.f32 %v3421, %v3533
      %3535 = vdwg.mxu0
      %v3536 = vand.u32 %v3221, 4294901760
      %v3537 = vsub.f32 %v3221, %v3536
      %3538 = vmatpush.msra.mxu0 %v3537
      %v3539 = vand.u32 %v3220, 4294901760
      %v3540 = vsub.f32 %v3220, %v3539
      %3541 = vmatpush.msra.mxu0 %v3540
      %v3542 = vand.u32 %v3219, 4294901760
      %v3543 = vsub.f32 %v3219, %v3542
      %3544 = vmatpush.msra.mxu0 %v3543
      %v3545 = vand.u32 %v3218, 4294901760
      %v3546 = vsub.f32 %v3218, %v3545
      %3547 = vmatpush.msra.mxu0 %v3546
      %v3548 = vand.u32 %v3217, 4294901760
      %v3549 = vsub.f32 %v3217, %v3548
      %3550 = vmatpush.msra.mxu0 %v3549
      %v3551 = vand.u32 %v3216, 4294901760
      %v3552 = vsub.f32 %v3216, %v3551
      %3553 = vmatpush.msra.mxu0 %v3552
      %v3554 = vand.u32 %v3215, 4294901760
      %v3555 = vsub.f32 %v3215, %v3554
      %3556 = vmatpush.msra.mxu0 %v3555
      %v3557 = vand.u32 %v3214, 4294901760
      %v3558 = vsub.f32 %v3214, %v3557
      %3559 = vmatpush.msra.mxu0 %v3558
      %v3560 = vand.u32 %v3213, 4294901760
      %v3561 = vsub.f32 %v3213, %v3560
      %3562 = vmatpush.msra.mxu0 %v3561
      %v3563 = vand.u32 %v3212, 4294901760
      %v3564 = vsub.f32 %v3212, %v3563
      %3565 = vmatpush.msra.mxu0 %v3564
      %v3566 = vand.u32 %v3211, 4294901760
      %v3567 = vsub.f32 %v3211, %v3566
      %3568 = vmatpush.msra.mxu0 %v3567
      %v3569 = vand.u32 %v3210, 4294901760
      %v3570 = vsub.f32 %v3210, %v3569
      %3571 = vmatpush.msra.mxu0 %v3570
      %v3572 = vand.u32 %v3209, 4294901760
      %v3573 = vsub.f32 %v3209, %v3572
      %3574 = vmatpush.msra.mxu0 %v3573
      %v3575 = vand.u32 %v3208, 4294901760
      %v3576 = vsub.f32 %v3208, %v3575
      %3577 = vmatpush.msra.mxu0 %v3576
      %v3578 = vand.u32 %v3207, 4294901760
      %v3579 = vsub.f32 %v3207, %v3578
      %3580 = vmatpush.msra.mxu0 %v3579
      %v3581 = vand.u32 %v3206, 4294901760
      %v3582 = vsub.f32 %v3206, %v3581
      %3583 = vmatpush.msra.mxu0 %v3582
      %v3584 = vand.u32 %v3297, 4294901760
      %v3585 = vsub.f32 %v3297, %v3584
      %3586 = vmatmul.f32.gmra.mxu0 %v3585
      %v3587 = vpop.f32.mrf.mxu0
      %v3588 = vadd.f32 %v3522, %v3587
      %v3589 = vand.u32 %v3310, 4294901760
      %v3590 = vsub.f32 %v3310, %v3589
      %3591 = vmatmul.f32.gmra.mxu0 %v3590
      %v3592 = vpop.f32.mrf.mxu0
      %v3593 = vadd.f32 %v3526, %v3592
      %v3594 = vand.u32 %v3323, 4294901760
      %v3595 = vsub.f32 %v3323, %v3594
      %3596 = vmatmul.f32.gmra.mxu0 %v3595
      %v3597 = vpop.f32.mrf.mxu0
      %v3598 = vadd.f32 %v3530, %v3597
      %v3599 = vand.u32 %v3329, 4294901760
      %v3600 = vsub.f32 %v3329, %v3599
      %3601 = vmatmul.f32.gmra.mxu0 %v3600
      %v3602 = vpop.f32.mrf.mxu0
      %v3603 = vadd.f32 %v3534, %v3602
      %3604 = vdwg.mxu0
      %v3605 = vand.u32 %v3221, 4294901760
      %3606 = vmatpush.msra.mxu0 %v3605
      %v3607 = vand.u32 %v3220, 4294901760
      %3608 = vmatpush.msra.mxu0 %v3607
      %v3609 = vand.u32 %v3219, 4294901760
      %3610 = vmatpush.msra.mxu0 %v3609
      %v3611 = vand.u32 %v3218, 4294901760
      %3612 = vmatpush.msra.mxu0 %v3611
      %v3613 = vand.u32 %v3217, 4294901760
      %3614 = vmatpush.msra.mxu0 %v3613
      %v3615 = vand.u32 %v3216, 4294901760
      %3616 = vmatpush.msra.mxu0 %v3615
      %v3617 = vand.u32 %v3215, 4294901760
      %3618 = vmatpush.msra.mxu0 %v3617
      %v3619 = vand.u32 %v3214, 4294901760
      %3620 = vmatpush.msra.mxu0 %v3619
      %v3621 = vand.u32 %v3213, 4294901760
      %3622 = vmatpush.msra.mxu0 %v3621
      %v3623 = vand.u32 %v3212, 4294901760
      %3624 = vmatpush.msra.mxu0 %v3623
      %v3625 = vand.u32 %v3211, 4294901760
      %3626 = vmatpush.msra.mxu0 %v3625
      %v3627 = vand.u32 %v3210, 4294901760
      %3628 = vmatpush.msra.mxu0 %v3627
      %v3629 = vand.u32 %v3209, 4294901760
      %3630 = vmatpush.msra.mxu0 %v3629
      %v3631 = vand.u32 %v3208, 4294901760
      %3632 = vmatpush.msra.mxu0 %v3631
      %v3633 = vand.u32 %v3207, 4294901760
      %3634 = vmatpush.msra.mxu0 %v3633
      %v3635 = vand.u32 %v3206, 4294901760
      %3636 = vmatpush.msra.mxu0 %v3635
      %v3637 = vand.u32 %v3297, 4294901760
      %v3638 = vsub.f32 %v3297, %v3637
      %v3639 = vand.u32 %v3638, 4294901760
      %3640 = vmatmul.f32.gmra.mxu0 %v3639
      %v3641 = vpop.f32.mrf.mxu0
      %v3642 = vadd.f32 %v3588, %v3641
      %v3643 = vand.u32 %v3310, 4294901760
      %v3644 = vsub.f32 %v3310, %v3643
      %v3645 = vand.u32 %v3644, 4294901760
      %3646 = vmatmul.f32.gmra.mxu0 %v3645
      %v3647 = vpop.f32.mrf.mxu0
      %v3648 = vadd.f32 %v3593, %v3647
      %v3649 = vand.u32 %v3323, 4294901760
      %v3650 = vsub.f32 %v3323, %v3649
      %v3651 = vand.u32 %v3650, 4294901760
      %3652 = vmatmul.f32.gmra.mxu0 %v3651
      %v3653 = vpop.f32.mrf.mxu0
      %v3654 = vadd.f32 %v3598, %v3653
      %v3655 = vand.u32 %v3329, 4294901760
      %v3656 = vsub.f32 %v3329, %v3655
      %v3657 = vand.u32 %v3656, 4294901760
      %3658 = vmatmul.f32.gmra.mxu0 %v3657
      %v3659 = vpop.f32.mrf.mxu0
      %v3660 = vadd.f32 %v3603, %v3659
      %3661 = vdwg.mxu0
      %v3662 = vand.u32 %v3221, 4294901760
      %v3663 = vsub.f32 %v3221, %v3662
      %v3664 = vand.u32 %v3663, 4294901760
      %3665 = vmatpush.msra.mxu0 %v3664
      %v3666 = vand.u32 %v3220, 4294901760
      %v3667 = vsub.f32 %v3220, %v3666
      %v3668 = vand.u32 %v3667, 4294901760
      %3669 = vmatpush.msra.mxu0 %v3668
      %v3670 = vand.u32 %v3219, 4294901760
      %v3671 = vsub.f32 %v3219, %v3670
      %v3672 = vand.u32 %v3671, 4294901760
      %3673 = vmatpush.msra.mxu0 %v3672
      %v3674 = vand.u32 %v3218, 4294901760
      %v3675 = vsub.f32 %v3218, %v3674
      %v3676 = vand.u32 %v3675, 4294901760
      %3677 = vmatpush.msra.mxu0 %v3676
      %v3678 = vand.u32 %v3217, 4294901760
      %v3679 = vsub.f32 %v3217, %v3678
      %v3680 = vand.u32 %v3679, 4294901760
      %3681 = vmatpush.msra.mxu0 %v3680
      %v3682 = vand.u32 %v3216, 4294901760
      %v3683 = vsub.f32 %v3216, %v3682
      %v3684 = vand.u32 %v3683, 4294901760
      %3685 = vmatpush.msra.mxu0 %v3684
      %v3686 = vand.u32 %v3215, 4294901760
      %v3687 = vsub.f32 %v3215, %v3686
      %v3688 = vand.u32 %v3687, 4294901760
      %3689 = vmatpush.msra.mxu0 %v3688
      %v3690 = vand.u32 %v3214, 4294901760
      %v3691 = vsub.f32 %v3214, %v3690
      %v3692 = vand.u32 %v3691, 4294901760
      %3693 = vmatpush.msra.mxu0 %v3692
      %v3694 = vand.u32 %v3213, 4294901760
      %v3695 = vsub.f32 %v3213, %v3694
      %v3696 = vand.u32 %v3695, 4294901760
      %3697 = vmatpush.msra.mxu0 %v3696
      %v3698 = vand.u32 %v3212, 4294901760
      %v3699 = vsub.f32 %v3212, %v3698
      %v3700 = vand.u32 %v3699, 4294901760
      %3701 = vmatpush.msra.mxu0 %v3700
      %v3702 = vand.u32 %v3211, 4294901760
      %v3703 = vsub.f32 %v3211, %v3702
      %v3704 = vand.u32 %v3703, 4294901760
      %3705 = vmatpush.msra.mxu0 %v3704
      %v3706 = vand.u32 %v3210, 4294901760
      %v3707 = vsub.f32 %v3210, %v3706
      %v3708 = vand.u32 %v3707, 4294901760
      %3709 = vmatpush.msra.mxu0 %v3708
      %v3710 = vand.u32 %v3209, 4294901760
      %v3711 = vsub.f32 %v3209, %v3710
      %v3712 = vand.u32 %v3711, 4294901760
      %3713 = vmatpush.msra.mxu0 %v3712
      %v3714 = vand.u32 %v3208, 4294901760
      %v3715 = vsub.f32 %v3208, %v3714
      %v3716 = vand.u32 %v3715, 4294901760
      %3717 = vmatpush.msra.mxu0 %v3716
      %v3718 = vand.u32 %v3207, 4294901760
      %v3719 = vsub.f32 %v3207, %v3718
      %v3720 = vand.u32 %v3719, 4294901760
      %3721 = vmatpush.msra.mxu0 %v3720
      %v3722 = vand.u32 %v3206, 4294901760
      %v3723 = vsub.f32 %v3206, %v3722
      %v3724 = vand.u32 %v3723, 4294901760
      %3725 = vmatpush.msra.mxu0 %v3724
      %v3726 = vand.u32 %v3297, 4294901760
      %3727 = vmatmul.f32.gmra.mxu0 %v3726
      %v3728 = vpop.f32.mrf.mxu0
      %v3729 = vadd.f32 %v3642, %v3728
      %v3730 = vand.u32 %v3310, 4294901760
      %3731 = vmatmul.f32.gmra.mxu0 %v3730
      %v3732 = vpop.f32.mrf.mxu0
      %v3733 = vadd.f32 %v3648, %v3732
      %v3734 = vand.u32 %v3323, 4294901760
      %3735 = vmatmul.f32.gmra.mxu0 %v3734
      %v3736 = vpop.f32.mrf.mxu0
      %v3737 = vadd.f32 %v3654, %v3736
      %v3738 = vand.u32 %v3329, 4294901760
      %3739 = vmatmul.f32.gmra.mxu0 %v3738
      %v3740 = vpop.f32.mrf.mxu0
      %v3741 = vadd.f32 %v3660, %v3740
      %3742 = vdwg.mxu0
      %v3743 = vand.u32 %v3221, 4294901760
      %3744 = vmatpush.msra.mxu0 %v3743
      %v3745 = vand.u32 %v3220, 4294901760
      %3746 = vmatpush.msra.mxu0 %v3745
      %v3747 = vand.u32 %v3219, 4294901760
      %3748 = vmatpush.msra.mxu0 %v3747
      %v3749 = vand.u32 %v3218, 4294901760
      %3750 = vmatpush.msra.mxu0 %v3749
      %v3751 = vand.u32 %v3217, 4294901760
      %3752 = vmatpush.msra.mxu0 %v3751
      %v3753 = vand.u32 %v3216, 4294901760
      %3754 = vmatpush.msra.mxu0 %v3753
      %v3755 = vand.u32 %v3215, 4294901760
      %3756 = vmatpush.msra.mxu0 %v3755
      %v3757 = vand.u32 %v3214, 4294901760
      %3758 = vmatpush.msra.mxu0 %v3757
      %v3759 = vand.u32 %v3213, 4294901760
      %3760 = vmatpush.msra.mxu0 %v3759
      %v3761 = vand.u32 %v3212, 4294901760
      %3762 = vmatpush.msra.mxu0 %v3761
      %v3763 = vand.u32 %v3211, 4294901760
      %3764 = vmatpush.msra.mxu0 %v3763
      %v3765 = vand.u32 %v3210, 4294901760
      %3766 = vmatpush.msra.mxu0 %v3765
      %v3767 = vand.u32 %v3209, 4294901760
      %3768 = vmatpush.msra.mxu0 %v3767
      %v3769 = vand.u32 %v3208, 4294901760
      %3770 = vmatpush.msra.mxu0 %v3769
      %v3771 = vand.u32 %v3207, 4294901760
      %3772 = vmatpush.msra.mxu0 %v3771
      %v3773 = vand.u32 %v3206, 4294901760
      %3774 = vmatpush.msra.mxu0 %v3773
      %v3775 = vand.u32 %v3297, 4294901760
      %3776 = vmatmul.f32.gmra.mxu0 %v3775
      %v3777 = vpop.f32.mrf.mxu0
      %v3778 = vadd.f32 %v3729, %v3777
      %v3779 = vand.u32 %v3310, 4294901760
      %3780 = vmatmul.f32.gmra.mxu0 %v3779
      %v3781 = vpop.f32.mrf.mxu0
      %v3782 = vadd.f32 %v3733, %v3781
      %v3783 = vand.u32 %v3323, 4294901760
      %3784 = vmatmul.f32.gmra.mxu0 %v3783
      %v3785 = vpop.f32.mrf.mxu0
      %v3786 = vadd.f32 %v3737, %v3785
      %v3787 = vand.u32 %v3329, 4294901760
      %3788 = vmatmul.f32.gmra.mxu0 %v3787
      %v3789 = vpop.f32.mrf.mxu0
      %v3790 = vadd.f32 %v3741, %v3789
      %3791 = vdwg.mxu0
      %v3792 = vand.u32 %v3237, 4294901760
      %3793 = vmatpush.msra.mxu0 %v3792
      %v3794 = vand.u32 %v3236, 4294901760
      %3795 = vmatpush.msra.mxu0 %v3794
      %v3796 = vand.u32 %v3235, 4294901760
      %3797 = vmatpush.msra.mxu0 %v3796
      %v3798 = vand.u32 %v3234, 4294901760
      %3799 = vmatpush.msra.mxu0 %v3798
      %v3800 = vand.u32 %v3233, 4294901760
      %3801 = vmatpush.msra.mxu0 %v3800
      %v3802 = vand.u32 %v3232, 4294901760
      %3803 = vmatpush.msra.mxu0 %v3802
      %v3804 = vand.u32 %v3231, 4294901760
      %3805 = vmatpush.msra.mxu0 %v3804
      %v3806 = vand.u32 %v3230, 4294901760
      %3807 = vmatpush.msra.mxu0 %v3806
      %v3808 = vand.u32 %v3229, 4294901760
      %3809 = vmatpush.msra.mxu0 %v3808
      %v3810 = vand.u32 %v3228, 4294901760
      %3811 = vmatpush.msra.mxu0 %v3810
      %v3812 = vand.u32 %v3227, 4294901760
      %3813 = vmatpush.msra.mxu0 %v3812
      %v3814 = vand.u32 %v3226, 4294901760
      %3815 = vmatpush.msra.mxu0 %v3814
      %v3816 = vand.u32 %v3225, 4294901760
      %3817 = vmatpush.msra.mxu0 %v3816
      %v3818 = vand.u32 %v3224, 4294901760
      %3819 = vmatpush.msra.mxu0 %v3818
      %v3820 = vand.u32 %v3223, 4294901760
      %3821 = vmatpush.msra.mxu0 %v3820
      %v3822 = vand.u32 %v3222, 4294901760
      %3823 = vmatpush.msra.mxu0 %v3822
      %v3824 = vand.u32 %v3298, 4294901760
      %v3825 = vsub.f32 %v3298, %v3824
      %v3826 = vand.u32 %v3825, 4294901760
      %v3827 = vsub.f32 %v3825, %v3826
      %v3828 = vand.u32 %v3827, 4294901760
      %3829 = vmatmul.f32.gmra.mxu0 %v3828
      %v3830 = vpop.f32.mrf.mxu0
      %v3831 = vadd.f32 %v3778, %v3830
      %v3832 = vand.u32 %v3311, 4294901760
      %v3833 = vsub.f32 %v3311, %v3832
      %v3834 = vand.u32 %v3833, 4294901760
      %v3835 = vsub.f32 %v3833, %v3834
      %v3836 = vand.u32 %v3835, 4294901760
      %3837 = vmatmul.f32.gmra.mxu0 %v3836
      %v3838 = vpop.f32.mrf.mxu0
      %v3839 = vadd.f32 %v3782, %v3838
      %v3840 = vand.u32 %v3324, 4294901760
      %v3841 = vsub.f32 %v3324, %v3840
      %v3842 = vand.u32 %v3841, 4294901760
      %v3843 = vsub.f32 %v3841, %v3842
      %v3844 = vand.u32 %v3843, 4294901760
      %3845 = vmatmul.f32.gmra.mxu0 %v3844
      %v3846 = vpop.f32.mrf.mxu0
      %v3847 = vadd.f32 %v3786, %v3846
      %v3848 = vand.u32 %v3330, 4294901760
      %v3849 = vsub.f32 %v3330, %v3848
      %v3850 = vand.u32 %v3849, 4294901760
      %v3851 = vsub.f32 %v3849, %v3850
      %v3852 = vand.u32 %v3851, 4294901760
      %3853 = vmatmul.f32.gmra.mxu0 %v3852
      %v3854 = vpop.f32.mrf.mxu0
      %v3855 = vadd.f32 %v3790, %v3854
      %3856 = vdwg.mxu0
      %v3857 = vand.u32 %v3237, 4294901760
      %v3858 = vsub.f32 %v3237, %v3857
      %v3859 = vand.u32 %v3858, 4294901760
      %v3860 = vsub.f32 %v3858, %v3859
      %v3861 = vand.u32 %v3860, 4294901760
      %3862 = vmatpush.msra.mxu0 %v3861
      %v3863 = vand.u32 %v3236, 4294901760
      %v3864 = vsub.f32 %v3236, %v3863
      %v3865 = vand.u32 %v3864, 4294901760
      %v3866 = vsub.f32 %v3864, %v3865
      %v3867 = vand.u32 %v3866, 4294901760
      %3868 = vmatpush.msra.mxu0 %v3867
      %v3869 = vand.u32 %v3235, 4294901760
      %v3870 = vsub.f32 %v3235, %v3869
      %v3871 = vand.u32 %v3870, 4294901760
      %v3872 = vsub.f32 %v3870, %v3871
      %v3873 = vand.u32 %v3872, 4294901760
      %3874 = vmatpush.msra.mxu0 %v3873
      %v3875 = vand.u32 %v3234, 4294901760
      %v3876 = vsub.f32 %v3234, %v3875
      %v3877 = vand.u32 %v3876, 4294901760
      %v3878 = vsub.f32 %v3876, %v3877
      %v3879 = vand.u32 %v3878, 4294901760
      %3880 = vmatpush.msra.mxu0 %v3879
      %v3881 = vand.u32 %v3233, 4294901760
      %v3882 = vsub.f32 %v3233, %v3881
      %v3883 = vand.u32 %v3882, 4294901760
      %v3884 = vsub.f32 %v3882, %v3883
      %v3885 = vand.u32 %v3884, 4294901760
      %3886 = vmatpush.msra.mxu0 %v3885
      %v3887 = vand.u32 %v3232, 4294901760
      %v3888 = vsub.f32 %v3232, %v3887
      %v3889 = vand.u32 %v3888, 4294901760
      %v3890 = vsub.f32 %v3888, %v3889
      %v3891 = vand.u32 %v3890, 4294901760
      %3892 = vmatpush.msra.mxu0 %v3891
      %v3893 = vand.u32 %v3231, 4294901760
      %v3894 = vsub.f32 %v3231, %v3893
      %v3895 = vand.u32 %v3894, 4294901760
      %v3896 = vsub.f32 %v3894, %v3895
      %v3897 = vand.u32 %v3896, 4294901760
      %3898 = vmatpush.msra.mxu0 %v3897
      %v3899 = vand.u32 %v3230, 4294901760
      %v3900 = vsub.f32 %v3230, %v3899
      %v3901 = vand.u32 %v3900, 4294901760
      %v3902 = vsub.f32 %v3900, %v3901
      %v3903 = vand.u32 %v3902, 4294901760
      %3904 = vmatpush.msra.mxu0 %v3903
      %v3905 = vand.u32 %v3229, 4294901760
      %v3906 = vsub.f32 %v3229, %v3905
      %v3907 = vand.u32 %v3906, 4294901760
      %v3908 = vsub.f32 %v3906, %v3907
      %v3909 = vand.u32 %v3908, 4294901760
      %3910 = vmatpush.msra.mxu0 %v3909
      %v3911 = vand.u32 %v3228, 4294901760
      %v3912 = vsub.f32 %v3228, %v3911
      %v3913 = vand.u32 %v3912, 4294901760
      %v3914 = vsub.f32 %v3912, %v3913
      %v3915 = vand.u32 %v3914, 4294901760
      %3916 = vmatpush.msra.mxu0 %v3915
      %v3917 = vand.u32 %v3227, 4294901760
      %v3918 = vsub.f32 %v3227, %v3917
      %v3919 = vand.u32 %v3918, 4294901760
      %v3920 = vsub.f32 %v3918, %v3919
      %v3921 = vand.u32 %v3920, 4294901760
      %3922 = vmatpush.msra.mxu0 %v3921
      %v3923 = vand.u32 %v3226, 4294901760
      %v3924 = vsub.f32 %v3226, %v3923
      %v3925 = vand.u32 %v3924, 4294901760
      %v3926 = vsub.f32 %v3924, %v3925
      %v3927 = vand.u32 %v3926, 4294901760
      %3928 = vmatpush.msra.mxu0 %v3927
      %v3929 = vand.u32 %v3225, 4294901760
      %v3930 = vsub.f32 %v3225, %v3929
      %v3931 = vand.u32 %v3930, 4294901760
      %v3932 = vsub.f32 %v3930, %v3931
      %v3933 = vand.u32 %v3932, 4294901760
      %3934 = vmatpush.msra.mxu0 %v3933
      %v3935 = vand.u32 %v3224, 4294901760
      %v3936 = vsub.f32 %v3224, %v3935
      %v3937 = vand.u32 %v3936, 4294901760
      %v3938 = vsub.f32 %v3936, %v3937
      %v3939 = vand.u32 %v3938, 4294901760
      %3940 = vmatpush.msra.mxu0 %v3939
      %v3941 = vand.u32 %v3223, 4294901760
      %v3942 = vsub.f32 %v3223, %v3941
      %v3943 = vand.u32 %v3942, 4294901760
      %v3944 = vsub.f32 %v3942, %v3943
      %v3945 = vand.u32 %v3944, 4294901760
      %3946 = vmatpush.msra.mxu0 %v3945
      %v3947 = vand.u32 %v3222, 4294901760
      %v3948 = vsub.f32 %v3222, %v3947
      %v3949 = vand.u32 %v3948, 4294901760
      %v3950 = vsub.f32 %v3948, %v3949
      %v3951 = vand.u32 %v3950, 4294901760
      %3952 = vmatpush.msra.mxu0 %v3951
      %v3953 = vand.u32 %v3298, 4294901760
      %3954 = vmatmul.f32.gmra.mxu0 %v3953
      %v3955 = vpop.f32.mrf.mxu0
      %v3956 = vadd.f32 %v3831, %v3955
      %v3957 = vand.u32 %v3311, 4294901760
      %3958 = vmatmul.f32.gmra.mxu0 %v3957
      %v3959 = vpop.f32.mrf.mxu0
      %v3960 = vadd.f32 %v3839, %v3959
      %v3961 = vand.u32 %v3324, 4294901760
      %3962 = vmatmul.f32.gmra.mxu0 %v3961
      %v3963 = vpop.f32.mrf.mxu0
      %v3964 = vadd.f32 %v3847, %v3963
      %v3965 = vand.u32 %v3330, 4294901760
      %3966 = vmatmul.f32.gmra.mxu0 %v3965
      %v3967 = vpop.f32.mrf.mxu0
      %v3968 = vadd.f32 %v3855, %v3967
      %3969 = vdwg.mxu0
      %v3970 = vand.u32 %v3237, 4294901760
      %v3971 = vsub.f32 %v3237, %v3970
      %3972 = vmatpush.msra.mxu0 %v3971
      %v3973 = vand.u32 %v3236, 4294901760
      %v3974 = vsub.f32 %v3236, %v3973
      %3975 = vmatpush.msra.mxu0 %v3974
      %v3976 = vand.u32 %v3235, 4294901760
      %v3977 = vsub.f32 %v3235, %v3976
      %3978 = vmatpush.msra.mxu0 %v3977
      %v3979 = vand.u32 %v3234, 4294901760
      %v3980 = vsub.f32 %v3234, %v3979
      %3981 = vmatpush.msra.mxu0 %v3980
      %v3982 = vand.u32 %v3233, 4294901760
      %v3983 = vsub.f32 %v3233, %v3982
      %3984 = vmatpush.msra.mxu0 %v3983
      %v3985 = vand.u32 %v3232, 4294901760
      %v3986 = vsub.f32 %v3232, %v3985
      %3987 = vmatpush.msra.mxu0 %v3986
      %v3988 = vand.u32 %v3231, 4294901760
      %v3989 = vsub.f32 %v3231, %v3988
      %3990 = vmatpush.msra.mxu0 %v3989
      %v3991 = vand.u32 %v3230, 4294901760
      %v3992 = vsub.f32 %v3230, %v3991
      %3993 = vmatpush.msra.mxu0 %v3992
      %v3994 = vand.u32 %v3229, 4294901760
      %v3995 = vsub.f32 %v3229, %v3994
      %3996 = vmatpush.msra.mxu0 %v3995
      %v3997 = vand.u32 %v3228, 4294901760
      %v3998 = vsub.f32 %v3228, %v3997
      %3999 = vmatpush.msra.mxu0 %v3998
      %v4000 = vand.u32 %v3227, 4294901760
      %v4001 = vsub.f32 %v3227, %v4000
      %4002 = vmatpush.msra.mxu0 %v4001
      %v4003 = vand.u32 %v3226, 4294901760
      %v4004 = vsub.f32 %v3226, %v4003
      %4005 = vmatpush.msra.mxu0 %v4004
      %v4006 = vand.u32 %v3225, 4294901760
      %v4007 = vsub.f32 %v3225, %v4006
      %4008 = vmatpush.msra.mxu0 %v4007
      %v4009 = vand.u32 %v3224, 4294901760
      %v4010 = vsub.f32 %v3224, %v4009
      %4011 = vmatpush.msra.mxu0 %v4010
      %v4012 = vand.u32 %v3223, 4294901760
      %v4013 = vsub.f32 %v3223, %v4012
      %4014 = vmatpush.msra.mxu0 %v4013
      %v4015 = vand.u32 %v3222, 4294901760
      %v4016 = vsub.f32 %v3222, %v4015
      %4017 = vmatpush.msra.mxu0 %v4016
      %v4018 = vand.u32 %v3298, 4294901760
      %v4019 = vsub.f32 %v3298, %v4018
      %4020 = vmatmul.f32.gmra.mxu0 %v4019
      %v4021 = vpop.f32.mrf.mxu0
      %v4022 = vadd.f32 %v3956, %v4021
      %v4023 = vand.u32 %v3311, 4294901760
      %v4024 = vsub.f32 %v3311, %v4023
      %4025 = vmatmul.f32.gmra.mxu0 %v4024
      %v4026 = vpop.f32.mrf.mxu0
      %v4027 = vadd.f32 %v3960, %v4026
      %v4028 = vand.u32 %v3324, 4294901760
      %v4029 = vsub.f32 %v3324, %v4028
      %4030 = vmatmul.f32.gmra.mxu0 %v4029
      %v4031 = vpop.f32.mrf.mxu0
      %v4032 = vadd.f32 %v3964, %v4031
      %v4033 = vand.u32 %v3330, 4294901760
      %v4034 = vsub.f32 %v3330, %v4033
      %4035 = vmatmul.f32.gmra.mxu0 %v4034
      %v4036 = vpop.f32.mrf.mxu0
      %v4037 = vadd.f32 %v3968, %v4036
      %4038 = vdwg.mxu0
      %v4039 = vand.u32 %v3237, 4294901760
      %4040 = vmatpush.msra.mxu0 %v4039
      %v4041 = vand.u32 %v3236, 4294901760
      %4042 = vmatpush.msra.mxu0 %v4041
      %v4043 = vand.u32 %v3235, 4294901760
      %4044 = vmatpush.msra.mxu0 %v4043
      %v4045 = vand.u32 %v3234, 4294901760
      %4046 = vmatpush.msra.mxu0 %v4045
      %v4047 = vand.u32 %v3233, 4294901760
      %4048 = vmatpush.msra.mxu0 %v4047
      %v4049 = vand.u32 %v3232, 4294901760
      %4050 = vmatpush.msra.mxu0 %v4049
      %v4051 = vand.u32 %v3231, 4294901760
      %4052 = vmatpush.msra.mxu0 %v4051
      %v4053 = vand.u32 %v3230, 4294901760
      %4054 = vmatpush.msra.mxu0 %v4053
      %v4055 = vand.u32 %v3229, 4294901760
      %4056 = vmatpush.msra.mxu0 %v4055
      %v4057 = vand.u32 %v3228, 4294901760
      %4058 = vmatpush.msra.mxu0 %v4057
      %v4059 = vand.u32 %v3227, 4294901760
      %4060 = vmatpush.msra.mxu0 %v4059
      %v4061 = vand.u32 %v3226, 4294901760
      %4062 = vmatpush.msra.mxu0 %v4061
      %v4063 = vand.u32 %v3225, 4294901760
      %4064 = vmatpush.msra.mxu0 %v4063
      %v4065 = vand.u32 %v3224, 4294901760
      %4066 = vmatpush.msra.mxu0 %v4065
      %v4067 = vand.u32 %v3223, 4294901760
      %4068 = vmatpush.msra.mxu0 %v4067
      %v4069 = vand.u32 %v3222, 4294901760
      %4070 = vmatpush.msra.mxu0 %v4069
      %v4071 = vand.u32 %v3298, 4294901760
      %v4072 = vsub.f32 %v3298, %v4071
      %v4073 = vand.u32 %v4072, 4294901760
      %4074 = vmatmul.f32.gmra.mxu0 %v4073
      %v4075 = vpop.f32.mrf.mxu0
      %v4076 = vadd.f32 %v4022, %v4075
      %v4077 = vand.u32 %v3311, 4294901760
      %v4078 = vsub.f32 %v3311, %v4077
      %v4079 = vand.u32 %v4078, 4294901760
      %4080 = vmatmul.f32.gmra.mxu0 %v4079
      %v4081 = vpop.f32.mrf.mxu0
      %v4082 = vadd.f32 %v4027, %v4081
      %v4083 = vand.u32 %v3324, 4294901760
      %v4084 = vsub.f32 %v3324, %v4083
      %v4085 = vand.u32 %v4084, 4294901760
      %4086 = vmatmul.f32.gmra.mxu0 %v4085
      %v4087 = vpop.f32.mrf.mxu0
      %v4088 = vadd.f32 %v4032, %v4087
      %v4089 = vand.u32 %v3330, 4294901760
      %v4090 = vsub.f32 %v3330, %v4089
      %v4091 = vand.u32 %v4090, 4294901760
      %4092 = vmatmul.f32.gmra.mxu0 %v4091
      %v4093 = vpop.f32.mrf.mxu0
      %v4094 = vadd.f32 %v4037, %v4093
      %4095 = vdwg.mxu0
      %v4096 = vand.u32 %v3237, 4294901760
      %v4097 = vsub.f32 %v3237, %v4096
      %v4098 = vand.u32 %v4097, 4294901760
      %4099 = vmatpush.msra.mxu0 %v4098
      %v4100 = vand.u32 %v3236, 4294901760
      %v4101 = vsub.f32 %v3236, %v4100
      %v4102 = vand.u32 %v4101, 4294901760
      %4103 = vmatpush.msra.mxu0 %v4102
      %v4104 = vand.u32 %v3235, 4294901760
      %v4105 = vsub.f32 %v3235, %v4104
      %v4106 = vand.u32 %v4105, 4294901760
      %4107 = vmatpush.msra.mxu0 %v4106
      %v4108 = vand.u32 %v3234, 4294901760
      %v4109 = vsub.f32 %v3234, %v4108
      %v4110 = vand.u32 %v4109, 4294901760
      %4111 = vmatpush.msra.mxu0 %v4110
      %v4112 = vand.u32 %v3233, 4294901760
      %v4113 = vsub.f32 %v3233, %v4112
      %v4114 = vand.u32 %v4113, 4294901760
      %4115 = vmatpush.msra.mxu0 %v4114
      %v4116 = vand.u32 %v3232, 4294901760
      %v4117 = vsub.f32 %v3232, %v4116
      %v4118 = vand.u32 %v4117, 4294901760
      %4119 = vmatpush.msra.mxu0 %v4118
      %v4120 = vand.u32 %v3231, 4294901760
      %v4121 = vsub.f32 %v3231, %v4120
      %v4122 = vand.u32 %v4121, 4294901760
      %4123 = vmatpush.msra.mxu0 %v4122
      %v4124 = vand.u32 %v3230, 4294901760
      %v4125 = vsub.f32 %v3230, %v4124
      %v4126 = vand.u32 %v4125, 4294901760
      %4127 = vmatpush.msra.mxu0 %v4126
      %v4128 = vand.u32 %v3229, 4294901760
      %v4129 = vsub.f32 %v3229, %v4128
      %v4130 = vand.u32 %v4129, 4294901760
      %4131 = vmatpush.msra.mxu0 %v4130
      %v4132 = vand.u32 %v3228, 4294901760
      %v4133 = vsub.f32 %v3228, %v4132
      %v4134 = vand.u32 %v4133, 4294901760
      %4135 = vmatpush.msra.mxu0 %v4134
      %v4136 = vand.u32 %v3227, 4294901760
      %v4137 = vsub.f32 %v3227, %v4136
      %v4138 = vand.u32 %v4137, 4294901760
      %4139 = vmatpush.msra.mxu0 %v4138
      %v4140 = vand.u32 %v3226, 4294901760
      %v4141 = vsub.f32 %v3226, %v4140
      %v4142 = vand.u32 %v4141, 4294901760
      %4143 = vmatpush.msra.mxu0 %v4142
      %v4144 = vand.u32 %v3225, 4294901760
      %v4145 = vsub.f32 %v3225, %v4144
      %v4146 = vand.u32 %v4145, 4294901760
      %4147 = vmatpush.msra.mxu0 %v4146
      %v4148 = vand.u32 %v3224, 4294901760
      %v4149 = vsub.f32 %v3224, %v4148
      %v4150 = vand.u32 %v4149, 4294901760
      %4151 = vmatpush.msra.mxu0 %v4150
      %v4152 = vand.u32 %v3223, 4294901760
      %v4153 = vsub.f32 %v3223, %v4152
      %v4154 = vand.u32 %v4153, 4294901760
      %4155 = vmatpush.msra.mxu0 %v4154
      %v4156 = vand.u32 %v3222, 4294901760
      %v4157 = vsub.f32 %v3222, %v4156
      %v4158 = vand.u32 %v4157, 4294901760
      %4159 = vmatpush.msra.mxu0 %v4158
      %v4160 = vand.u32 %v3298, 4294901760
      %4161 = vmatmul.f32.gmra.mxu0 %v4160
      %v4162 = vpop.f32.mrf.mxu0
      %v4163 = vadd.f32 %v4076, %v4162
      %v4164 = vand.u32 %v3311, 4294901760
      %4165 = vmatmul.f32.gmra.mxu0 %v4164
      %v4166 = vpop.f32.mrf.mxu0
      %v4167 = vadd.f32 %v4082, %v4166
      %v4168 = vand.u32 %v3324, 4294901760
      %4169 = vmatmul.f32.gmra.mxu0 %v4168
      %v4170 = vpop.f32.mrf.mxu0
      %v4171 = vadd.f32 %v4088, %v4170
      %v4172 = vand.u32 %v3330, 4294901760
      %4173 = vmatmul.f32.gmra.mxu0 %v4172
      %v4174 = vpop.f32.mrf.mxu0
      %v4175 = vadd.f32 %v4094, %v4174
      %4176 = vdwg.mxu0
      %v4177 = vand.u32 %v3237, 4294901760
      %4178 = vmatpush.msra.mxu0 %v4177
      %v4179 = vand.u32 %v3236, 4294901760
      %4180 = vmatpush.msra.mxu0 %v4179
      %v4181 = vand.u32 %v3235, 4294901760
      %4182 = vmatpush.msra.mxu0 %v4181
      %v4183 = vand.u32 %v3234, 4294901760
      %4184 = vmatpush.msra.mxu0 %v4183
      %v4185 = vand.u32 %v3233, 4294901760
      %4186 = vmatpush.msra.mxu0 %v4185
      %v4187 = vand.u32 %v3232, 4294901760
      %4188 = vmatpush.msra.mxu0 %v4187
      %v4189 = vand.u32 %v3231, 4294901760
      %4190 = vmatpush.msra.mxu0 %v4189
      %v4191 = vand.u32 %v3230, 4294901760
      %4192 = vmatpush.msra.mxu0 %v4191
      %v4193 = vand.u32 %v3229, 4294901760
      %4194 = vmatpush.msra.mxu0 %v4193
      %v4195 = vand.u32 %v3228, 4294901760
      %4196 = vmatpush.msra.mxu0 %v4195
      %v4197 = vand.u32 %v3227, 4294901760
      %4198 = vmatpush.msra.mxu0 %v4197
      %v4199 = vand.u32 %v3226, 4294901760
      %4200 = vmatpush.msra.mxu0 %v4199
      %v4201 = vand.u32 %v3225, 4294901760
      %4202 = vmatpush.msra.mxu0 %v4201
      %v4203 = vand.u32 %v3224, 4294901760
      %4204 = vmatpush.msra.mxu0 %v4203
      %v4205 = vand.u32 %v3223, 4294901760
      %4206 = vmatpush.msra.mxu0 %v4205
      %v4207 = vand.u32 %v3222, 4294901760
      %4208 = vmatpush.msra.mxu0 %v4207
      %v4209 = vand.u32 %v3298, 4294901760
      %4210 = vmatmul.f32.gmra.mxu0 %v4209
      %v4211 = vpop.f32.mrf.mxu0
      %v4212 = vadd.f32 %v4163, %v4211
      %v4213 = vand.u32 %v3311, 4294901760
      %4214 = vmatmul.f32.gmra.mxu0 %v4213
      %v4215 = vpop.f32.mrf.mxu0
      %v4216 = vadd.f32 %v4167, %v4215
      %v4217 = vand.u32 %v3324, 4294901760
      %4218 = vmatmul.f32.gmra.mxu0 %v4217
      %v4219 = vpop.f32.mrf.mxu0
      %v4220 = vadd.f32 %v4171, %v4219
      %v4221 = vand.u32 %v3330, 4294901760
      %4222 = vmatmul.f32.gmra.mxu0 %v4221
      %v4223 = vpop.f32.mrf.mxu0
      %v4224 = vadd.f32 %v4175, %v4223
      %4225 = vdwg.mxu0
      %v4226 = vand.u32 %v3253, 4294901760
      %4227 = vmatpush.msra.mxu0 %v4226
      %v4228 = vand.u32 %v3252, 4294901760
      %4229 = vmatpush.msra.mxu0 %v4228
      %v4230 = vand.u32 %v3251, 4294901760
      %4231 = vmatpush.msra.mxu0 %v4230
      %v4232 = vand.u32 %v3250, 4294901760
      %4233 = vmatpush.msra.mxu0 %v4232
      %v4234 = vand.u32 %v3249, 4294901760
      %4235 = vmatpush.msra.mxu0 %v4234
      %v4236 = vand.u32 %v3248, 4294901760
      %4237 = vmatpush.msra.mxu0 %v4236
      %v4238 = vand.u32 %v3247, 4294901760
      %4239 = vmatpush.msra.mxu0 %v4238
      %v4240 = vand.u32 %v3246, 4294901760
      %4241 = vmatpush.msra.mxu0 %v4240
      %v4242 = vand.u32 %v3245, 4294901760
      %4243 = vmatpush.msra.mxu0 %v4242
      %v4244 = vand.u32 %v3244, 4294901760
      %4245 = vmatpush.msra.mxu0 %v4244
      %v4246 = vand.u32 %v3243, 4294901760
      %4247 = vmatpush.msra.mxu0 %v4246
      %v4248 = vand.u32 %v3242, 4294901760
      %4249 = vmatpush.msra.mxu0 %v4248
      %v4250 = vand.u32 %v3241, 4294901760
      %4251 = vmatpush.msra.mxu0 %v4250
      %v4252 = vand.u32 %v3240, 4294901760
      %4253 = vmatpush.msra.mxu0 %v4252
      %v4254 = vand.u32 %v3239, 4294901760
      %4255 = vmatpush.msra.mxu0 %v4254
      %v4256 = vand.u32 %v3238, 4294901760
      %4257 = vmatpush.msra.mxu0 %v4256
      %v4258 = vand.u32 %v3299, 4294901760
      %v4259 = vsub.f32 %v3299, %v4258
      %v4260 = vand.u32 %v4259, 4294901760
      %v4261 = vsub.f32 %v4259, %v4260
      %v4262 = vand.u32 %v4261, 4294901760
      %4263 = vmatmul.f32.gmra.mxu0 %v4262
      %v4264 = vpop.f32.mrf.mxu0
      %v4265 = vadd.f32 %v4212, %v4264
      %v4266 = vand.u32 %v3312, 4294901760
      %v4267 = vsub.f32 %v3312, %v4266
      %v4268 = vand.u32 %v4267, 4294901760
      %v4269 = vsub.f32 %v4267, %v4268
      %v4270 = vand.u32 %v4269, 4294901760
      %4271 = vmatmul.f32.gmra.mxu0 %v4270
      %v4272 = vpop.f32.mrf.mxu0
      %v4273 = vadd.f32 %v4216, %v4272
      %v4274 = vand.u32 %v3325, 4294901760
      %v4275 = vsub.f32 %v3325, %v4274
      %v4276 = vand.u32 %v4275, 4294901760
      %v4277 = vsub.f32 %v4275, %v4276
      %v4278 = vand.u32 %v4277, 4294901760
      %4279 = vmatmul.f32.gmra.mxu0 %v4278
      %v4280 = vpop.f32.mrf.mxu0
      %v4281 = vadd.f32 %v4220, %v4280
      %v4282 = vand.u32 %v3331, 4294901760
      %v4283 = vsub.f32 %v3331, %v4282
      %v4284 = vand.u32 %v4283, 4294901760
      %v4285 = vsub.f32 %v4283, %v4284
      %v4286 = vand.u32 %v4285, 4294901760
      %4287 = vmatmul.f32.gmra.mxu0 %v4286
      %v4288 = vpop.f32.mrf.mxu0
      %v4289 = vadd.f32 %v4224, %v4288
      %4290 = vdwg.mxu0
      %v4291 = vand.u32 %v3253, 4294901760
      %v4292 = vsub.f32 %v3253, %v4291
      %v4293 = vand.u32 %v4292, 4294901760
      %v4294 = vsub.f32 %v4292, %v4293
      %v4295 = vand.u32 %v4294, 4294901760
      %4296 = vmatpush.msra.mxu0 %v4295
      %v4297 = vand.u32 %v3252, 4294901760
      %v4298 = vsub.f32 %v3252, %v4297
      %v4299 = vand.u32 %v4298, 4294901760
      %v4300 = vsub.f32 %v4298, %v4299
      %v4301 = vand.u32 %v4300, 4294901760
      %4302 = vmatpush.msra.mxu0 %v4301
      %v4303 = vand.u32 %v3251, 4294901760
      %v4304 = vsub.f32 %v3251, %v4303
      %v4305 = vand.u32 %v4304, 4294901760
      %v4306 = vsub.f32 %v4304, %v4305
      %v4307 = vand.u32 %v4306, 4294901760
      %4308 = vmatpush.msra.mxu0 %v4307
      %v4309 = vand.u32 %v3250, 4294901760
      %v4310 = vsub.f32 %v3250, %v4309
      %v4311 = vand.u32 %v4310, 4294901760
      %v4312 = vsub.f32 %v4310, %v4311
      %v4313 = vand.u32 %v4312, 4294901760
      %4314 = vmatpush.msra.mxu0 %v4313
      %v4315 = vand.u32 %v3249, 4294901760
      %v4316 = vsub.f32 %v3249, %v4315
      %v4317 = vand.u32 %v4316, 4294901760
      %v4318 = vsub.f32 %v4316, %v4317
      %v4319 = vand.u32 %v4318, 4294901760
      %4320 = vmatpush.msra.mxu0 %v4319
      %v4321 = vand.u32 %v3248, 4294901760
      %v4322 = vsub.f32 %v3248, %v4321
      %v4323 = vand.u32 %v4322, 4294901760
      %v4324 = vsub.f32 %v4322, %v4323
      %v4325 = vand.u32 %v4324, 4294901760
      %4326 = vmatpush.msra.mxu0 %v4325
      %v4327 = vand.u32 %v3247, 4294901760
      %v4328 = vsub.f32 %v3247, %v4327
      %v4329 = vand.u32 %v4328, 4294901760
      %v4330 = vsub.f32 %v4328, %v4329
      %v4331 = vand.u32 %v4330, 4294901760
      %4332 = vmatpush.msra.mxu0 %v4331
      %v4333 = vand.u32 %v3246, 4294901760
      %v4334 = vsub.f32 %v3246, %v4333
      %v4335 = vand.u32 %v4334, 4294901760
      %v4336 = vsub.f32 %v4334, %v4335
      %v4337 = vand.u32 %v4336, 4294901760
      %4338 = vmatpush.msra.mxu0 %v4337
      %v4339 = vand.u32 %v3245, 4294901760
      %v4340 = vsub.f32 %v3245, %v4339
      %v4341 = vand.u32 %v4340, 4294901760
      %v4342 = vsub.f32 %v4340, %v4341
      %v4343 = vand.u32 %v4342, 4294901760
      %4344 = vmatpush.msra.mxu0 %v4343
      %v4345 = vand.u32 %v3244, 4294901760
      %v4346 = vsub.f32 %v3244, %v4345
      %v4347 = vand.u32 %v4346, 4294901760
      %v4348 = vsub.f32 %v4346, %v4347
      %v4349 = vand.u32 %v4348, 4294901760
      %4350 = vmatpush.msra.mxu0 %v4349
      %v4351 = vand.u32 %v3243, 4294901760
      %v4352 = vsub.f32 %v3243, %v4351
      %v4353 = vand.u32 %v4352, 4294901760
      %v4354 = vsub.f32 %v4352, %v4353
      %v4355 = vand.u32 %v4354, 4294901760
      %4356 = vmatpush.msra.mxu0 %v4355
      %v4357 = vand.u32 %v3242, 4294901760
      %v4358 = vsub.f32 %v3242, %v4357
      %v4359 = vand.u32 %v4358, 4294901760
      %v4360 = vsub.f32 %v4358, %v4359
      %v4361 = vand.u32 %v4360, 4294901760
      %4362 = vmatpush.msra.mxu0 %v4361
      %v4363 = vand.u32 %v3241, 4294901760
      %v4364 = vsub.f32 %v3241, %v4363
      %v4365 = vand.u32 %v4364, 4294901760
      %v4366 = vsub.f32 %v4364, %v4365
      %v4367 = vand.u32 %v4366, 4294901760
      %4368 = vmatpush.msra.mxu0 %v4367
      %v4369 = vand.u32 %v3240, 4294901760
      %v4370 = vsub.f32 %v3240, %v4369
      %v4371 = vand.u32 %v4370, 4294901760
      %v4372 = vsub.f32 %v4370, %v4371
      %v4373 = vand.u32 %v4372, 4294901760
      %4374 = vmatpush.msra.mxu0 %v4373
      %v4375 = vand.u32 %v3239, 4294901760
      %v4376 = vsub.f32 %v3239, %v4375
      %v4377 = vand.u32 %v4376, 4294901760
      %v4378 = vsub.f32 %v4376, %v4377
      %v4379 = vand.u32 %v4378, 4294901760
      %4380 = vmatpush.msra.mxu0 %v4379
      %v4381 = vand.u32 %v3238, 4294901760
      %v4382 = vsub.f32 %v3238, %v4381
      %v4383 = vand.u32 %v4382, 4294901760
      %v4384 = vsub.f32 %v4382, %v4383
      %v4385 = vand.u32 %v4384, 4294901760
      %4386 = vmatpush.msra.mxu0 %v4385
      %v4387 = vand.u32 %v3299, 4294901760
      %4388 = vmatmul.f32.gmra.mxu0 %v4387
      %v4389 = vpop.f32.mrf.mxu0
      %v4390 = vadd.f32 %v4265, %v4389
      %v4391 = vand.u32 %v3312, 4294901760
      %4392 = vmatmul.f32.gmra.mxu0 %v4391
      %v4393 = vpop.f32.mrf.mxu0
      %v4394 = vadd.f32 %v4273, %v4393
      %v4395 = vand.u32 %v3325, 4294901760
      %4396 = vmatmul.f32.gmra.mxu0 %v4395
      %v4397 = vpop.f32.mrf.mxu0
      %v4398 = vadd.f32 %v4281, %v4397
      %v4399 = vand.u32 %v3331, 4294901760
      %4400 = vmatmul.f32.gmra.mxu0 %v4399
      %v4401 = vpop.f32.mrf.mxu0
      %v4402 = vadd.f32 %v4289, %v4401
      %4403 = vdwg.mxu0
      %v4404 = vand.u32 %v3253, 4294901760
      %v4405 = vsub.f32 %v3253, %v4404
      %4406 = vmatpush.msra.mxu0 %v4405
      %v4407 = vand.u32 %v3252, 4294901760
      %v4408 = vsub.f32 %v3252, %v4407
      %4409 = vmatpush.msra.mxu0 %v4408
      %v4410 = vand.u32 %v3251, 4294901760
      %v4411 = vsub.f32 %v3251, %v4410
      %4412 = vmatpush.msra.mxu0 %v4411
      %v4413 = vand.u32 %v3250, 4294901760
      %v4414 = vsub.f32 %v3250, %v4413
      %4415 = vmatpush.msra.mxu0 %v4414
      %v4416 = vand.u32 %v3249, 4294901760
      %v4417 = vsub.f32 %v3249, %v4416
      %4418 = vmatpush.msra.mxu0 %v4417
      %v4419 = vand.u32 %v3248, 4294901760
      %v4420 = vsub.f32 %v3248, %v4419
      %4421 = vmatpush.msra.mxu0 %v4420
      %v4422 = vand.u32 %v3247, 4294901760
      %v4423 = vsub.f32 %v3247, %v4422
      %4424 = vmatpush.msra.mxu0 %v4423
      %v4425 = vand.u32 %v3246, 4294901760
      %v4426 = vsub.f32 %v3246, %v4425
      %4427 = vmatpush.msra.mxu0 %v4426
      %v4428 = vand.u32 %v3245, 4294901760
      %v4429 = vsub.f32 %v3245, %v4428
      %4430 = vmatpush.msra.mxu0 %v4429
      %v4431 = vand.u32 %v3244, 4294901760
      %v4432 = vsub.f32 %v3244, %v4431
      %4433 = vmatpush.msra.mxu0 %v4432
      %v4434 = vand.u32 %v3243, 4294901760
      %v4435 = vsub.f32 %v3243, %v4434
      %4436 = vmatpush.msra.mxu0 %v4435
      %v4437 = vand.u32 %v3242, 4294901760
      %v4438 = vsub.f32 %v3242, %v4437
      %4439 = vmatpush.msra.mxu0 %v4438
      %v4440 = vand.u32 %v3241, 4294901760
      %v4441 = vsub.f32 %v3241, %v4440
      %4442 = vmatpush.msra.mxu0 %v4441
      %v4443 = vand.u32 %v3240, 4294901760
      %v4444 = vsub.f32 %v3240, %v4443
      %4445 = vmatpush.msra.mxu0 %v4444
      %v4446 = vand.u32 %v3239, 4294901760
      %v4447 = vsub.f32 %v3239, %v4446
      %4448 = vmatpush.msra.mxu0 %v4447
      %v4449 = vand.u32 %v3238, 4294901760
      %v4450 = vsub.f32 %v3238, %v4449
      %4451 = vmatpush.msra.mxu0 %v4450
      %v4452 = vand.u32 %v3299, 4294901760
      %v4453 = vsub.f32 %v3299, %v4452
      %4454 = vmatmul.f32.gmra.mxu0 %v4453
      %v4455 = vpop.f32.mrf.mxu0
      %v4456 = vadd.f32 %v4390, %v4455
      %v4457 = vand.u32 %v3312, 4294901760
      %v4458 = vsub.f32 %v3312, %v4457
      %4459 = vmatmul.f32.gmra.mxu0 %v4458
      %v4460 = vpop.f32.mrf.mxu0
      %v4461 = vadd.f32 %v4394, %v4460
      %v4462 = vand.u32 %v3325, 4294901760
      %v4463 = vsub.f32 %v3325, %v4462
      %4464 = vmatmul.f32.gmra.mxu0 %v4463
      %v4465 = vpop.f32.mrf.mxu0
      %v4466 = vadd.f32 %v4398, %v4465
      %v4467 = vand.u32 %v3331, 4294901760
      %v4468 = vsub.f32 %v3331, %v4467
      %4469 = vmatmul.f32.gmra.mxu0 %v4468
      %v4470 = vpop.f32.mrf.mxu0
      %v4471 = vadd.f32 %v4402, %v4470
      %4472 = vdwg.mxu0
      %v4473 = vand.u32 %v3253, 4294901760
      %4474 = vmatpush.msra.mxu0 %v4473
      %v4475 = vand.u32 %v3252, 4294901760
      %4476 = vmatpush.msra.mxu0 %v4475
      %v4477 = vand.u32 %v3251, 4294901760
      %4478 = vmatpush.msra.mxu0 %v4477
      %v4479 = vand.u32 %v3250, 4294901760
      %4480 = vmatpush.msra.mxu0 %v4479
      %v4481 = vand.u32 %v3249, 4294901760
      %4482 = vmatpush.msra.mxu0 %v4481
      %v4483 = vand.u32 %v3248, 4294901760
      %4484 = vmatpush.msra.mxu0 %v4483
      %v4485 = vand.u32 %v3247, 4294901760
      %4486 = vmatpush.msra.mxu0 %v4485
      %v4487 = vand.u32 %v3246, 4294901760
      %4488 = vmatpush.msra.mxu0 %v4487
      %v4489 = vand.u32 %v3245, 4294901760
      %4490 = vmatpush.msra.mxu0 %v4489
      %v4491 = vand.u32 %v3244, 4294901760
      %4492 = vmatpush.msra.mxu0 %v4491
      %v4493 = vand.u32 %v3243, 4294901760
      %4494 = vmatpush.msra.mxu0 %v4493
      %v4495 = vand.u32 %v3242, 4294901760
      %4496 = vmatpush.msra.mxu0 %v4495
      %v4497 = vand.u32 %v3241, 4294901760
      %4498 = vmatpush.msra.mxu0 %v4497
      %v4499 = vand.u32 %v3240, 4294901760
      %4500 = vmatpush.msra.mxu0 %v4499
      %v4501 = vand.u32 %v3239, 4294901760
      %4502 = vmatpush.msra.mxu0 %v4501
      %v4503 = vand.u32 %v3238, 4294901760
      %4504 = vmatpush.msra.mxu0 %v4503
      %v4505 = vand.u32 %v3299, 4294901760
      %v4506 = vsub.f32 %v3299, %v4505
      %v4507 = vand.u32 %v4506, 4294901760
      %4508 = vmatmul.f32.gmra.mxu0 %v4507
      %v4509 = vpop.f32.mrf.mxu0
      %v4510 = vadd.f32 %v4456, %v4509
      %v4511 = vand.u32 %v3312, 4294901760
      %v4512 = vsub.f32 %v3312, %v4511
      %v4513 = vand.u32 %v4512, 4294901760
      %4514 = vmatmul.f32.gmra.mxu0 %v4513
      %v4515 = vpop.f32.mrf.mxu0
      %v4516 = vadd.f32 %v4461, %v4515
      %v4517 = vand.u32 %v3325, 4294901760
      %v4518 = vsub.f32 %v3325, %v4517
      %v4519 = vand.u32 %v4518, 4294901760
      %4520 = vmatmul.f32.gmra.mxu0 %v4519
      %v4521 = vpop.f32.mrf.mxu0
      %v4522 = vadd.f32 %v4466, %v4521
      %v4523 = vand.u32 %v3331, 4294901760
      %v4524 = vsub.f32 %v3331, %v4523
      %v4525 = vand.u32 %v4524, 4294901760
      %4526 = vmatmul.f32.gmra.mxu0 %v4525
      %v4527 = vpop.f32.mrf.mxu0
      %v4528 = vadd.f32 %v4471, %v4527
      %4529 = vdwg.mxu0
      %v4530 = vand.u32 %v3253, 4294901760
      %v4531 = vsub.f32 %v3253, %v4530
      %v4532 = vand.u32 %v4531, 4294901760
      %4533 = vmatpush.msra.mxu0 %v4532
      %v4534 = vand.u32 %v3252, 4294901760
      %v4535 = vsub.f32 %v3252, %v4534
      %v4536 = vand.u32 %v4535, 4294901760
      %4537 = vmatpush.msra.mxu0 %v4536
      %v4538 = vand.u32 %v3251, 4294901760
      %v4539 = vsub.f32 %v3251, %v4538
      %v4540 = vand.u32 %v4539, 4294901760
      %4541 = vmatpush.msra.mxu0 %v4540
      %v4542 = vand.u32 %v3250, 4294901760
      %v4543 = vsub.f32 %v3250, %v4542
      %v4544 = vand.u32 %v4543, 4294901760
      %4545 = vmatpush.msra.mxu0 %v4544
      %v4546 = vand.u32 %v3249, 4294901760
      %v4547 = vsub.f32 %v3249, %v4546
      %v4548 = vand.u32 %v4547, 4294901760
      %4549 = vmatpush.msra.mxu0 %v4548
      %v4550 = vand.u32 %v3248, 4294901760
      %v4551 = vsub.f32 %v3248, %v4550
      %v4552 = vand.u32 %v4551, 4294901760
      %4553 = vmatpush.msra.mxu0 %v4552
      %v4554 = vand.u32 %v3247, 4294901760
      %v4555 = vsub.f32 %v3247, %v4554
      %v4556 = vand.u32 %v4555, 4294901760
      %4557 = vmatpush.msra.mxu0 %v4556
      %v4558 = vand.u32 %v3246, 4294901760
      %v4559 = vsub.f32 %v3246, %v4558
      %v4560 = vand.u32 %v4559, 4294901760
      %4561 = vmatpush.msra.mxu0 %v4560
      %v4562 = vand.u32 %v3245, 4294901760
      %v4563 = vsub.f32 %v3245, %v4562
      %v4564 = vand.u32 %v4563, 4294901760
      %4565 = vmatpush.msra.mxu0 %v4564
      %v4566 = vand.u32 %v3244, 4294901760
      %v4567 = vsub.f32 %v3244, %v4566
      %v4568 = vand.u32 %v4567, 4294901760
      %4569 = vmatpush.msra.mxu0 %v4568
      %v4570 = vand.u32 %v3243, 4294901760
      %v4571 = vsub.f32 %v3243, %v4570
      %v4572 = vand.u32 %v4571, 4294901760
      %4573 = vmatpush.msra.mxu0 %v4572
      %v4574 = vand.u32 %v3242, 4294901760
      %v4575 = vsub.f32 %v3242, %v4574
      %v4576 = vand.u32 %v4575, 4294901760
      %4577 = vmatpush.msra.mxu0 %v4576
      %v4578 = vand.u32 %v3241, 4294901760
      %v4579 = vsub.f32 %v3241, %v4578
      %v4580 = vand.u32 %v4579, 4294901760
      %4581 = vmatpush.msra.mxu0 %v4580
      %v4582 = vand.u32 %v3240, 4294901760
      %v4583 = vsub.f32 %v3240, %v4582
      %v4584 = vand.u32 %v4583, 4294901760
      %4585 = vmatpush.msra.mxu0 %v4584
      %v4586 = vand.u32 %v3239, 4294901760
      %v4587 = vsub.f32 %v3239, %v4586
      %v4588 = vand.u32 %v4587, 4294901760
      %4589 = vmatpush.msra.mxu0 %v4588
      %v4590 = vand.u32 %v3238, 4294901760
      %v4591 = vsub.f32 %v3238, %v4590
      %v4592 = vand.u32 %v4591, 4294901760
      %4593 = vmatpush.msra.mxu0 %v4592
      %v4594 = vand.u32 %v3299, 4294901760
      %4595 = vmatmul.f32.gmra.mxu0 %v4594
      %v4596 = vpop.f32.mrf.mxu0
      %v4597 = vadd.f32 %v4510, %v4596
      %v4598 = vand.u32 %v3312, 4294901760
      %4599 = vmatmul.f32.gmra.mxu0 %v4598
      %v4600 = vpop.f32.mrf.mxu0
      %v4601 = vadd.f32 %v4516, %v4600
      %v4602 = vand.u32 %v3325, 4294901760
      %4603 = vmatmul.f32.gmra.mxu0 %v4602
      %v4604 = vpop.f32.mrf.mxu0
      %v4605 = vadd.f32 %v4522, %v4604
      %v4606 = vand.u32 %v3331, 4294901760
      %4607 = vmatmul.f32.gmra.mxu0 %v4606
      %v4608 = vpop.f32.mrf.mxu0
      %v4609 = vadd.f32 %v4528, %v4608
      %4610 = vdwg.mxu0
      %v4611 = vand.u32 %v3253, 4294901760
      %4612 = vmatpush.msra.mxu0 %v4611
      %v4613 = vand.u32 %v3252, 4294901760
      %4614 = vmatpush.msra.mxu0 %v4613
      %v4615 = vand.u32 %v3251, 4294901760
      %4616 = vmatpush.msra.mxu0 %v4615
      %v4617 = vand.u32 %v3250, 4294901760
      %4618 = vmatpush.msra.mxu0 %v4617
      %v4619 = vand.u32 %v3249, 4294901760
      %4620 = vmatpush.msra.mxu0 %v4619
      %v4621 = vand.u32 %v3248, 4294901760
      %4622 = vmatpush.msra.mxu0 %v4621
      %v4623 = vand.u32 %v3247, 4294901760
      %4624 = vmatpush.msra.mxu0 %v4623
      %v4625 = vand.u32 %v3246, 4294901760
      %4626 = vmatpush.msra.mxu0 %v4625
      %v4627 = vand.u32 %v3245, 4294901760
      %4628 = vmatpush.msra.mxu0 %v4627
      %v4629 = vand.u32 %v3244, 4294901760
      %4630 = vmatpush.msra.mxu0 %v4629
      %v4631 = vand.u32 %v3243, 4294901760
      %4632 = vmatpush.msra.mxu0 %v4631
      %v4633 = vand.u32 %v3242, 4294901760
      %4634 = vmatpush.msra.mxu0 %v4633
      %v4635 = vand.u32 %v3241, 4294901760
      %4636 = vmatpush.msra.mxu0 %v4635
      %v4637 = vand.u32 %v3240, 4294901760
      %4638 = vmatpush.msra.mxu0 %v4637
      %v4639 = vand.u32 %v3239, 4294901760
      %4640 = vmatpush.msra.mxu0 %v4639
      %v4641 = vand.u32 %v3238, 4294901760
      %4642 = vmatpush.msra.mxu0 %v4641
      %v4643 = vand.u32 %v3299, 4294901760
      %4644 = vmatmul.f32.gmra.mxu0 %v4643
      %v4645 = vpop.f32.mrf.mxu0
      %v4646 = vadd.f32 %v4597, %v4645
      %v4647 = vand.u32 %v3312, 4294901760
      %4648 = vmatmul.f32.gmra.mxu0 %v4647
      %v4649 = vpop.f32.mrf.mxu0
      %v4650 = vadd.f32 %v4601, %v4649
      %v4651 = vand.u32 %v3325, 4294901760
      %4652 = vmatmul.f32.gmra.mxu0 %v4651
      %v4653 = vpop.f32.mrf.mxu0
      %v4654 = vadd.f32 %v4605, %v4653
      %v4655 = vand.u32 %v3331, 4294901760
      %4656 = vmatmul.f32.gmra.mxu0 %v4655
      %v4657 = vpop.f32.mrf.mxu0
      %v4658 = vadd.f32 %v4609, %v4657
      %4659 = vdwg.mxu0
      %v4660 = vand.u32 %v3269, 4294901760
      %4661 = vmatpush.msra.mxu0 %v4660
      %v4662 = vand.u32 %v3268, 4294901760
      %4663 = vmatpush.msra.mxu0 %v4662
      %v4664 = vand.u32 %v3267, 4294901760
      %4665 = vmatpush.msra.mxu0 %v4664
      %v4666 = vand.u32 %v3266, 4294901760
      %4667 = vmatpush.msra.mxu0 %v4666
      %v4668 = vand.u32 %v3265, 4294901760
      %4669 = vmatpush.msra.mxu0 %v4668
      %v4670 = vand.u32 %v3264, 4294901760
      %4671 = vmatpush.msra.mxu0 %v4670
      %v4672 = vand.u32 %v3263, 4294901760
      %4673 = vmatpush.msra.mxu0 %v4672
      %v4674 = vand.u32 %v3262, 4294901760
      %4675 = vmatpush.msra.mxu0 %v4674
      %v4676 = vand.u32 %v3261, 4294901760
      %4677 = vmatpush.msra.mxu0 %v4676
      %v4678 = vand.u32 %v3260, 4294901760
      %4679 = vmatpush.msra.mxu0 %v4678
      %v4680 = vand.u32 %v3259, 4294901760
      %4681 = vmatpush.msra.mxu0 %v4680
      %v4682 = vand.u32 %v3258, 4294901760
      %4683 = vmatpush.msra.mxu0 %v4682
      %v4684 = vand.u32 %v3257, 4294901760
      %4685 = vmatpush.msra.mxu0 %v4684
      %v4686 = vand.u32 %v3256, 4294901760
      %4687 = vmatpush.msra.mxu0 %v4686
      %v4688 = vand.u32 %v3255, 4294901760
      %4689 = vmatpush.msra.mxu0 %v4688
      %v4690 = vand.u32 %v3254, 4294901760
      %4691 = vmatpush.msra.mxu0 %v4690
      %v4692 = vand.u32 %v3300, 4294901760
      %v4693 = vsub.f32 %v3300, %v4692
      %v4694 = vand.u32 %v4693, 4294901760
      %v4695 = vsub.f32 %v4693, %v4694
      %v4696 = vand.u32 %v4695, 4294901760
      %4697 = vmatmul.f32.gmra.mxu0 %v4696
      %v4698 = vpop.f32.mrf.mxu0
      %v4699 = vadd.f32 %v4646, %v4698
      %v4700 = vand.u32 %v3313, 4294901760
      %v4701 = vsub.f32 %v3313, %v4700
      %v4702 = vand.u32 %v4701, 4294901760
      %v4703 = vsub.f32 %v4701, %v4702
      %v4704 = vand.u32 %v4703, 4294901760
      %4705 = vmatmul.f32.gmra.mxu0 %v4704
      %v4706 = vpop.f32.mrf.mxu0
      %v4707 = vadd.f32 %v4650, %v4706
      %v4708 = vand.u32 %v3326, 4294901760
      %v4709 = vsub.f32 %v3326, %v4708
      %v4710 = vand.u32 %v4709, 4294901760
      %v4711 = vsub.f32 %v4709, %v4710
      %v4712 = vand.u32 %v4711, 4294901760
      %4713 = vmatmul.f32.gmra.mxu0 %v4712
      %v4714 = vpop.f32.mrf.mxu0
      %v4715 = vadd.f32 %v4654, %v4714
      %v4716 = vand.u32 %v3332, 4294901760
      %v4717 = vsub.f32 %v3332, %v4716
      %v4718 = vand.u32 %v4717, 4294901760
      %v4719 = vsub.f32 %v4717, %v4718
      %v4720 = vand.u32 %v4719, 4294901760
      %4721 = vmatmul.f32.gmra.mxu0 %v4720
      %v4722 = vpop.f32.mrf.mxu0
      %v4723 = vadd.f32 %v4658, %v4722
      %4724 = vdwg.mxu0
      %v4725 = vand.u32 %v3269, 4294901760
      %v4726 = vsub.f32 %v3269, %v4725
      %v4727 = vand.u32 %v4726, 4294901760
      %v4728 = vsub.f32 %v4726, %v4727
      %v4729 = vand.u32 %v4728, 4294901760
      %4730 = vmatpush.msra.mxu0 %v4729
      %v4731 = vand.u32 %v3268, 4294901760
      %v4732 = vsub.f32 %v3268, %v4731
      %v4733 = vand.u32 %v4732, 4294901760
      %v4734 = vsub.f32 %v4732, %v4733
      %v4735 = vand.u32 %v4734, 4294901760
      %4736 = vmatpush.msra.mxu0 %v4735
      %v4737 = vand.u32 %v3267, 4294901760
      %v4738 = vsub.f32 %v3267, %v4737
      %v4739 = vand.u32 %v4738, 4294901760
      %v4740 = vsub.f32 %v4738, %v4739
      %v4741 = vand.u32 %v4740, 4294901760
      %4742 = vmatpush.msra.mxu0 %v4741
      %v4743 = vand.u32 %v3266, 4294901760
      %v4744 = vsub.f32 %v3266, %v4743
      %v4745 = vand.u32 %v4744, 4294901760
      %v4746 = vsub.f32 %v4744, %v4745
      %v4747 = vand.u32 %v4746, 4294901760
      %4748 = vmatpush.msra.mxu0 %v4747
      %v4749 = vand.u32 %v3265, 4294901760
      %v4750 = vsub.f32 %v3265, %v4749
      %v4751 = vand.u32 %v4750, 4294901760
      %v4752 = vsub.f32 %v4750, %v4751
      %v4753 = vand.u32 %v4752, 4294901760
      %4754 = vmatpush.msra.mxu0 %v4753
      %v4755 = vand.u32 %v3264, 4294901760
      %v4756 = vsub.f32 %v3264, %v4755
      %v4757 = vand.u32 %v4756, 4294901760
      %v4758 = vsub.f32 %v4756, %v4757
      %v4759 = vand.u32 %v4758, 4294901760
      %4760 = vmatpush.msra.mxu0 %v4759
      %v4761 = vand.u32 %v3263, 4294901760
      %v4762 = vsub.f32 %v3263, %v4761
      %v4763 = vand.u32 %v4762, 4294901760
      %v4764 = vsub.f32 %v4762, %v4763
      %v4765 = vand.u32 %v4764, 4294901760
      %4766 = vmatpush.msra.mxu0 %v4765
      %v4767 = vand.u32 %v3262, 4294901760
      %v4768 = vsub.f32 %v3262, %v4767
      %v4769 = vand.u32 %v4768, 4294901760
      %v4770 = vsub.f32 %v4768, %v4769
      %v4771 = vand.u32 %v4770, 4294901760
      %4772 = vmatpush.msra.mxu0 %v4771
      %v4773 = vand.u32 %v3261, 4294901760
      %v4774 = vsub.f32 %v3261, %v4773
      %v4775 = vand.u32 %v4774, 4294901760
      %v4776 = vsub.f32 %v4774, %v4775
      %v4777 = vand.u32 %v4776, 4294901760
      %4778 = vmatpush.msra.mxu0 %v4777
      %v4779 = vand.u32 %v3260, 4294901760
      %v4780 = vsub.f32 %v3260, %v4779
      %v4781 = vand.u32 %v4780, 4294901760
      %v4782 = vsub.f32 %v4780, %v4781
      %v4783 = vand.u32 %v4782, 4294901760
      %4784 = vmatpush.msra.mxu0 %v4783
      %v4785 = vand.u32 %v3259, 4294901760
      %v4786 = vsub.f32 %v3259, %v4785
      %v4787 = vand.u32 %v4786, 4294901760
      %v4788 = vsub.f32 %v4786, %v4787
      %v4789 = vand.u32 %v4788, 4294901760
      %4790 = vmatpush.msra.mxu0 %v4789
      %v4791 = vand.u32 %v3258, 4294901760
      %v4792 = vsub.f32 %v3258, %v4791
      %v4793 = vand.u32 %v4792, 4294901760
      %v4794 = vsub.f32 %v4792, %v4793
      %v4795 = vand.u32 %v4794, 4294901760
      %4796 = vmatpush.msra.mxu0 %v4795
      %v4797 = vand.u32 %v3257, 4294901760
      %v4798 = vsub.f32 %v3257, %v4797
      %v4799 = vand.u32 %v4798, 4294901760
      %v4800 = vsub.f32 %v4798, %v4799
      %v4801 = vand.u32 %v4800, 4294901760
      %4802 = vmatpush.msra.mxu0 %v4801
      %v4803 = vand.u32 %v3256, 4294901760
      %v4804 = vsub.f32 %v3256, %v4803
      %v4805 = vand.u32 %v4804, 4294901760
      %v4806 = vsub.f32 %v4804, %v4805
      %v4807 = vand.u32 %v4806, 4294901760
      %4808 = vmatpush.msra.mxu0 %v4807
      %v4809 = vand.u32 %v3255, 4294901760
      %v4810 = vsub.f32 %v3255, %v4809
      %v4811 = vand.u32 %v4810, 4294901760
      %v4812 = vsub.f32 %v4810, %v4811
      %v4813 = vand.u32 %v4812, 4294901760
      %4814 = vmatpush.msra.mxu0 %v4813
      %v4815 = vand.u32 %v3254, 4294901760
      %v4816 = vsub.f32 %v3254, %v4815
      %v4817 = vand.u32 %v4816, 4294901760
      %v4818 = vsub.f32 %v4816, %v4817
      %v4819 = vand.u32 %v4818, 4294901760
      %4820 = vmatpush.msra.mxu0 %v4819
      %v4821 = vand.u32 %v3300, 4294901760
      %4822 = vmatmul.f32.gmra.mxu0 %v4821
      %v4823 = vpop.f32.mrf.mxu0
      %v4824 = vadd.f32 %v4699, %v4823
      %v4825 = vand.u32 %v3313, 4294901760
      %4826 = vmatmul.f32.gmra.mxu0 %v4825
      %v4827 = vpop.f32.mrf.mxu0
      %v4828 = vadd.f32 %v4707, %v4827
      %v4829 = vand.u32 %v3326, 4294901760
      %4830 = vmatmul.f32.gmra.mxu0 %v4829
      %v4831 = vpop.f32.mrf.mxu0
      %v4832 = vadd.f32 %v4715, %v4831
      %v4833 = vand.u32 %v3332, 4294901760
      %4834 = vmatmul.f32.gmra.mxu0 %v4833
      %v4835 = vpop.f32.mrf.mxu0
      %v4836 = vadd.f32 %v4723, %v4835
      %4837 = vdwg.mxu0
      %v4838 = vand.u32 %v3269, 4294901760
      %v4839 = vsub.f32 %v3269, %v4838
      %4840 = vmatpush.msra.mxu0 %v4839
      %v4841 = vand.u32 %v3268, 4294901760
      %v4842 = vsub.f32 %v3268, %v4841
      %4843 = vmatpush.msra.mxu0 %v4842
      %v4844 = vand.u32 %v3267, 4294901760
      %v4845 = vsub.f32 %v3267, %v4844
      %4846 = vmatpush.msra.mxu0 %v4845
      %v4847 = vand.u32 %v3266, 4294901760
      %v4848 = vsub.f32 %v3266, %v4847
      %4849 = vmatpush.msra.mxu0 %v4848
      %v4850 = vand.u32 %v3265, 4294901760
      %v4851 = vsub.f32 %v3265, %v4850
      %4852 = vmatpush.msra.mxu0 %v4851
      %v4853 = vand.u32 %v3264, 4294901760
      %v4854 = vsub.f32 %v3264, %v4853
      %4855 = vmatpush.msra.mxu0 %v4854
      %v4856 = vand.u32 %v3263, 4294901760
      %v4857 = vsub.f32 %v3263, %v4856
      %4858 = vmatpush.msra.mxu0 %v4857
      %v4859 = vand.u32 %v3262, 4294901760
      %v4860 = vsub.f32 %v3262, %v4859
      %4861 = vmatpush.msra.mxu0 %v4860
      %v4862 = vand.u32 %v3261, 4294901760
      %v4863 = vsub.f32 %v3261, %v4862
      %4864 = vmatpush.msra.mxu0 %v4863
      %v4865 = vand.u32 %v3260, 4294901760
      %v4866 = vsub.f32 %v3260, %v4865
      %4867 = vmatpush.msra.mxu0 %v4866
      %v4868 = vand.u32 %v3259, 4294901760
      %v4869 = vsub.f32 %v3259, %v4868
      %4870 = vmatpush.msra.mxu0 %v4869
      %v4871 = vand.u32 %v3258, 4294901760
      %v4872 = vsub.f32 %v3258, %v4871
      %4873 = vmatpush.msra.mxu0 %v4872
      %v4874 = vand.u32 %v3257, 4294901760
      %v4875 = vsub.f32 %v3257, %v4874
      %4876 = vmatpush.msra.mxu0 %v4875
      %v4877 = vand.u32 %v3256, 4294901760
      %v4878 = vsub.f32 %v3256, %v4877
      %4879 = vmatpush.msra.mxu0 %v4878
      %v4880 = vand.u32 %v3255, 4294901760
      %v4881 = vsub.f32 %v3255, %v4880
      %4882 = vmatpush.msra.mxu0 %v4881
      %v4883 = vand.u32 %v3254, 4294901760
      %v4884 = vsub.f32 %v3254, %v4883
      %4885 = vmatpush.msra.mxu0 %v4884
      %v4886 = vand.u32 %v3300, 4294901760
      %v4887 = vsub.f32 %v3300, %v4886
      %4888 = vmatmul.f32.gmra.mxu0 %v4887
      %v4889 = vpop.f32.mrf.mxu0
      %v4890 = vadd.f32 %v4824, %v4889
      %v4891 = vand.u32 %v3313, 4294901760
      %v4892 = vsub.f32 %v3313, %v4891
      %4893 = vmatmul.f32.gmra.mxu0 %v4892
      %v4894 = vpop.f32.mrf.mxu0
      %v4895 = vadd.f32 %v4828, %v4894
      %v4896 = vand.u32 %v3326, 4294901760
      %v4897 = vsub.f32 %v3326, %v4896
      %4898 = vmatmul.f32.gmra.mxu0 %v4897
      %v4899 = vpop.f32.mrf.mxu0
      %v4900 = vadd.f32 %v4832, %v4899
      %v4901 = vand.u32 %v3332, 4294901760
      %v4902 = vsub.f32 %v3332, %v4901
      %4903 = vmatmul.f32.gmra.mxu0 %v4902
      %v4904 = vpop.f32.mrf.mxu0
      %v4905 = vadd.f32 %v4836, %v4904
      %4906 = vdwg.mxu0
      %v4907 = vand.u32 %v3269, 4294901760
      %4908 = vmatpush.msra.mxu0 %v4907
      %v4909 = vand.u32 %v3268, 4294901760
      %4910 = vmatpush.msra.mxu0 %v4909
      %v4911 = vand.u32 %v3267, 4294901760
      %4912 = vmatpush.msra.mxu0 %v4911
      %v4913 = vand.u32 %v3266, 4294901760
      %4914 = vmatpush.msra.mxu0 %v4913
      %v4915 = vand.u32 %v3265, 4294901760
      %4916 = vmatpush.msra.mxu0 %v4915
      %v4917 = vand.u32 %v3264, 4294901760
      %4918 = vmatpush.msra.mxu0 %v4917
      %v4919 = vand.u32 %v3263, 4294901760
      %4920 = vmatpush.msra.mxu0 %v4919
      %v4921 = vand.u32 %v3262, 4294901760
      %4922 = vmatpush.msra.mxu0 %v4921
      %v4923 = vand.u32 %v3261, 4294901760
      %4924 = vmatpush.msra.mxu0 %v4923
      %v4925 = vand.u32 %v3260, 4294901760
      %4926 = vmatpush.msra.mxu0 %v4925
      %v4927 = vand.u32 %v3259, 4294901760
      %4928 = vmatpush.msra.mxu0 %v4927
      %v4929 = vand.u32 %v3258, 4294901760
      %4930 = vmatpush.msra.mxu0 %v4929
      %v4931 = vand.u32 %v3257, 4294901760
      %4932 = vmatpush.msra.mxu0 %v4931
      %v4933 = vand.u32 %v3256, 4294901760
      %4934 = vmatpush.msra.mxu0 %v4933
      %v4935 = vand.u32 %v3255, 4294901760
      %4936 = vmatpush.msra.mxu0 %v4935
      %v4937 = vand.u32 %v3254, 4294901760
      %4938 = vmatpush.msra.mxu0 %v4937
      %v4939 = vand.u32 %v3300, 4294901760
      %v4940 = vsub.f32 %v3300, %v4939
      %v4941 = vand.u32 %v4940, 4294901760
      %4942 = vmatmul.f32.gmra.mxu0 %v4941
      %v4943 = vpop.f32.mrf.mxu0
      %v4944 = vadd.f32 %v4890, %v4943
      %v4945 = vand.u32 %v3313, 4294901760
      %v4946 = vsub.f32 %v3313, %v4945
      %v4947 = vand.u32 %v4946, 4294901760
      %4948 = vmatmul.f32.gmra.mxu0 %v4947
      %v4949 = vpop.f32.mrf.mxu0
      %v4950 = vadd.f32 %v4895, %v4949
      %v4951 = vand.u32 %v3326, 4294901760
      %v4952 = vsub.f32 %v3326, %v4951
      %v4953 = vand.u32 %v4952, 4294901760
      %4954 = vmatmul.f32.gmra.mxu0 %v4953
      %v4955 = vpop.f32.mrf.mxu0
      %v4956 = vadd.f32 %v4900, %v4955
      %v4957 = vand.u32 %v3332, 4294901760
      %v4958 = vsub.f32 %v3332, %v4957
      %v4959 = vand.u32 %v4958, 4294901760
      %4960 = vmatmul.f32.gmra.mxu0 %v4959
      %v4961 = vpop.f32.mrf.mxu0
      %v4962 = vadd.f32 %v4905, %v4961
      %4963 = vdwg.mxu0
      %v4964 = vand.u32 %v3269, 4294901760
      %v4965 = vsub.f32 %v3269, %v4964
      %v4966 = vand.u32 %v4965, 4294901760
      %4967 = vmatpush.msra.mxu0 %v4966
      %v4968 = vand.u32 %v3268, 4294901760
      %v4969 = vsub.f32 %v3268, %v4968
      %v4970 = vand.u32 %v4969, 4294901760
      %4971 = vmatpush.msra.mxu0 %v4970
      %v4972 = vand.u32 %v3267, 4294901760
      %v4973 = vsub.f32 %v3267, %v4972
      %v4974 = vand.u32 %v4973, 4294901760
      %4975 = vmatpush.msra.mxu0 %v4974
      %v4976 = vand.u32 %v3266, 4294901760
      %v4977 = vsub.f32 %v3266, %v4976
      %v4978 = vand.u32 %v4977, 4294901760
      %4979 = vmatpush.msra.mxu0 %v4978
      %v4980 = vand.u32 %v3265, 4294901760
      %v4981 = vsub.f32 %v3265, %v4980
      %v4982 = vand.u32 %v4981, 4294901760
      %4983 = vmatpush.msra.mxu0 %v4982
      %v4984 = vand.u32 %v3264, 4294901760
      %v4985 = vsub.f32 %v3264, %v4984
      %v4986 = vand.u32 %v4985, 4294901760
      %4987 = vmatpush.msra.mxu0 %v4986
      %v4988 = vand.u32 %v3263, 4294901760
      %v4989 = vsub.f32 %v3263, %v4988
      %v4990 = vand.u32 %v4989, 4294901760
      %4991 = vmatpush.msra.mxu0 %v4990
      %v4992 = vand.u32 %v3262, 4294901760
      %v4993 = vsub.f32 %v3262, %v4992
      %v4994 = vand.u32 %v4993, 4294901760
      %4995 = vmatpush.msra.mxu0 %v4994
      %v4996 = vand.u32 %v3261, 4294901760
      %v4997 = vsub.f32 %v3261, %v4996
      %v4998 = vand.u32 %v4997, 4294901760
      %4999 = vmatpush.msra.mxu0 %v4998
      %v5000 = vand.u32 %v3260, 4294901760
      %v5001 = vsub.f32 %v3260, %v5000
      %v5002 = vand.u32 %v5001, 4294901760
      %5003 = vmatpush.msra.mxu0 %v5002
      %v5004 = vand.u32 %v3259, 4294901760
      %v5005 = vsub.f32 %v3259, %v5004
      %v5006 = vand.u32 %v5005, 4294901760
      %5007 = vmatpush.msra.mxu0 %v5006
      %v5008 = vand.u32 %v3258, 4294901760
      %v5009 = vsub.f32 %v3258, %v5008
      %v5010 = vand.u32 %v5009, 4294901760
      %5011 = vmatpush.msra.mxu0 %v5010
      %v5012 = vand.u32 %v3257, 4294901760
      %v5013 = vsub.f32 %v3257, %v5012
      %v5014 = vand.u32 %v5013, 4294901760
      %5015 = vmatpush.msra.mxu0 %v5014
      %v5016 = vand.u32 %v3256, 4294901760
      %v5017 = vsub.f32 %v3256, %v5016
      %v5018 = vand.u32 %v5017, 4294901760
      %5019 = vmatpush.msra.mxu0 %v5018
      %v5020 = vand.u32 %v3255, 4294901760
      %v5021 = vsub.f32 %v3255, %v5020
      %v5022 = vand.u32 %v5021, 4294901760
      %5023 = vmatpush.msra.mxu0 %v5022
      %v5024 = vand.u32 %v3254, 4294901760
      %v5025 = vsub.f32 %v3254, %v5024
      %v5026 = vand.u32 %v5025, 4294901760
      %5027 = vmatpush.msra.mxu0 %v5026
      %v5028 = vand.u32 %v3300, 4294901760
      %5029 = vmatmul.f32.gmra.mxu0 %v5028
      %v5030 = vpop.f32.mrf.mxu0
      %v5031 = vadd.f32 %v4944, %v5030
      %v5032 = vand.u32 %v3313, 4294901760
      %5033 = vmatmul.f32.gmra.mxu0 %v5032
      %v5034 = vpop.f32.mrf.mxu0
      %v5035 = vadd.f32 %v4950, %v5034
      %v5036 = vand.u32 %v3326, 4294901760
      %5037 = vmatmul.f32.gmra.mxu0 %v5036
      %v5038 = vpop.f32.mrf.mxu0
      %v5039 = vadd.f32 %v4956, %v5038
      %v5040 = vand.u32 %v3332, 4294901760
      %5041 = vmatmul.f32.gmra.mxu0 %v5040
      %v5042 = vpop.f32.mrf.mxu0
      %v5043 = vadd.f32 %v4962, %v5042
      %5044 = vdwg.mxu0
      %v5045 = vand.u32 %v3269, 4294901760
      %5046 = vmatpush.msra.mxu0 %v5045
      %v5047 = vand.u32 %v3268, 4294901760
      %5048 = vmatpush.msra.mxu0 %v5047
      %v5049 = vand.u32 %v3267, 4294901760
      %5050 = vmatpush.msra.mxu0 %v5049
      %v5051 = vand.u32 %v3266, 4294901760
      %5052 = vmatpush.msra.mxu0 %v5051
      %v5053 = vand.u32 %v3265, 4294901760
      %5054 = vmatpush.msra.mxu0 %v5053
      %v5055 = vand.u32 %v3264, 4294901760
      %5056 = vmatpush.msra.mxu0 %v5055
      %v5057 = vand.u32 %v3263, 4294901760
      %5058 = vmatpush.msra.mxu0 %v5057
      %v5059 = vand.u32 %v3262, 4294901760
      %5060 = vmatpush.msra.mxu0 %v5059
      %v5061 = vand.u32 %v3261, 4294901760
      %5062 = vmatpush.msra.mxu0 %v5061
      %v5063 = vand.u32 %v3260, 4294901760
      %5064 = vmatpush.msra.mxu0 %v5063
      %v5065 = vand.u32 %v3259, 4294901760
      %5066 = vmatpush.msra.mxu0 %v5065
      %v5067 = vand.u32 %v3258, 4294901760
      %5068 = vmatpush.msra.mxu0 %v5067
      %v5069 = vand.u32 %v3257, 4294901760
      %5070 = vmatpush.msra.mxu0 %v5069
      %v5071 = vand.u32 %v3256, 4294901760
      %5072 = vmatpush.msra.mxu0 %v5071
      %v5073 = vand.u32 %v3255, 4294901760
      %5074 = vmatpush.msra.mxu0 %v5073
      %v5075 = vand.u32 %v3254, 4294901760
      %5076 = vmatpush.msra.mxu0 %v5075
      %v5077 = vand.u32 %v3300, 4294901760
      %5078 = vmatmul.f32.gmra.mxu0 %v5077
      %v5079 = vpop.f32.mrf.mxu0
      %v5080 = vadd.f32 %v5031, %v5079
      %v5081 = vand.u32 %v3313, 4294901760
      %5082 = vmatmul.f32.gmra.mxu0 %v5081
      %v5083 = vpop.f32.mrf.mxu0
      %v5084 = vadd.f32 %v5035, %v5083
      %v5085 = vand.u32 %v3326, 4294901760
      %5086 = vmatmul.f32.gmra.mxu0 %v5085
      %v5087 = vpop.f32.mrf.mxu0
      %v5088 = vadd.f32 %v5039, %v5087
      %v5089 = vand.u32 %v3332, 4294901760
      %5090 = vmatmul.f32.gmra.mxu0 %v5089
      %v5091 = vpop.f32.mrf.mxu0
      %v5092 = vadd.f32 %v5043, %v5091
      %5093 = vdwg.mxu0
      %5094 = vmatpush.msra.mxu0 0.0
      %5095 = vmatpush.msra.mxu0 0.0
      %5096 = vmatpush.msra.mxu0 0.0
      %5097 = vmatpush.msra.mxu0 0.0
      %5098 = vmatpush.msra.mxu0 0.0
      %5099 = vmatpush.msra.mxu0 0.0
      %5100 = vmatpush.msra.mxu0 0.0
      %5101 = vmatpush.msra.mxu0 0.0
      %v5102 = vand.u32 %v3277, 4294901760
      %5103 = vmatpush.msra.mxu0 %v5102
      %v5104 = vand.u32 %v3276, 4294901760
      %5105 = vmatpush.msra.mxu0 %v5104
      %v5106 = vand.u32 %v3275, 4294901760
      %5107 = vmatpush.msra.mxu0 %v5106
      %v5108 = vand.u32 %v3274, 4294901760
      %5109 = vmatpush.msra.mxu0 %v5108
      %v5110 = vand.u32 %v3273, 4294901760
      %5111 = vmatpush.msra.mxu0 %v5110
      %v5112 = vand.u32 %v3272, 4294901760
      %5113 = vmatpush.msra.mxu0 %v5112
      %v5114 = vand.u32 %v3271, 4294901760
      %5115 = vmatpush.msra.mxu0 %v5114
      %v5116 = vand.u32 %v3270, 4294901760
      %5117 = vmatpush.msra.mxu0 %v5116
      %v5118 = vand.u32 %v3350, 4294901760
      %v5119 = vsub.f32 %v3350, %v5118
      %v5120 = vand.u32 %v5119, 4294901760
      %v5121 = vsub.f32 %v5119, %v5120
      %v5122 = vand.u32 %v5121, 4294901760
      %5123 = vmatmul.f32.gmra.mxu0 %v5122
      %v5124 = vpop.f32.mrf.mxu0
      %v5125 = vadd.f32 %v5080, %v5124
      %v5126 = vand.u32 %v3352, 4294901760
      %v5127 = vsub.f32 %v3352, %v5126
      %v5128 = vand.u32 %v5127, 4294901760
      %v5129 = vsub.f32 %v5127, %v5128
      %v5130 = vand.u32 %v5129, 4294901760
      %5131 = vmatmul.f32.gmra.mxu0 %v5130
      %v5132 = vpop.f32.mrf.mxu0
      %v5133 = vadd.f32 %v5084, %v5132
      %v5134 = vand.u32 %v3354, 4294901760
      %v5135 = vsub.f32 %v3354, %v5134
      %v5136 = vand.u32 %v5135, 4294901760
      %v5137 = vsub.f32 %v5135, %v5136
      %v5138 = vand.u32 %v5137, 4294901760
      %5139 = vmatmul.f32.gmra.mxu0 %v5138
      %v5140 = vpop.f32.mrf.mxu0
      %v5141 = vadd.f32 %v5088, %v5140
      %v5142 = vand.u32 %v3356, 4294901760
      %v5143 = vsub.f32 %v3356, %v5142
      %v5144 = vand.u32 %v5143, 4294901760
      %v5145 = vsub.f32 %v5143, %v5144
      %v5146 = vand.u32 %v5145, 4294901760
      %5147 = vmatmul.f32.gmra.mxu0 %v5146
      %v5148 = vpop.f32.mrf.mxu0
      %v5149 = vadd.f32 %v5092, %v5148
      %5150 = vdwg.mxu0
      %5151 = vmatpush.msra.mxu0 0.0
      %5152 = vmatpush.msra.mxu0 0.0
      %5153 = vmatpush.msra.mxu0 0.0
      %5154 = vmatpush.msra.mxu0 0.0
      %5155 = vmatpush.msra.mxu0 0.0
      %5156 = vmatpush.msra.mxu0 0.0
      %5157 = vmatpush.msra.mxu0 0.0
      %5158 = vmatpush.msra.mxu0 0.0
      %v5159 = vand.u32 %v3277, 4294901760
      %v5160 = vsub.f32 %v3277, %v5159
      %v5161 = vand.u32 %v5160, 4294901760
      %v5162 = vsub.f32 %v5160, %v5161
      %v5163 = vand.u32 %v5162, 4294901760
      %5164 = vmatpush.msra.mxu0 %v5163
      %v5165 = vand.u32 %v3276, 4294901760
      %v5166 = vsub.f32 %v3276, %v5165
      %v5167 = vand.u32 %v5166, 4294901760
      %v5168 = vsub.f32 %v5166, %v5167
      %v5169 = vand.u32 %v5168, 4294901760
      %5170 = vmatpush.msra.mxu0 %v5169
      %v5171 = vand.u32 %v3275, 4294901760
      %v5172 = vsub.f32 %v3275, %v5171
      %v5173 = vand.u32 %v5172, 4294901760
      %v5174 = vsub.f32 %v5172, %v5173
      %v5175 = vand.u32 %v5174, 4294901760
      %5176 = vmatpush.msra.mxu0 %v5175
      %v5177 = vand.u32 %v3274, 4294901760
      %v5178 = vsub.f32 %v3274, %v5177
      %v5179 = vand.u32 %v5178, 4294901760
      %v5180 = vsub.f32 %v5178, %v5179
      %v5181 = vand.u32 %v5180, 4294901760
      %5182 = vmatpush.msra.mxu0 %v5181
      %v5183 = vand.u32 %v3273, 4294901760
      %v5184 = vsub.f32 %v3273, %v5183
      %v5185 = vand.u32 %v5184, 4294901760
      %v5186 = vsub.f32 %v5184, %v5185
      %v5187 = vand.u32 %v5186, 4294901760
      %5188 = vmatpush.msra.mxu0 %v5187
      %v5189 = vand.u32 %v3272, 4294901760
      %v5190 = vsub.f32 %v3272, %v5189
      %v5191 = vand.u32 %v5190, 4294901760
      %v5192 = vsub.f32 %v5190, %v5191
      %v5193 = vand.u32 %v5192, 4294901760
      %5194 = vmatpush.msra.mxu0 %v5193
      %v5195 = vand.u32 %v3271, 4294901760
      %v5196 = vsub.f32 %v3271, %v5195
      %v5197 = vand.u32 %v5196, 4294901760
      %v5198 = vsub.f32 %v5196, %v5197
      %v5199 = vand.u32 %v5198, 4294901760
      %5200 = vmatpush.msra.mxu0 %v5199
      %v5201 = vand.u32 %v3270, 4294901760
      %v5202 = vsub.f32 %v3270, %v5201
      %v5203 = vand.u32 %v5202, 4294901760
      %v5204 = vsub.f32 %v5202, %v5203
      %v5205 = vand.u32 %v5204, 4294901760
      %5206 = vmatpush.msra.mxu0 %v5205
      %v5207 = vand.u32 %v3350, 4294901760
      %5208 = vmatmul.f32.gmra.mxu0 %v5207
      %v5209 = vpop.f32.mrf.mxu0
      %v5210 = vadd.f32 %v5125, %v5209
      %v5211 = vand.u32 %v3352, 4294901760
      %5212 = vmatmul.f32.gmra.mxu0 %v5211
      %v5213 = vpop.f32.mrf.mxu0
      %v5214 = vadd.f32 %v5133, %v5213
      %v5215 = vand.u32 %v3354, 4294901760
      %5216 = vmatmul.f32.gmra.mxu0 %v5215
      %v5217 = vpop.f32.mrf.mxu0
      %v5218 = vadd.f32 %v5141, %v5217
      %v5219 = vand.u32 %v3356, 4294901760
      %5220 = vmatmul.f32.gmra.mxu0 %v5219
      %v5221 = vpop.f32.mrf.mxu0
      %v5222 = vadd.f32 %v5149, %v5221
      %5223 = vdwg.mxu0
      %5224 = vmatpush.msra.mxu0 0.0
      %5225 = vmatpush.msra.mxu0 0.0
      %5226 = vmatpush.msra.mxu0 0.0
      %5227 = vmatpush.msra.mxu0 0.0
      %5228 = vmatpush.msra.mxu0 0.0
      %5229 = vmatpush.msra.mxu0 0.0
      %5230 = vmatpush.msra.mxu0 0.0
      %5231 = vmatpush.msra.mxu0 0.0
      %v5232 = vand.u32 %v3277, 4294901760
      %v5233 = vsub.f32 %v3277, %v5232
      %5234 = vmatpush.msra.mxu0 %v5233
      %v5235 = vand.u32 %v3276, 4294901760
      %v5236 = vsub.f32 %v3276, %v5235
      %5237 = vmatpush.msra.mxu0 %v5236
      %v5238 = vand.u32 %v3275, 4294901760
      %v5239 = vsub.f32 %v3275, %v5238
      %5240 = vmatpush.msra.mxu0 %v5239
      %v5241 = vand.u32 %v3274, 4294901760
      %v5242 = vsub.f32 %v3274, %v5241
      %5243 = vmatpush.msra.mxu0 %v5242
      %v5244 = vand.u32 %v3273, 4294901760
      %v5245 = vsub.f32 %v3273, %v5244
      %5246 = vmatpush.msra.mxu0 %v5245
      %v5247 = vand.u32 %v3272, 4294901760
      %v5248 = vsub.f32 %v3272, %v5247
      %5249 = vmatpush.msra.mxu0 %v5248
      %v5250 = vand.u32 %v3271, 4294901760
      %v5251 = vsub.f32 %v3271, %v5250
      %5252 = vmatpush.msra.mxu0 %v5251
      %v5253 = vand.u32 %v3270, 4294901760
      %v5254 = vsub.f32 %v3270, %v5253
      %5255 = vmatpush.msra.mxu0 %v5254
      %v5256 = vand.u32 %v3350, 4294901760
      %v5257 = vsub.f32 %v3350, %v5256
      %5258 = vmatmul.f32.gmra.mxu0 %v5257
      %v5259 = vpop.f32.mrf.mxu0
      %v5260 = vadd.f32 %v5210, %v5259
      %v5261 = vand.u32 %v3352, 4294901760
      %v5262 = vsub.f32 %v3352, %v5261
      %5263 = vmatmul.f32.gmra.mxu0 %v5262
      %v5264 = vpop.f32.mrf.mxu0
      %v5265 = vadd.f32 %v5214, %v5264
      %v5266 = vand.u32 %v3354, 4294901760
      %v5267 = vsub.f32 %v3354, %v5266
      %5268 = vmatmul.f32.gmra.mxu0 %v5267
      %v5269 = vpop.f32.mrf.mxu0
      %v5270 = vadd.f32 %v5218, %v5269
      %v5271 = vand.u32 %v3356, 4294901760
      %v5272 = vsub.f32 %v3356, %v5271
      %5273 = vmatmul.f32.gmra.mxu0 %v5272
      %v5274 = vpop.f32.mrf.mxu0
      %v5275 = vadd.f32 %v5222, %v5274
      %5276 = vdwg.mxu0
      %5277 = vmatpush.msra.mxu0 0.0
      %5278 = vmatpush.msra.mxu0 0.0
      %5279 = vmatpush.msra.mxu0 0.0
      %5280 = vmatpush.msra.mxu0 0.0
      %5281 = vmatpush.msra.mxu0 0.0
      %5282 = vmatpush.msra.mxu0 0.0
      %5283 = vmatpush.msra.mxu0 0.0
      %5284 = vmatpush.msra.mxu0 0.0
      %v5285 = vand.u32 %v3277, 4294901760
      %5286 = vmatpush.msra.mxu0 %v5285
      %v5287 = vand.u32 %v3276, 4294901760
      %5288 = vmatpush.msra.mxu0 %v5287
      %v5289 = vand.u32 %v3275, 4294901760
      %5290 = vmatpush.msra.mxu0 %v5289
      %v5291 = vand.u32 %v3274, 4294901760
      %5292 = vmatpush.msra.mxu0 %v5291
      %v5293 = vand.u32 %v3273, 4294901760
      %5294 = vmatpush.msra.mxu0 %v5293
      %v5295 = vand.u32 %v3272, 4294901760
      %5296 = vmatpush.msra.mxu0 %v5295
      %v5297 = vand.u32 %v3271, 4294901760
      %5298 = vmatpush.msra.mxu0 %v5297
      %v5299 = vand.u32 %v3270, 4294901760
      %5300 = vmatpush.msra.mxu0 %v5299
      %v5301 = vand.u32 %v3350, 4294901760
      %v5302 = vsub.f32 %v3350, %v5301
      %v5303 = vand.u32 %v5302, 4294901760
      %5304 = vmatmul.f32.gmra.mxu0 %v5303
      %v5305 = vpop.f32.mrf.mxu0
      %v5306 = vadd.f32 %v5260, %v5305
      %v5307 = vand.u32 %v3352, 4294901760
      %v5308 = vsub.f32 %v3352, %v5307
      %v5309 = vand.u32 %v5308, 4294901760
      %5310 = vmatmul.f32.gmra.mxu0 %v5309
      %v5311 = vpop.f32.mrf.mxu0
      %v5312 = vadd.f32 %v5265, %v5311
      %v5313 = vand.u32 %v3354, 4294901760
      %v5314 = vsub.f32 %v3354, %v5313
      %v5315 = vand.u32 %v5314, 4294901760
      %5316 = vmatmul.f32.gmra.mxu0 %v5315
      %v5317 = vpop.f32.mrf.mxu0
      %v5318 = vadd.f32 %v5270, %v5317
      %v5319 = vand.u32 %v3356, 4294901760
      %v5320 = vsub.f32 %v3356, %v5319
      %v5321 = vand.u32 %v5320, 4294901760
      %5322 = vmatmul.f32.gmra.mxu0 %v5321
      %v5323 = vpop.f32.mrf.mxu0
      %v5324 = vadd.f32 %v5275, %v5323
      %5325 = vdwg.mxu0
      %5326 = vmatpush.msra.mxu0 0.0
      %5327 = vmatpush.msra.mxu0 0.0
      %5328 = vmatpush.msra.mxu0 0.0
      %5329 = vmatpush.msra.mxu0 0.0
      %5330 = vmatpush.msra.mxu0 0.0
      %5331 = vmatpush.msra.mxu0 0.0
      %5332 = vmatpush.msra.mxu0 0.0
      %5333 = vmatpush.msra.mxu0 0.0
      %v5334 = vand.u32 %v3277, 4294901760
      %v5335 = vsub.f32 %v3277, %v5334
      %v5336 = vand.u32 %v5335, 4294901760
      %5337 = vmatpush.msra.mxu0 %v5336
      %v5338 = vand.u32 %v3276, 4294901760
      %v5339 = vsub.f32 %v3276, %v5338
      %v5340 = vand.u32 %v5339, 4294901760
      %5341 = vmatpush.msra.mxu0 %v5340
      %v5342 = vand.u32 %v3275, 4294901760
      %v5343 = vsub.f32 %v3275, %v5342
      %v5344 = vand.u32 %v5343, 4294901760
      %5345 = vmatpush.msra.mxu0 %v5344
      %v5346 = vand.u32 %v3274, 4294901760
      %v5347 = vsub.f32 %v3274, %v5346
      %v5348 = vand.u32 %v5347, 4294901760
      %5349 = vmatpush.msra.mxu0 %v5348
      %v5350 = vand.u32 %v3273, 4294901760
      %v5351 = vsub.f32 %v3273, %v5350
      %v5352 = vand.u32 %v5351, 4294901760
      %5353 = vmatpush.msra.mxu0 %v5352
      %v5354 = vand.u32 %v3272, 4294901760
      %v5355 = vsub.f32 %v3272, %v5354
      %v5356 = vand.u32 %v5355, 4294901760
      %5357 = vmatpush.msra.mxu0 %v5356
      %v5358 = vand.u32 %v3271, 4294901760
      %v5359 = vsub.f32 %v3271, %v5358
      %v5360 = vand.u32 %v5359, 4294901760
      %5361 = vmatpush.msra.mxu0 %v5360
      %v5362 = vand.u32 %v3270, 4294901760
      %v5363 = vsub.f32 %v3270, %v5362
      %v5364 = vand.u32 %v5363, 4294901760
      %5365 = vmatpush.msra.mxu0 %v5364
      %v5366 = vand.u32 %v3350, 4294901760
      %5367 = vmatmul.f32.gmra.mxu0 %v5366
      %v5368 = vpop.f32.mrf.mxu0
      %v5369 = vadd.f32 %v5306, %v5368
      %v5370 = vand.u32 %v3352, 4294901760
      %5371 = vmatmul.f32.gmra.mxu0 %v5370
      %v5372 = vpop.f32.mrf.mxu0
      %v5373 = vadd.f32 %v5312, %v5372
      %v5374 = vand.u32 %v3354, 4294901760
      %5375 = vmatmul.f32.gmra.mxu0 %v5374
      %v5376 = vpop.f32.mrf.mxu0
      %v5377 = vadd.f32 %v5318, %v5376
      %v5378 = vand.u32 %v3356, 4294901760
      %5379 = vmatmul.f32.gmra.mxu0 %v5378
      %v5380 = vpop.f32.mrf.mxu0
      %v5381 = vadd.f32 %v5324, %v5380
      %5382 = vdwg.mxu0
      %5383 = vmatpush.msra.mxu0 0.0
      %5384 = vmatpush.msra.mxu0 0.0
      %5385 = vmatpush.msra.mxu0 0.0
      %5386 = vmatpush.msra.mxu0 0.0
      %5387 = vmatpush.msra.mxu0 0.0
      %5388 = vmatpush.msra.mxu0 0.0
      %5389 = vmatpush.msra.mxu0 0.0
      %5390 = vmatpush.msra.mxu0 0.0
      %v5391 = vand.u32 %v3277, 4294901760
      %5392 = vmatpush.msra.mxu0 %v5391
      %v5393 = vand.u32 %v3276, 4294901760
      %5394 = vmatpush.msra.mxu0 %v5393
      %v5395 = vand.u32 %v3275, 4294901760
      %5396 = vmatpush.msra.mxu0 %v5395
      %v5397 = vand.u32 %v3274, 4294901760
      %5398 = vmatpush.msra.mxu0 %v5397
      %v5399 = vand.u32 %v3273, 4294901760
      %5400 = vmatpush.msra.mxu0 %v5399
      %v5401 = vand.u32 %v3272, 4294901760
      %5402 = vmatpush.msra.mxu0 %v5401
      %v5403 = vand.u32 %v3271, 4294901760
      %5404 = vmatpush.msra.mxu0 %v5403
      %v5405 = vand.u32 %v3270, 4294901760
      %5406 = vmatpush.msra.mxu0 %v5405
      %v5407 = vand.u32 %v3350, 4294901760
      %5408 = vmatmul.f32.gmra.mxu0 %v5407
      %v5409 = vpop.f32.mrf.mxu0
      %v5410 = vadd.f32 %v5369, %v5409
      %v5411 = vand.u32 %v3352, 4294901760
      %5412 = vmatmul.f32.gmra.mxu0 %v5411
      %v5413 = vpop.f32.mrf.mxu0
      %v5414 = vadd.f32 %v5373, %v5413
      %v5415 = vand.u32 %v3354, 4294901760
      %5416 = vmatmul.f32.gmra.mxu0 %v5415
      %v5417 = vpop.f32.mrf.mxu0
      %v5418 = vadd.f32 %v5377, %v5417
      %v5419 = vand.u32 %v3356, 4294901760
      %5420 = vmatmul.f32.gmra.mxu0 %v5419
      %v5421 = vpop.f32.mrf.mxu0
      %v5422 = vadd.f32 %v5381, %v5421
      %5423 = vdwg.mxu0
      %5424 = vxpose.xlu0.b32.start [1/16] %v5410, 128
      %5425 = vxpose.xlu0.b32.cont [2/16] %v5414, 128
      %5426 = vxpose.xlu0.b32.cont [3/16] %v5418, 128
      %5427 = vxpose.xlu0.b32.cont [4/16] %v5422, 128
      %5428 = vxpose.xlu0.b32.cont [5/16] 0.0, 128
      %5429 = vxpose.xlu0.b32.cont [6/16] 0.0, 128
      %5430 = vxpose.xlu0.b32.cont [7/16] 0.0, 128
      %5431 = vxpose.xlu0.b32.cont [8/16] 0.0, 128
      %5432 = vxpose.xlu0.b32.cont [9/16] 0.0, 128
      %5433 = vxpose.xlu0.b32.cont [10/16] 0.0, 128
      %5434 = vxpose.xlu0.b32.cont [11/16] 0.0, 128
      %5435 = vxpose.xlu0.b32.cont [12/16] 0.0, 128
      %5436 = vxpose.xlu0.b32.cont [13/16] 0.0, 128
      %5437 = vxpose.xlu0.b32.cont [14/16] 0.0, 128
      %5438 = vxpose.xlu0.b32.cont [15/16] 0.0, 128
      %5439 = vxpose.xlu0.b32.end [16/16] 0.0, 128
      %v5440 = vpop.trf.xlu0
      %v5441 = vpop.trf.xlu0
      %v5442 = vpop.trf.xlu0
      %v5443 = vpop.trf.xlu0
      %v5444 = vpop.trf.xlu0
      %v5445 = vpop.trf.xlu0
      %v5446 = vpop.trf.xlu0
      %v5447 = vpop.trf.xlu0
      %v5448 = vpop.trf.xlu0
      %v5449 = vpop.trf.xlu0
      %v5450 = vpop.trf.xlu0
      %v5451 = vpop.trf.xlu0
      %v5452 = vpop.trf.xlu0
      %v5453 = vpop.trf.xlu0
      %v5454 = vpop.trf.xlu0
      %v5455 = vpop.trf.xlu0
      %vm5456 = vcmask 203776
      %5457 = vst.msk [vmem:[%s278] sm:$0xff] %vm5456, %v5440
      %vm5458 = vcmask 199680
      %5459 = vst.msk [vmem:[%s278 + $0x8] sm:$0xf] %vm5458, %v5441
      %p5460 = scmp.lt.s32.totalorder %s18, 1
      %s5461 = scalar_select %p5460, %s18, 1
      %s5462 = smul.addr %s5461, 2
      %s5463 = smul.addr %s5462, 8
      %s5464 = scalar_lea.vmem %s7, %s5463
      // Predicated region
      $region49: #{spre_forward.1} parent=47 // pred_check
        %p5465 = pneg %p188
      $region50: #{spre_forward.1} parent=47 // pred_check_branch
        %5467 = sbr.rel (%p5465) target = $region52
      $region51: #{spre_forward.1} parent=47 // pred_region
        _
      $region52: #{spre_forward.1} parent=47 // pred_fallthru
        _
    $region48: #{spre_forward.1} parent=5 // pred_fallthru
      _
    %p5468 = scmp.le.s32.totalorder 2, %s13
    // Predicated region
    $region53: #{spre_forward.1} parent=5 // pred_check
      %p5469 = pneg %p5468
    $region54: #{spre_forward.1} parent=5 // pred_check_branch
      %5471 = sbr.rel (%p5469) target = $region56
    $region55: #{spre_forward.1} parent=5 // pred_region
      %s5472 = ssub.s32 %s13, 2
      // Predicated region
      $region57: #{spre_forward.1} parent=55 // pred_check
        %p5473 = pneg %p194
      $region58: #{spre_forward.1} parent=55 // pred_check_branch
        %5475 = sbr.rel (%p5473) target = $region60
      $region59: #{spre_forward.1} parent=55 // pred_region
        %p5476 = scmp.lt.s32.totalorder %s19, 1
        %s5477 = scalar_select %p5476, %s19, 1
        %s5478 = smul.addr %s5477, 2
        %s5479 = smul.addr %s5478, 8
        %s5480 = scalar_lea.vmem %s7, %s5479
      $region60: #{spre_forward.1} parent=55 // pred_fallthru
        _
    $region56: #{spre_forward.1} parent=5 // pred_fallthru
      _
  $region6: #{spre_forward.1} parent=0 // loop_footer
    %s17 = sadd.s32 1, %s13
  $region7: #{spre_forward.1} parent=0 // loop_footer_branch
    %12 = sbr.rel target = $region3
  $region8: #{spre_forward.1} parent=0 // loop_exit
    _

</llo_original>
